<compile_context>
chip_gen: v7x
topology: tpu7x:2x2x1
jax: 0.10.0
libtpu: 0.0.40
codegen_flags: <defaults>
</compile_context>

<pallas_src>
import jax
import jax.numpy as jnp
from jax.experimental import pallas as pl
from jax.experimental.pallas import tpu as pltpu

D_MODEL = 32
N_HEADS = 4
D_HEAD = D_MODEL // N_HEADS
D_FF = 64
EPS = 1e-6
NEG_INF = -1e9

# Row indices inside the packed [16, D_MODEL] vector slab.
_LN0_G, _LN0_B, _LN1_G, _LN1_B, _LN2_G, _LN2_B = 0, 1, 2, 3, 4, 5
_B_SELF = 6     # bq1, bk1, bv1, bo1  -> rows 6..9
_B_CROSS = 10   # bq2, bk2, bv2, bo2  -> rows 10..13
_B_FF2 = 14     # b2                  -> row 14 (row 15 is padding)

# Slice indices inside the packed [8, D, D] attention-weight stack.
_W_SELF = 0     # wq1, wk1, wv1, wo1  -> slices 0..3
_W_CROSS = 4    # wq2, wk2, wv2, wo2  -> slices 4..7


# --------------------------- fused decoder kernel ---------------------------
def _decoder_layer_kernel(
    x_ref, mem_ref, tgt_bias_ref, src_bias_ref,
    attn_w_ref, ffn_w_ref, vec_ref, b1_ref,
    o_ref,
):
    x = x_ref[...]               # [BB, T, D]
    mem = mem_ref[...]           # [BB, S, D]
    tgt_bias = tgt_bias_ref[...] # [BB, T, T]  additive bias (0 / -1e9)
    src_bias = src_bias_ref[...] # [BB, T, S]

    BB, T, _ = x.shape

    def vrow(i):
        # (1, D) static sublane slice of the packed vector slab (free ref view)
        return vec_ref[i:i + 1, :]

    def layer_norm(v, gi, bi):
        mean = jnp.mean(v, axis=-1, keepdims=True)
        var = jnp.mean((v - mean) ** 2, axis=-1, keepdims=True)
        return (v - mean) * jax.lax.rsqrt(var + EPS) * vrow(gi) + vrow(bi)

    def mha(q_in, kv_in, bias, wbase, bbase):
        bb, tq, _ = q_in.shape
        s_len = kv_in.shape[1]
        wq = attn_w_ref[wbase + 0]          # [D, D] static first-axis index
        wk = attn_w_ref[wbase + 1]
        wv = attn_w_ref[wbase + 2]
        wo = attn_w_ref[wbase + 3]
        scale = jnp.float32(1.0 / (D_HEAD ** 0.5))

        # Full-width projections over all rows of the batch block (3 matmuls).
        q2 = q_in.reshape(bb * tq, D_MODEL)
        kv2 = kv_in.reshape(bb * s_len, D_MODEL)
        q = (jnp.dot(q2, wq, preferred_element_type=jnp.float32)
             + vrow(bbase + 0)) * scale      # fold 1/sqrt(dh) into Q (small tensor)
        k = jnp.dot(kv2, wk, preferred_element_type=jnp.float32) + vrow(bbase + 1)
        v = jnp.dot(kv2, wv, preferred_element_type=jnp.float32) + vrow(bbase + 2)
        q = q.reshape(bb, tq, D_MODEL)
        k = k.reshape(bb, s_len, D_MODEL)
        v = v.reshape(bb, s_len, D_MODEL)

        # Per-head attention on static 8-lane slices of the computed Q/K/V.
        ctx_heads = []
        for h in range(N_HEADS):             # static unrolled heads
            sl = slice(h * D_HEAD, (h + 1) * D_HEAD)
            s = jnp.einsum("bqd,bkd->bqk", q[..., sl], k[..., sl],
                           preferred_element_type=jnp.float32) + bias
            m = jnp.max(s, axis=-1, keepdims=True)
            p = jnp.exp(s - m)
            inv = pl.reciprocal(jnp.sum(p, axis=-1, keepdims=True), approx=True)
            p = p * inv
            ctx_heads.append(jnp.einsum("bqk,bkd->bqd", p, v[..., sl],
                                        preferred_element_type=jnp.float32))
        ctx = jnp.concatenate(ctx_heads, axis=-1).reshape(bb * tq, D_MODEL)

        # Single full-width output projection.
        out = jnp.dot(ctx, wo, preferred_element_type=jnp.float32) + vrow(bbase + 3)
        return out.reshape(bb, tq, D_MODEL)

    # sublayer 0: masked multi-head self-attention (pre-norm residual)
    xn = layer_norm(x, _LN0_G, _LN0_B)
    x = x + mha(xn, xn, tgt_bias, _W_SELF, _B_SELF)

    # sublayer 1: multi-head cross-attention (memory NOT normed)
    xn = layer_norm(x, _LN1_G, _LN1_B)
    x = x + mha(xn, mem, src_bias, _W_CROSS, _B_CROSS)

    # sublayer 2: feed-forward
    xn = layer_norm(x, _LN2_G, _LN2_B)
    xn2 = xn.reshape(BB * T, D_MODEL)
    h = jnp.maximum(
        jnp.dot(xn2, ffn_w_ref[0], preferred_element_type=jnp.float32) + b1_ref[...],
        0.0)
    # ffn_w_ref[1] holds w2.T, so contract its last dim against h's last dim.
    y = jax.lax.dot_general(h, ffn_w_ref[1], (((1,), (1,)), ((), ())),
                            preferred_element_type=jnp.float32) + vrow(_B_FF2)
    o_ref[...] = x + y.reshape(BB, T, D_MODEL)


# --------------------------------- wrapper ---------------------------------
def _pick_batch_block(B):
    """Dual-TC chips (v7x): keep batch as a parallel grid axis (block=1).
    Single-TC chips (v5e/v6e): collapse the grid (block=B)."""
    kind = ""
    try:
        kind = jax.devices()[0].device_kind.lower()
    except Exception:
        pass
    if ("v7" in kind) or ("7x" in kind):
        return 1
    return B


def decoder_layer(x, memory, src_mask, tgt_mask, params, *, batch_block=None):
    B, T, D = x.shape
    S = memory.shape[1]
    BB = _pick_batch_block(B) if batch_block is None else batch_block
    assert B % BB == 0

    # Precompute additive bias masks once in the wrapper (hoisted out of kernel).
    tgt_bias = jnp.where(tgt_mask != 0, 0.0, NEG_INF).astype(jnp.float32)
    src_bias = jnp.where(src_mask != 0, 0.0, NEG_INF).astype(jnp.float32)

    # ---- pack weights into a few stacked operands ----
    wq1, bq1, wk1, bk1, wv1, bv1, wo1, bo1 = params["mha1"]
    wq2, bq2, wk2, bk2, wv2, bv2, wo2, bo2 = params["mha2"]
    w1, b1, w2, b2 = params["ff"]

    attn_w = jnp.stack([wq1, wk1, wv1, wo1, wq2, wk2, wv2, wo2], axis=0)  # [8,D,D]
    ffn_w = jnp.stack([w1, w2.T], axis=0)                                 # [2,D,D_FF]
    vecs = jnp.stack([
        params["ln0_g"], params["ln0_b"],
        params["ln1_g"], params["ln1_b"],
        params["ln2_g"], params["ln2_b"],
        bq1.reshape(-1), bk1.reshape(-1), bv1.reshape(-1), bo1.reshape(-1),
        bq2.reshape(-1), bk2.reshape(-1), bv2.reshape(-1), bo2.reshape(-1),
        b2.reshape(-1), jnp.zeros((D,), jnp.float32),
    ], axis=0).astype(jnp.float32)                                        # [16,D]
    b1_row = b1.reshape(1, D_FF).astype(jnp.float32)

    bmap = lambda b: (b, 0, 0)      # batch-blocked operands
    cmap3 = lambda b: (0, 0, 0)     # grid-invariant VMEM-resident weights
    cmap2 = lambda b: (0, 0)

    in_specs = [
        pl.BlockSpec((BB, T, D), bmap),          # x
        pl.BlockSpec((BB, S, D), bmap),          # memory
        pl.BlockSpec((BB, T, T), bmap),          # tgt additive bias
        pl.BlockSpec((BB, T, S), bmap),          # src additive bias
        pl.BlockSpec(attn_w.shape, cmap3),       # packed attention weights
        pl.BlockSpec(ffn_w.shape, cmap3),        # packed FFN weights
        pl.BlockSpec(vecs.shape, cmap2),         # packed LN params + biases
        pl.BlockSpec(b1_row.shape, cmap2),       # FFN hidden bias
    ]

    return pl.pallas_call(
        _decoder_layer_kernel,
        out_shape=jax.ShapeDtypeStruct((B, T, D), jnp.float32),
        grid=(B // BB,),
        in_specs=in_specs,
        out_specs=pl.BlockSpec((BB, T, D), bmap),
        compiler_params=pltpu.CompilerParams(dimension_semantics=("parallel",)),
    )(x, memory, tgt_bias, src_bias, attn_w, ffn_w, vecs, b1_row)


# ----------------------------- pure-JAX reference -----------------------------
def _ref_layernorm(x, g, b):
    mean = jnp.mean(x, axis=-1, keepdims=True)
    var = jnp.mean((x - mean) ** 2, axis=-1, keepdims=True)
    return (x - mean) * jax.lax.rsqrt(var + EPS) * g + b


def _ref_mha(q_in, kv_in, mask, params):
    wq, bq, wk, bk, wv, bv, wo, bo = params
    B, T, D = q_in.shape
    S = kv_in.shape[1]
    q = (q_in @ wq + bq).reshape(B, T, N_HEADS, D_HEAD)
    k = (kv_in @ wk + bk).reshape(B, S, N_HEADS, D_HEAD)
    v = (kv_in @ wv + bv).reshape(B, S, N_HEADS, D_HEAD)
    s = jnp.einsum("bthd,bshd->bhts", q, k) / jnp.sqrt(jnp.float32(D_HEAD))
    s = jnp.where(mask[:, None, :, :] != 0, s, NEG_INF)
    p = jax.nn.softmax(s, axis=-1)
    ctx = jnp.einsum("bhts,bshd->bthd", p, v).reshape(B, T, D)
    return ctx @ wo + bo


def _ref_decoder_layer(x, memory, src_mask, tgt_mask, p):
    xn = _ref_layernorm(x, p["ln0_g"], p["ln0_b"])
    x = x + _ref_mha(xn, xn, tgt_mask, p["mha1"])
    xn = _ref_layernorm(x, p["ln1_g"], p["ln1_b"])
    x = x + _ref_mha(xn, memory, src_mask, p["mha2"])
    xn = _ref_layernorm(x, p["ln2_g"], p["ln2_b"])
    w1, b1, w2, b2 = p["ff"]
    return x + (jnp.maximum(xn @ w1 + b1, 0.0) @ w2 + b2)


# ----------------------------------- main -----------------------------------
def _init_params(key):
    ks = jax.random.split(key, 16)

    def lin(k, din, dout):
        return (jax.random.normal(k, (din, dout), jnp.float32) * 0.05,
                jnp.zeros((1, dout), jnp.float32))

    wq1, bq1 = lin(ks[0], D_MODEL, D_MODEL)
    wk1, bk1 = lin(ks[1], D_MODEL, D_MODEL)
    wv1, bv1 = lin(ks[2], D_MODEL, D_MODEL)
    wo1, bo1 = lin(ks[3], D_MODEL, D_MODEL)
    wq2, bq2 = lin(ks[4], D_MODEL, D_MODEL)
    wk2, bk2 = lin(ks[5], D_MODEL, D_MODEL)
    wv2, bv2 = lin(ks[6], D_MODEL, D_MODEL)
    wo2, bo2 = lin(ks[7], D_MODEL, D_MODEL)
    w1, b1 = lin(ks[8], D_MODEL, D_FF)
    w2, b2 = lin(ks[9], D_FF, D_MODEL)

    def ln_params(kg, kb):
        return (1.0 + 0.1 * jax.random.normal(kg, (D_MODEL,), jnp.float32),
                0.1 * jax.random.normal(kb, (D_MODEL,), jnp.float32))

    g0, b0 = ln_params(ks[10], ks[11])
    g1, b1_ = ln_params(ks[12], ks[13])
    g2, b2_ = ln_params(ks[14], ks[15])
    return {
        "mha1": (wq1, bq1, wk1, bk1, wv1, bv1, wo1, bo1),
        "mha2": (wq2, bq2, wk2, bk2, wv2, bv2, wo2, bo2),
        "ff": (w1, b1, w2, b2),
        "ln0_g": g0, "ln0_b": b0,
        "ln1_g": g1, "ln1_b": b1_,
        "ln2_g": g2, "ln2_b": b2_,
    }


if __name__ == "__main__":
    B, T, S = 2, 8, 10
    key = jax.random.PRNGKey(0)
    kx, km, kp = jax.random.split(key, 3)

    x = jax.random.normal(kx, (B, T, D_MODEL), jnp.float32)
    memory = jax.random.normal(km, (B, S, D_MODEL), jnp.float32)
    # causal target mask [B, T, T]; src mask [B, T, S] with last src pos masked in batch 1
    tgt_mask = jnp.tril(jnp.ones((T, T), jnp.float32))[None].repeat(B, axis=0)
    src_mask = jnp.ones((B, T, S), jnp.float32).at[1, :, -1].set(0.0)

    params = _init_params(kp)

    out = decoder_layer(x, memory, src_mask, tgt_mask, params)
    out = jax.block_until_ready(out)

    ref = _ref_decoder_layer(x, memory, src_mask, tgt_mask, params)
    assert out.shape == (B, T, D_MODEL)
    assert jnp.allclose(out, ref, atol=1e-3, rtol=1e-3), "mismatch vs JAX reference"

    # TODO(synk): dropout is identity here (eval mode); training-time dropout not implemented.
    print("KERNEL_OK")
</pallas_src>

<mosaic_0001>
module attributes {stable_mosaic.version = 11 : i64} {
  func.func @_decoder_layer_kernel(%arg0: i32, %arg1: memref<2x8x32xf32, #tpu.memory_space<vmem>>, %arg2: memref<2x10x32xf32, #tpu.memory_space<vmem>>, %arg3: memref<2x8x8xf32, #tpu.memory_space<vmem>>, %arg4: memref<2x8x10xf32, #tpu.memory_space<vmem>>, %arg5: memref<8x32x32xf32, #tpu.memory_space<vmem>>, %arg6: memref<2x32x64xf32, #tpu.memory_space<vmem>>, %arg7: memref<16x32xf32, #tpu.memory_space<vmem>>, %arg8: memref<1x64xf32, #tpu.memory_space<vmem>>, %arg9: memref<2x8x32xf32, #tpu.memory_space<vmem>>) attributes {dimension_semantics = [#tpu.dimension_semantics<parallel>], iteration_bounds = array<i64: 1>, scalar_prefetch = 0 : i64, scratch_operands = 0 : i64, tpu.core_type = #tpu.core_type<tc>, window_params = [{transform_indices = @transform_0, window_bounds = array<i64: 2, 8, 32>}, {transform_indices = @transform_1, window_bounds = array<i64: 2, 10, 32>}, {transform_indices = @transform_2, window_bounds = array<i64: 2, 8, 8>}, {transform_indices = @transform_3, window_bounds = array<i64: 2, 8, 10>}, {pipeline_mode = #tpu.pipeline_mode<synchronous>, transform_indices = @transform_4, window_bounds = array<i64: 8, 32, 32>}, {pipeline_mode = #tpu.pipeline_mode<synchronous>, transform_indices = @transform_5, window_bounds = array<i64: 2, 32, 64>}, {pipeline_mode = #tpu.pipeline_mode<synchronous>, transform_indices = @transform_6, window_bounds = array<i64: 16, 32>}, {pipeline_mode = #tpu.pipeline_mode<synchronous>, transform_indices = @transform_7, window_bounds = array<i64: 1, 64>}, {transform_indices = @transform_8, window_bounds = array<i64: 2, 8, 32>}]} {
    %c0 = arith.constant 0 : index
    %c0_0 = arith.constant 0 : index
    %c0_1 = arith.constant 0 : index
    %0 = vector.load %arg1[%c0, %c0_0, %c0_1] : memref<2x8x32xf32, #tpu.memory_space<vmem>>, vector<2x8x32xf32>
    %c0_2 = arith.constant 0 : index
    %c0_3 = arith.constant 0 : index
    %c0_4 = arith.constant 0 : index
    %1 = vector.load %arg2[%c0_2, %c0_3, %c0_4] : memref<2x10x32xf32, #tpu.memory_space<vmem>>, vector<2x10x32xf32>
    %c0_5 = arith.constant 0 : index
    %c0_6 = arith.constant 0 : index
    %c0_7 = arith.constant 0 : index
    %2 = vector.load %arg3[%c0_5, %c0_6, %c0_7] : memref<2x8x8xf32, #tpu.memory_space<vmem>>, vector<2x8x8xf32>
    %c0_8 = arith.constant 0 : index
    %c0_9 = arith.constant 0 : index
    %c0_10 = arith.constant 0 : index
    %3 = vector.load %arg4[%c0_8, %c0_9, %c0_10] : memref<2x8x10xf32, #tpu.memory_space<vmem>>, vector<2x8x10xf32>
    %cst = arith.constant dense<0.000000e+00> : vector<2x8xf32>
    %4 = vector.multi_reduction <add>, %0, %cst [2] : vector<2x8x32xf32> to vector<2x8xf32>
    %5 = vector.shape_cast %4 : vector<2x8xf32> to vector<2x8x1xf32>
    %cst_11 = arith.constant 3.200000e+01 : f32
    %6 = vector.broadcast %cst_11 : f32 to vector<2x8x1xf32>
    %7 = arith.divf %5, %6 : vector<2x8x1xf32>
    %8 = vector.broadcast %7 : vector<2x8x1xf32> to vector<2x8x32xf32>
    %9 = arith.subf %0, %8 : vector<2x8x32xf32>
    %10 = arith.mulf %9, %9 : vector<2x8x32xf32>
    %cst_12 = arith.constant dense<0.000000e+00> : vector<2x8xf32>
    %11 = vector.multi_reduction <add>, %10, %cst_12 [2] : vector<2x8x32xf32> to vector<2x8xf32>
    %12 = vector.shape_cast %11 : vector<2x8xf32> to vector<2x8x1xf32>
    %cst_13 = arith.constant 3.200000e+01 : f32
    %13 = vector.broadcast %cst_13 : f32 to vector<2x8x1xf32>
    %14 = arith.divf %12, %13 : vector<2x8x1xf32>
    %15 = vector.broadcast %7 : vector<2x8x1xf32> to vector<2x8x32xf32>
    %16 = arith.subf %0, %15 : vector<2x8x32xf32>
    %cst_14 = arith.constant 9.99999997E-7 : f32
    %17 = vector.broadcast %cst_14 : f32 to vector<2x8x1xf32>
    %18 = arith.addf %14, %17 : vector<2x8x1xf32>
    %19 = math.rsqrt %18 : vector<2x8x1xf32>
    %20 = vector.broadcast %19 : vector<2x8x1xf32> to vector<2x8x32xf32>
    %21 = arith.mulf %16, %20 : vector<2x8x32xf32>
    %c0_15 = arith.constant 0 : index
    %c0_16 = arith.constant 0 : index
    %22 = vector.load %arg7[%c0_15, %c0_16] : memref<16x32xf32, #tpu.memory_space<vmem>>, vector<1x32xf32>
    %23 = vector.shape_cast %22 : vector<1x32xf32> to vector<1x1x32xf32>
    %24 = vector.broadcast %23 : vector<1x1x32xf32> to vector<2x8x32xf32>
    %25 = arith.mulf %21, %24 : vector<2x8x32xf32>
    %c1 = arith.constant 1 : index
    %c0_17 = arith.constant 0 : index
    %26 = vector.load %arg7[%c1, %c0_17] : memref<16x32xf32, #tpu.memory_space<vmem>>, vector<1x32xf32>
    %27 = vector.shape_cast %26 : vector<1x32xf32> to vector<1x1x32xf32>
    %28 = vector.broadcast %27 : vector<1x1x32xf32> to vector<2x8x32xf32>
    %29 = arith.addf %25, %28 : vector<2x8x32xf32>
    %c0_18 = arith.constant 0 : index
    %c0_19 = arith.constant 0 : index
    %c0_20 = arith.constant 0 : index
    %30 = vector.load %arg5[%c0_18, %c0_19, %c0_20] : memref<8x32x32xf32, #tpu.memory_space<vmem>>, vector<1x32x32xf32>
    %31 = vector.shape_cast %30 : vector<1x32x32xf32> to vector<32x32xf32>
    %c1_21 = arith.constant 1 : index
    %c0_22 = arith.constant 0 : index
    %c0_23 = arith.constant 0 : index
    %32 = vector.load %arg5[%c1_21, %c0_22, %c0_23] : memref<8x32x32xf32, #tpu.memory_space<vmem>>, vector<1x32x32xf32>
    %33 = vector.shape_cast %32 : vector<1x32x32xf32> to vector<32x32xf32>
    %c2 = arith.constant 2 : index
    %c0_24 = arith.constant 0 : index
    %c0_25 = arith.constant 0 : index
    %34 = vector.load %arg5[%c2, %c0_24, %c0_25] : memref<8x32x32xf32, #tpu.memory_space<vmem>>, vector<1x32x32xf32>
    %35 = vector.shape_cast %34 : vector<1x32x32xf32> to vector<32x32xf32>
    %c3 = arith.constant 3 : index
    %c0_26 = arith.constant 0 : index
    %c0_27 = arith.constant 0 : index
    %36 = vector.load %arg5[%c3, %c0_26, %c0_27] : memref<8x32x32xf32, #tpu.memory_space<vmem>>, vector<1x32x32xf32>
    %37 = vector.shape_cast %36 : vector<1x32x32xf32> to vector<32x32xf32>
    %38 = vector.shape_cast %29 : vector<2x8x32xf32> to vector<16x32xf32>
    %39 = vector.shape_cast %29 : vector<2x8x32xf32> to vector<16x32xf32>
    %cst_28 = arith.constant dense<0.000000e+00> : vector<16x32xf32>
    %40 = tpu.matmul %38, %31, %cst_28 {dimension_numbers = #tpu.dot_dimension_numbers<[1], [0], [0], [1], [0, 0, 1, 1], [], []>} : vector<16x32xf32>, vector<32x32xf32>, vector<16x32xf32> -> vector<16x32xf32>
    %c6 = arith.constant 6 : index
    %c0_29 = arith.constant 0 : index
    %41 = vector.load %arg7[%c6, %c0_29] : memref<16x32xf32, #tpu.memory_space<vmem>>, vector<1x32xf32>
    %42 = vector.broadcast %41 : vector<1x32xf32> to vector<16x32xf32>
    %43 = arith.addf %40, %42 : vector<16x32xf32>
    %cst_30 = arith.constant 0.353553385 : f32
    %44 = vector.broadcast %cst_30 : f32 to vector<16x32xf32>
    %45 = arith.mulf %43, %44 : vector<16x32xf32>
    %cst_31 = arith.constant dense<0.000000e+00> : vector<16x32xf32>
    %46 = tpu.matmul %39, %33, %cst_31 {dimension_numbers = #tpu.dot_dimension_numbers<[1], [0], [0], [1], [0, 0, 1, 1], [], []>} : vector<16x32xf32>, vector<32x32xf32>, vector<16x32xf32> -> vector<16x32xf32>
    %c7 = arith.constant 7 : index
    %c0_32 = arith.constant 0 : index
    %47 = vector.load %arg7[%c7, %c0_32] : memref<16x32xf32, #tpu.memory_space<vmem>>, vector<1x32xf32>
    %48 = vector.broadcast %47 : vector<1x32xf32> to vector<16x32xf32>
    %49 = arith.addf %46, %48 : vector<16x32xf32>
    %cst_33 = arith.constant dense<0.000000e+00> : vector<16x32xf32>
    %50 = tpu.matmul %39, %35, %cst_33 {dimension_numbers = #tpu.dot_dimension_numbers<[1], [0], [0], [1], [0, 0, 1, 1], [], []>} : vector<16x32xf32>, vector<32x32xf32>, vector<16x32xf32> -> vector<16x32xf32>
    %c8 = arith.constant 8 : index
    %c0_34 = arith.constant 0 : index
    %51 = vector.load %arg7[%c8, %c0_34] : memref<16x32xf32, #tpu.memory_space<vmem>>, vector<1x32xf32>
    %52 = vector.broadcast %51 : vector<1x32xf32> to vector<16x32xf32>
    %53 = arith.addf %50, %52 : vector<16x32xf32>
    %54 = vector.shape_cast %45 : vector<16x32xf32> to vector<2x8x32xf32>
    %55 = vector.shape_cast %49 : vector<16x32xf32> to vector<2x8x32xf32>
    %56 = vector.shape_cast %53 : vector<16x32xf32> to vector<2x8x32xf32>
    %57 = vector.extract_strided_slice %54 {offsets = [0, 0, 0], sizes = [2, 8, 8], strides = [1, 1, 1]} : vector<2x8x32xf32> to vector<2x8x8xf32>
    %58 = vector.extract_strided_slice %55 {offsets = [0, 0, 0], sizes = [2, 8, 8], strides = [1, 1, 1]} : vector<2x8x32xf32> to vector<2x8x8xf32>
    "tpu.trace_start"() <{level = 10 : i32, message = "bqd,bkd->bqk"}> : () -> ()
    %cst_35 = arith.constant dense<0.000000e+00> : vector<2x8x8xf32>
    %59 = tpu.matmul %57, %58, %cst_35 {dimension_numbers = #tpu.dot_dimension_numbers<[2], [2], [1], [1], [0, 0, 0, 1, 1, 1], [0], [0]>} : vector<2x8x8xf32>, vector<2x8x8xf32>, vector<2x8x8xf32> -> vector<2x8x8xf32>
    "tpu.trace_stop"() : () -> ()
    %60 = arith.addf %59, %2 : vector<2x8x8xf32>
    %cst_36 = arith.constant dense<0xFF800000> : vector<2x8xf32>
    %61 = vector.multi_reduction <maximumf>, %60, %cst_36 [2] : vector<2x8x8xf32> to vector<2x8xf32>
    %62 = vector.shape_cast %61 : vector<2x8xf32> to vector<2x8x1xf32>
    %63 = vector.broadcast %62 : vector<2x8x1xf32> to vector<2x8x8xf32>
    %64 = arith.subf %60, %63 : vector<2x8x8xf32>
    %65 = math.exp %64 : vector<2x8x8xf32>
    %cst_37 = arith.constant dense<0.000000e+00> : vector<2x8xf32>
    %66 = vector.multi_reduction <add>, %65, %cst_37 [2] : vector<2x8x8xf32> to vector<2x8xf32>
    %67 = vector.shape_cast %66 : vector<2x8xf32> to vector<2x8x1xf32>
    %68 = tpu.reciprocal %67 {approx = true} : vector<2x8x1xf32> -> vector<2x8x1xf32>
    %69 = vector.broadcast %68 : vector<2x8x1xf32> to vector<2x8x8xf32>
    %70 = arith.mulf %65, %69 : vector<2x8x8xf32>
    %71 = vector.extract_strided_slice %56 {offsets = [0, 0, 0], sizes = [2, 8, 8], strides = [1, 1, 1]} : vector<2x8x32xf32> to vector<2x8x8xf32>
    "tpu.trace_start"() <{level = 10 : i32, message = "bqk,bkd->bqd"}> : () -> ()
    %cst_38 = arith.constant dense<0.000000e+00> : vector<2x8x8xf32>
    %72 = tpu.matmul %70, %71, %cst_38 {dimension_numbers = #tpu.dot_dimension_numbers<[2], [1], [1], [2], [0, 0, 0, 1, 1, 2], [0], [0]>} : vector<2x8x8xf32>, vector<2x8x8xf32>, vector<2x8x8xf32> -> vector<2x8x8xf32>
    "tpu.trace_stop"() : () -> ()
    %73 = vector.extract_strided_slice %54 {offsets = [0, 0, 8], sizes = [2, 8, 8], strides = [1, 1, 1]} : vector<2x8x32xf32> to vector<2x8x8xf32>
    %74 = vector.extract_strided_slice %55 {offsets = [0, 0, 8], sizes = [2, 8, 8], strides = [1, 1, 1]} : vector<2x8x32xf32> to vector<2x8x8xf32>
    "tpu.trace_start"() <{level = 10 : i32, message = "bqd,bkd->bqk"}> : () -> ()
    %cst_39 = arith.constant dense<0.000000e+00> : vector<2x8x8xf32>
    %75 = tpu.matmul %73, %74, %cst_39 {dimension_numbers = #tpu.dot_dimension_numbers<[2], [2], [1], [1], [0, 0, 0, 1, 1, 1], [0], [0]>} : vector<2x8x8xf32>, vector<2x8x8xf32>, vector<2x8x8xf32> -> vector<2x8x8xf32>
    "tpu.trace_stop"() : () -> ()
    %76 = arith.addf %75, %2 : vector<2x8x8xf32>
    %cst_40 = arith.constant dense<0xFF800000> : vector<2x8xf32>
    %77 = vector.multi_reduction <maximumf>, %76, %cst_40 [2] : vector<2x8x8xf32> to vector<2x8xf32>
    %78 = vector.shape_cast %77 : vector<2x8xf32> to vector<2x8x1xf32>
    %79 = vector.broadcast %78 : vector<2x8x1xf32> to vector<2x8x8xf32>
    %80 = arith.subf %76, %79 : vector<2x8x8xf32>
    %81 = math.exp %80 : vector<2x8x8xf32>
    %cst_41 = arith.constant dense<0.000000e+00> : vector<2x8xf32>
    %82 = vector.multi_reduction <add>, %81, %cst_41 [2] : vector<2x8x8xf32> to vector<2x8xf32>
    %83 = vector.shape_cast %82 : vector<2x8xf32> to vector<2x8x1xf32>
    %84 = tpu.reciprocal %83 {approx = true} : vector<2x8x1xf32> -> vector<2x8x1xf32>
    %85 = vector.broadcast %84 : vector<2x8x1xf32> to vector<2x8x8xf32>
    %86 = arith.mulf %81, %85 : vector<2x8x8xf32>
    %87 = vector.extract_strided_slice %56 {offsets = [0, 0, 8], sizes = [2, 8, 8], strides = [1, 1, 1]} : vector<2x8x32xf32> to vector<2x8x8xf32>
    "tpu.trace_start"() <{level = 10 : i32, message = "bqk,bkd->bqd"}> : () -> ()
    %cst_42 = arith.constant dense<0.000000e+00> : vector<2x8x8xf32>
    %88 = tpu.matmul %86, %87, %cst_42 {dimension_numbers = #tpu.dot_dimension_numbers<[2], [1], [1], [2], [0, 0, 0, 1, 1, 2], [0], [0]>} : vector<2x8x8xf32>, vector<2x8x8xf32>, vector<2x8x8xf32> -> vector<2x8x8xf32>
    "tpu.trace_stop"() : () -> ()
    %89 = vector.extract_strided_slice %54 {offsets = [0, 0, 16], sizes = [2, 8, 8], strides = [1, 1, 1]} : vector<2x8x32xf32> to vector<2x8x8xf32>
    %90 = vector.extract_strided_slice %55 {offsets = [0, 0, 16], sizes = [2, 8, 8], strides = [1, 1, 1]} : vector<2x8x32xf32> to vector<2x8x8xf32>
    "tpu.trace_start"() <{level = 10 : i32, message = "bqd,bkd->bqk"}> : () -> ()
    %cst_43 = arith.constant dense<0.000000e+00> : vector<2x8x8xf32>
    %91 = tpu.matmul %89, %90, %cst_43 {dimension_numbers = #tpu.dot_dimension_numbers<[2], [2], [1], [1], [0, 0, 0, 1, 1, 1], [0], [0]>} : vector<2x8x8xf32>, vector<2x8x8xf32>, vector<2x8x8xf32> -> vector<2x8x8xf32>
    "tpu.trace_stop"() : () -> ()
    %92 = arith.addf %91, %2 : vector<2x8x8xf32>
    %cst_44 = arith.constant dense<0xFF800000> : vector<2x8xf32>
    %93 = vector.multi_reduction <maximumf>, %92, %cst_44 [2] : vector<2x8x8xf32> to vector<2x8xf32>
    %94 = vector.shape_cast %93 : vector<2x8xf32> to vector<2x8x1xf32>
    %95 = vector.broadcast %94 : vector<2x8x1xf32> to vector<2x8x8xf32>
    %96 = arith.subf %92, %95 : vector<2x8x8xf32>
    %97 = math.exp %96 : vector<2x8x8xf32>
    %cst_45 = arith.constant dense<0.000000e+00> : vector<2x8xf32>
    %98 = vector.multi_reduction <add>, %97, %cst_45 [2] : vector<2x8x8xf32> to vector<2x8xf32>
    %99 = vector.shape_cast %98 : vector<2x8xf32> to vector<2x8x1xf32>
    %100 = tpu.reciprocal %99 {approx = true} : vector<2x8x1xf32> -> vector<2x8x1xf32>
    %101 = vector.broadcast %100 : vector<2x8x1xf32> to vector<2x8x8xf32>
    %102 = arith.mulf %97, %101 : vector<2x8x8xf32>
    %103 = vector.extract_strided_slice %56 {offsets = [0, 0, 16], sizes = [2, 8, 8], strides = [1, 1, 1]} : vector<2x8x32xf32> to vector<2x8x8xf32>
    "tpu.trace_start"() <{level = 10 : i32, message = "bqk,bkd->bqd"}> : () -> ()
    %cst_46 = arith.constant dense<0.000000e+00> : vector<2x8x8xf32>
    %104 = tpu.matmul %102, %103, %cst_46 {dimension_numbers = #tpu.dot_dimension_numbers<[2], [1], [1], [2], [0, 0, 0, 1, 1, 2], [0], [0]>} : vector<2x8x8xf32>, vector<2x8x8xf32>, vector<2x8x8xf32> -> vector<2x8x8xf32>
    "tpu.trace_stop"() : () -> ()
    %105 = vector.extract_strided_slice %54 {offsets = [0, 0, 24], sizes = [2, 8, 8], strides = [1, 1, 1]} : vector<2x8x32xf32> to vector<2x8x8xf32>
    %106 = vector.extract_strided_slice %55 {offsets = [0, 0, 24], sizes = [2, 8, 8], strides = [1, 1, 1]} : vector<2x8x32xf32> to vector<2x8x8xf32>
    "tpu.trace_start"() <{level = 10 : i32, message = "bqd,bkd->bqk"}> : () -> ()
    %cst_47 = arith.constant dense<0.000000e+00> : vector<2x8x8xf32>
    %107 = tpu.matmul %105, %106, %cst_47 {dimension_numbers = #tpu.dot_dimension_numbers<[2], [2], [1], [1], [0, 0, 0, 1, 1, 1], [0], [0]>} : vector<2x8x8xf32>, vector<2x8x8xf32>, vector<2x8x8xf32> -> vector<2x8x8xf32>
    "tpu.trace_stop"() : () -> ()
    %108 = arith.addf %107, %2 : vector<2x8x8xf32>
    %cst_48 = arith.constant dense<0xFF800000> : vector<2x8xf32>
    %109 = vector.multi_reduction <maximumf>, %108, %cst_48 [2] : vector<2x8x8xf32> to vector<2x8xf32>
    %110 = vector.shape_cast %109 : vector<2x8xf32> to vector<2x8x1xf32>
    %111 = vector.broadcast %110 : vector<2x8x1xf32> to vector<2x8x8xf32>
    %112 = arith.subf %108, %111 : vector<2x8x8xf32>
    %113 = math.exp %112 : vector<2x8x8xf32>
    %cst_49 = arith.constant dense<0.000000e+00> : vector<2x8xf32>
    %114 = vector.multi_reduction <add>, %113, %cst_49 [2] : vector<2x8x8xf32> to vector<2x8xf32>
    %115 = vector.shape_cast %114 : vector<2x8xf32> to vector<2x8x1xf32>
    %116 = tpu.reciprocal %115 {approx = true} : vector<2x8x1xf32> -> vector<2x8x1xf32>
    %117 = vector.broadcast %116 : vector<2x8x1xf32> to vector<2x8x8xf32>
    %118 = arith.mulf %113, %117 : vector<2x8x8xf32>
    %119 = vector.extract_strided_slice %56 {offsets = [0, 0, 24], sizes = [2, 8, 8], strides = [1, 1, 1]} : vector<2x8x32xf32> to vector<2x8x8xf32>
    "tpu.trace_start"() <{level = 10 : i32, message = "bqk,bkd->bqd"}> : () -> ()
    %cst_50 = arith.constant dense<0.000000e+00> : vector<2x8x8xf32>
    %120 = tpu.matmul %118, %119, %cst_50 {dimension_numbers = #tpu.dot_dimension_numbers<[2], [1], [1], [2], [0, 0, 0, 1, 1, 2], [0], [0]>} : vector<2x8x8xf32>, vector<2x8x8xf32>, vector<2x8x8xf32> -> vector<2x8x8xf32>
    "tpu.trace_stop"() : () -> ()
    %121 = tpu.concatenate %72, %88, %104, %120 in 2 : vector<2x8x8xf32>, vector<2x8x8xf32>, vector<2x8x8xf32>, vector<2x8x8xf32> -> vector<2x8x32xf32>
    %122 = vector.shape_cast %121 : vector<2x8x32xf32> to vector<16x32xf32>
    %cst_51 = arith.constant dense<0.000000e+00> : vector<16x32xf32>
    %123 = tpu.matmul %122, %37, %cst_51 {dimension_numbers = #tpu.dot_dimension_numbers<[1], [0], [0], [1], [0, 0, 1, 1], [], []>} : vector<16x32xf32>, vector<32x32xf32>, vector<16x32xf32> -> vector<16x32xf32>
    %c9 = arith.constant 9 : index
    %c0_52 = arith.constant 0 : index
    %124 = vector.load %arg7[%c9, %c0_52] : memref<16x32xf32, #tpu.memory_space<vmem>>, vector<1x32xf32>
    %125 = vector.broadcast %124 : vector<1x32xf32> to vector<16x32xf32>
    %126 = arith.addf %123, %125 : vector<16x32xf32>
    %127 = vector.shape_cast %126 : vector<16x32xf32> to vector<2x8x32xf32>
    %128 = arith.addf %0, %127 : vector<2x8x32xf32>
    %cst_53 = arith.constant dense<0.000000e+00> : vector<2x8xf32>
    %129 = vector.multi_reduction <add>, %128, %cst_53 [2] : vector<2x8x32xf32> to vector<2x8xf32>
    %130 = vector.shape_cast %129 : vector<2x8xf32> to vector<2x8x1xf32>
    %cst_54 = arith.constant 3.200000e+01 : f32
    %131 = vector.broadcast %cst_54 : f32 to vector<2x8x1xf32>
    %132 = arith.divf %130, %131 : vector<2x8x1xf32>
    %133 = vector.broadcast %132 : vector<2x8x1xf32> to vector<2x8x32xf32>
    %134 = arith.subf %128, %133 : vector<2x8x32xf32>
    %135 = arith.mulf %134, %134 : vector<2x8x32xf32>
    %cst_55 = arith.constant dense<0.000000e+00> : vector<2x8xf32>
    %136 = vector.multi_reduction <add>, %135, %cst_55 [2] : vector<2x8x32xf32> to vector<2x8xf32>
    %137 = vector.shape_cast %136 : vector<2x8xf32> to vector<2x8x1xf32>
    %cst_56 = arith.constant 3.200000e+01 : f32
    %138 = vector.broadcast %cst_56 : f32 to vector<2x8x1xf32>
    %139 = arith.divf %137, %138 : vector<2x8x1xf32>
    %140 = vector.broadcast %132 : vector<2x8x1xf32> to vector<2x8x32xf32>
    %141 = arith.subf %128, %140 : vector<2x8x32xf32>
    %cst_57 = arith.constant 9.99999997E-7 : f32
    %142 = vector.broadcast %cst_57 : f32 to vector<2x8x1xf32>
    %143 = arith.addf %139, %142 : vector<2x8x1xf32>
    %144 = math.rsqrt %143 : vector<2x8x1xf32>
    %145 = vector.broadcast %144 : vector<2x8x1xf32> to vector<2x8x32xf32>
    %146 = arith.mulf %141, %145 : vector<2x8x32xf32>
    %c2_58 = arith.constant 2 : index
    %c0_59 = arith.constant 0 : index
    %147 = vector.load %arg7[%c2_58, %c0_59] : memref<16x32xf32, #tpu.memory_space<vmem>>, vector<1x32xf32>
    %148 = vector.shape_cast %147 : vector<1x32xf32> to vector<1x1x32xf32>
    %149 = vector.broadcast %148 : vector<1x1x32xf32> to vector<2x8x32xf32>
    %150 = arith.mulf %146, %149 : vector<2x8x32xf32>
    %c3_60 = arith.constant 3 : index
    %c0_61 = arith.constant 0 : index
    %151 = vector.load %arg7[%c3_60, %c0_61] : memref<16x32xf32, #tpu.memory_space<vmem>>, vector<1x32xf32>
    %152 = vector.shape_cast %151 : vector<1x32xf32> to vector<1x1x32xf32>
    %153 = vector.broadcast %152 : vector<1x1x32xf32> to vector<2x8x32xf32>
    %154 = arith.addf %150, %153 : vector<2x8x32xf32>
    %c4 = arith.constant 4 : index
    %c0_62 = arith.constant 0 : index
    %c0_63 = arith.constant 0 : index
    %155 = vector.load %arg5[%c4, %c0_62, %c0_63] : memref<8x32x32xf32, #tpu.memory_space<vmem>>, vector<1x32x32xf32>
    %156 = vector.shape_cast %155 : vector<1x32x32xf32> to vector<32x32xf32>
    %c5 = arith.constant 5 : index
    %c0_64 = arith.constant 0 : index
    %c0_65 = arith.constant 0 : index
    %157 = vector.load %arg5[%c5, %c0_64, %c0_65] : memref<8x32x32xf32, #tpu.memory_space<vmem>>, vector<1x32x32xf32>
    %158 = vector.shape_cast %157 : vector<1x32x32xf32> to vector<32x32xf32>
    %c6_66 = arith.constant 6 : index
    %c0_67 = arith.constant 0 : index
    %c0_68 = arith.constant 0 : index
    %159 = vector.load %arg5[%c6_66, %c0_67, %c0_68] : memref<8x32x32xf32, #tpu.memory_space<vmem>>, vector<1x32x32xf32>
    %160 = vector.shape_cast %159 : vector<1x32x32xf32> to vector<32x32xf32>
    %c7_69 = arith.constant 7 : index
    %c0_70 = arith.constant 0 : index
    %c0_71 = arith.constant 0 : index
    %161 = vector.load %arg5[%c7_69, %c0_70, %c0_71] : memref<8x32x32xf32, #tpu.memory_space<vmem>>, vector<1x32x32xf32>
    %162 = vector.shape_cast %161 : vector<1x32x32xf32> to vector<32x32xf32>
    %163 = vector.shape_cast %154 : vector<2x8x32xf32> to vector<16x32xf32>
    %164 = vector.shape_cast %1 : vector<2x10x32xf32> to vector<20x32xf32>
    %cst_72 = arith.constant dense<0.000000e+00> : vector<16x32xf32>
    %165 = tpu.matmul %163, %156, %cst_72 {dimension_numbers = #tpu.dot_dimension_numbers<[1], [0], [0], [1], [0, 0, 1, 1], [], []>} : vector<16x32xf32>, vector<32x32xf32>, vector<16x32xf32> -> vector<16x32xf32>
    %c10 = arith.constant 10 : index
    %c0_73 = arith.constant 0 : index
    %166 = vector.load %arg7[%c10, %c0_73] : memref<16x32xf32, #tpu.memory_space<vmem>>, vector<1x32xf32>
    %167 = vector.broadcast %166 : vector<1x32xf32> to vector<16x32xf32>
    %168 = arith.addf %165, %167 : vector<16x32xf32>
    %cst_74 = arith.constant 0.353553385 : f32
    %169 = vector.broadcast %cst_74 : f32 to vector<16x32xf32>
    %170 = arith.mulf %168, %169 : vector<16x32xf32>
    %cst_75 = arith.constant dense<0.000000e+00> : vector<20x32xf32>
    %171 = tpu.matmul %164, %158, %cst_75 {dimension_numbers = #tpu.dot_dimension_numbers<[1], [0], [0], [1], [0, 0, 1, 1], [], []>} : vector<20x32xf32>, vector<32x32xf32>, vector<20x32xf32> -> vector<20x32xf32>
    %c11 = arith.constant 11 : index
    %c0_76 = arith.constant 0 : index
    %172 = vector.load %arg7[%c11, %c0_76] : memref<16x32xf32, #tpu.memory_space<vmem>>, vector<1x32xf32>
    %173 = vector.broadcast %172 : vector<1x32xf32> to vector<20x32xf32>
    %174 = arith.addf %171, %173 : vector<20x32xf32>
    %cst_77 = arith.constant dense<0.000000e+00> : vector<20x32xf32>
    %175 = tpu.matmul %164, %160, %cst_77 {dimension_numbers = #tpu.dot_dimension_numbers<[1], [0], [0], [1], [0, 0, 1, 1], [], []>} : vector<20x32xf32>, vector<32x32xf32>, vector<20x32xf32> -> vector<20x32xf32>
    %c12 = arith.constant 12 : index
    %c0_78 = arith.constant 0 : index
    %176 = vector.load %arg7[%c12, %c0_78] : memref<16x32xf32, #tpu.memory_space<vmem>>, vector<1x32xf32>
    %177 = vector.broadcast %176 : vector<1x32xf32> to vector<20x32xf32>
    %178 = arith.addf %175, %177 : vector<20x32xf32>
    %179 = vector.shape_cast %170 : vector<16x32xf32> to vector<2x8x32xf32>
    %180 = vector.shape_cast %174 : vector<20x32xf32> to vector<2x10x32xf32>
    %181 = vector.shape_cast %178 : vector<20x32xf32> to vector<2x10x32xf32>
    %182 = vector.extract_strided_slice %179 {offsets = [0, 0, 0], sizes = [2, 8, 8], strides = [1, 1, 1]} : vector<2x8x32xf32> to vector<2x8x8xf32>
    %183 = vector.extract_strided_slice %180 {offsets = [0, 0, 0], sizes = [2, 10, 8], strides = [1, 1, 1]} : vector<2x10x32xf32> to vector<2x10x8xf32>
    "tpu.trace_start"() <{level = 10 : i32, message = "bqd,bkd->bqk"}> : () -> ()
    %cst_79 = arith.constant dense<0.000000e+00> : vector<2x8x10xf32>
    %184 = tpu.matmul %182, %183, %cst_79 {dimension_numbers = #tpu.dot_dimension_numbers<[2], [2], [1], [1], [0, 0, 0, 1, 1, 1], [0], [0]>} : vector<2x8x8xf32>, vector<2x10x8xf32>, vector<2x8x10xf32> -> vector<2x8x10xf32>
    "tpu.trace_stop"() : () -> ()
    %185 = arith.addf %184, %3 : vector<2x8x10xf32>
    %cst_80 = arith.constant dense<0xFF800000> : vector<2x8xf32>
    %186 = vector.multi_reduction <maximumf>, %185, %cst_80 [2] : vector<2x8x10xf32> to vector<2x8xf32>
    %187 = vector.shape_cast %186 : vector<2x8xf32> to vector<2x8x1xf32>
    %188 = vector.broadcast %187 : vector<2x8x1xf32> to vector<2x8x10xf32>
    %189 = arith.subf %185, %188 : vector<2x8x10xf32>
    %190 = math.exp %189 : vector<2x8x10xf32>
    %cst_81 = arith.constant dense<0.000000e+00> : vector<2x8xf32>
    %191 = vector.multi_reduction <add>, %190, %cst_81 [2] : vector<2x8x10xf32> to vector<2x8xf32>
    %192 = vector.shape_cast %191 : vector<2x8xf32> to vector<2x8x1xf32>
    %193 = tpu.reciprocal %192 {approx = true} : vector<2x8x1xf32> -> vector<2x8x1xf32>
    %194 = vector.broadcast %193 : vector<2x8x1xf32> to vector<2x8x10xf32>
    %195 = arith.mulf %190, %194 : vector<2x8x10xf32>
    %196 = vector.extract_strided_slice %181 {offsets = [0, 0, 0], sizes = [2, 10, 8], strides = [1, 1, 1]} : vector<2x10x32xf32> to vector<2x10x8xf32>
    "tpu.trace_start"() <{level = 10 : i32, message = "bqk,bkd->bqd"}> : () -> ()
    %cst_82 = arith.constant dense<0.000000e+00> : vector<2x8x8xf32>
    %197 = tpu.matmul %195, %196, %cst_82 {dimension_numbers = #tpu.dot_dimension_numbers<[2], [1], [1], [2], [0, 0, 0, 1, 1, 2], [0], [0]>} : vector<2x8x10xf32>, vector<2x10x8xf32>, vector<2x8x8xf32> -> vector<2x8x8xf32>
    "tpu.trace_stop"() : () -> ()
    %198 = vector.extract_strided_slice %179 {offsets = [0, 0, 8], sizes = [2, 8, 8], strides = [1, 1, 1]} : vector<2x8x32xf32> to vector<2x8x8xf32>
    %199 = vector.extract_strided_slice %180 {offsets = [0, 0, 8], sizes = [2, 10, 8], strides = [1, 1, 1]} : vector<2x10x32xf32> to vector<2x10x8xf32>
    "tpu.trace_start"() <{level = 10 : i32, message = "bqd,bkd->bqk"}> : () -> ()
    %cst_83 = arith.constant dense<0.000000e+00> : vector<2x8x10xf32>
    %200 = tpu.matmul %198, %199, %cst_83 {dimension_numbers = #tpu.dot_dimension_numbers<[2], [2], [1], [1], [0, 0, 0, 1, 1, 1], [0], [0]>} : vector<2x8x8xf32>, vector<2x10x8xf32>, vector<2x8x10xf32> -> vector<2x8x10xf32>
    "tpu.trace_stop"() : () -> ()
    %201 = arith.addf %200, %3 : vector<2x8x10xf32>
    %cst_84 = arith.constant dense<0xFF800000> : vector<2x8xf32>
    %202 = vector.multi_reduction <maximumf>, %201, %cst_84 [2] : vector<2x8x10xf32> to vector<2x8xf32>
    %203 = vector.shape_cast %202 : vector<2x8xf32> to vector<2x8x1xf32>
    %204 = vector.broadcast %203 : vector<2x8x1xf32> to vector<2x8x10xf32>
    %205 = arith.subf %201, %204 : vector<2x8x10xf32>
    %206 = math.exp %205 : vector<2x8x10xf32>
    %cst_85 = arith.constant dense<0.000000e+00> : vector<2x8xf32>
    %207 = vector.multi_reduction <add>, %206, %cst_85 [2] : vector<2x8x10xf32> to vector<2x8xf32>
    %208 = vector.shape_cast %207 : vector<2x8xf32> to vector<2x8x1xf32>
    %209 = tpu.reciprocal %208 {approx = true} : vector<2x8x1xf32> -> vector<2x8x1xf32>
    %210 = vector.broadcast %209 : vector<2x8x1xf32> to vector<2x8x10xf32>
    %211 = arith.mulf %206, %210 : vector<2x8x10xf32>
    %212 = vector.extract_strided_slice %181 {offsets = [0, 0, 8], sizes = [2, 10, 8], strides = [1, 1, 1]} : vector<2x10x32xf32> to vector<2x10x8xf32>
    "tpu.trace_start"() <{level = 10 : i32, message = "bqk,bkd->bqd"}> : () -> ()
    %cst_86 = arith.constant dense<0.000000e+00> : vector<2x8x8xf32>
    %213 = tpu.matmul %211, %212, %cst_86 {dimension_numbers = #tpu.dot_dimension_numbers<[2], [1], [1], [2], [0, 0, 0, 1, 1, 2], [0], [0]>} : vector<2x8x10xf32>, vector<2x10x8xf32>, vector<2x8x8xf32> -> vector<2x8x8xf32>
    "tpu.trace_stop"() : () -> ()
    %214 = vector.extract_strided_slice %179 {offsets = [0, 0, 16], sizes = [2, 8, 8], strides = [1, 1, 1]} : vector<2x8x32xf32> to vector<2x8x8xf32>
    %215 = vector.extract_strided_slice %180 {offsets = [0, 0, 16], sizes = [2, 10, 8], strides = [1, 1, 1]} : vector<2x10x32xf32> to vector<2x10x8xf32>
    "tpu.trace_start"() <{level = 10 : i32, message = "bqd,bkd->bqk"}> : () -> ()
    %cst_87 = arith.constant dense<0.000000e+00> : vector<2x8x10xf32>
    %216 = tpu.matmul %214, %215, %cst_87 {dimension_numbers = #tpu.dot_dimension_numbers<[2], [2], [1], [1], [0, 0, 0, 1, 1, 1], [0], [0]>} : vector<2x8x8xf32>, vector<2x10x8xf32>, vector<2x8x10xf32> -> vector<2x8x10xf32>
    "tpu.trace_stop"() : () -> ()
    %217 = arith.addf %216, %3 : vector<2x8x10xf32>
    %cst_88 = arith.constant dense<0xFF800000> : vector<2x8xf32>
    %218 = vector.multi_reduction <maximumf>, %217, %cst_88 [2] : vector<2x8x10xf32> to vector<2x8xf32>
    %219 = vector.shape_cast %218 : vector<2x8xf32> to vector<2x8x1xf32>
    %220 = vector.broadcast %219 : vector<2x8x1xf32> to vector<2x8x10xf32>
    %221 = arith.subf %217, %220 : vector<2x8x10xf32>
    %222 = math.exp %221 : vector<2x8x10xf32>
    %cst_89 = arith.constant dense<0.000000e+00> : vector<2x8xf32>
    %223 = vector.multi_reduction <add>, %222, %cst_89 [2] : vector<2x8x10xf32> to vector<2x8xf32>
    %224 = vector.shape_cast %223 : vector<2x8xf32> to vector<2x8x1xf32>
    %225 = tpu.reciprocal %224 {approx = true} : vector<2x8x1xf32> -> vector<2x8x1xf32>
    %226 = vector.broadcast %225 : vector<2x8x1xf32> to vector<2x8x10xf32>
    %227 = arith.mulf %222, %226 : vector<2x8x10xf32>
    %228 = vector.extract_strided_slice %181 {offsets = [0, 0, 16], sizes = [2, 10, 8], strides = [1, 1, 1]} : vector<2x10x32xf32> to vector<2x10x8xf32>
    "tpu.trace_start"() <{level = 10 : i32, message = "bqk,bkd->bqd"}> : () -> ()
    %cst_90 = arith.constant dense<0.000000e+00> : vector<2x8x8xf32>
    %229 = tpu.matmul %227, %228, %cst_90 {dimension_numbers = #tpu.dot_dimension_numbers<[2], [1], [1], [2], [0, 0, 0, 1, 1, 2], [0], [0]>} : vector<2x8x10xf32>, vector<2x10x8xf32>, vector<2x8x8xf32> -> vector<2x8x8xf32>
    "tpu.trace_stop"() : () -> ()
    %230 = vector.extract_strided_slice %179 {offsets = [0, 0, 24], sizes = [2, 8, 8], strides = [1, 1, 1]} : vector<2x8x32xf32> to vector<2x8x8xf32>
    %231 = vector.extract_strided_slice %180 {offsets = [0, 0, 24], sizes = [2, 10, 8], strides = [1, 1, 1]} : vector<2x10x32xf32> to vector<2x10x8xf32>
    "tpu.trace_start"() <{level = 10 : i32, message = "bqd,bkd->bqk"}> : () -> ()
    %cst_91 = arith.constant dense<0.000000e+00> : vector<2x8x10xf32>
    %232 = tpu.matmul %230, %231, %cst_91 {dimension_numbers = #tpu.dot_dimension_numbers<[2], [2], [1], [1], [0, 0, 0, 1, 1, 1], [0], [0]>} : vector<2x8x8xf32>, vector<2x10x8xf32>, vector<2x8x10xf32> -> vector<2x8x10xf32>
    "tpu.trace_stop"() : () -> ()
    %233 = arith.addf %232, %3 : vector<2x8x10xf32>
    %cst_92 = arith.constant dense<0xFF800000> : vector<2x8xf32>
    %234 = vector.multi_reduction <maximumf>, %233, %cst_92 [2] : vector<2x8x10xf32> to vector<2x8xf32>
    %235 = vector.shape_cast %234 : vector<2x8xf32> to vector<2x8x1xf32>
    %236 = vector.broadcast %235 : vector<2x8x1xf32> to vector<2x8x10xf32>
    %237 = arith.subf %233, %236 : vector<2x8x10xf32>
    %238 = math.exp %237 : vector<2x8x10xf32>
    %cst_93 = arith.constant dense<0.000000e+00> : vector<2x8xf32>
    %239 = vector.multi_reduction <add>, %238, %cst_93 [2] : vector<2x8x10xf32> to vector<2x8xf32>
    %240 = vector.shape_cast %239 : vector<2x8xf32> to vector<2x8x1xf32>
    %241 = tpu.reciprocal %240 {approx = true} : vector<2x8x1xf32> -> vector<2x8x1xf32>
    %242 = vector.broadcast %241 : vector<2x8x1xf32> to vector<2x8x10xf32>
    %243 = arith.mulf %238, %242 : vector<2x8x10xf32>
    %244 = vector.extract_strided_slice %181 {offsets = [0, 0, 24], sizes = [2, 10, 8], strides = [1, 1, 1]} : vector<2x10x32xf32> to vector<2x10x8xf32>
    "tpu.trace_start"() <{level = 10 : i32, message = "bqk,bkd->bqd"}> : () -> ()
    %cst_94 = arith.constant dense<0.000000e+00> : vector<2x8x8xf32>
    %245 = tpu.matmul %243, %244, %cst_94 {dimension_numbers = #tpu.dot_dimension_numbers<[2], [1], [1], [2], [0, 0, 0, 1, 1, 2], [0], [0]>} : vector<2x8x10xf32>, vector<2x10x8xf32>, vector<2x8x8xf32> -> vector<2x8x8xf32>
    "tpu.trace_stop"() : () -> ()
    %246 = tpu.concatenate %197, %213, %229, %245 in 2 : vector<2x8x8xf32>, vector<2x8x8xf32>, vector<2x8x8xf32>, vector<2x8x8xf32> -> vector<2x8x32xf32>
    %247 = vector.shape_cast %246 : vector<2x8x32xf32> to vector<16x32xf32>
    %cst_95 = arith.constant dense<0.000000e+00> : vector<16x32xf32>
    %248 = tpu.matmul %247, %162, %cst_95 {dimension_numbers = #tpu.dot_dimension_numbers<[1], [0], [0], [1], [0, 0, 1, 1], [], []>} : vector<16x32xf32>, vector<32x32xf32>, vector<16x32xf32> -> vector<16x32xf32>
    %c13 = arith.constant 13 : index
    %c0_96 = arith.constant 0 : index
    %249 = vector.load %arg7[%c13, %c0_96] : memref<16x32xf32, #tpu.memory_space<vmem>>, vector<1x32xf32>
    %250 = vector.broadcast %249 : vector<1x32xf32> to vector<16x32xf32>
    %251 = arith.addf %248, %250 : vector<16x32xf32>
    %252 = vector.shape_cast %251 : vector<16x32xf32> to vector<2x8x32xf32>
    %253 = arith.addf %128, %252 : vector<2x8x32xf32>
    %cst_97 = arith.constant dense<0.000000e+00> : vector<2x8xf32>
    %254 = vector.multi_reduction <add>, %253, %cst_97 [2] : vector<2x8x32xf32> to vector<2x8xf32>
    %255 = vector.shape_cast %254 : vector<2x8xf32> to vector<2x8x1xf32>
    %cst_98 = arith.constant 3.200000e+01 : f32
    %256 = vector.broadcast %cst_98 : f32 to vector<2x8x1xf32>
    %257 = arith.divf %255, %256 : vector<2x8x1xf32>
    %258 = vector.broadcast %257 : vector<2x8x1xf32> to vector<2x8x32xf32>
    %259 = arith.subf %253, %258 : vector<2x8x32xf32>
    %260 = arith.mulf %259, %259 : vector<2x8x32xf32>
    %cst_99 = arith.constant dense<0.000000e+00> : vector<2x8xf32>
    %261 = vector.multi_reduction <add>, %260, %cst_99 [2] : vector<2x8x32xf32> to vector<2x8xf32>
    %262 = vector.shape_cast %261 : vector<2x8xf32> to vector<2x8x1xf32>
    %cst_100 = arith.constant 3.200000e+01 : f32
    %263 = vector.broadcast %cst_100 : f32 to vector<2x8x1xf32>
    %264 = arith.divf %262, %263 : vector<2x8x1xf32>
    %265 = vector.broadcast %257 : vector<2x8x1xf32> to vector<2x8x32xf32>
    %266 = arith.subf %253, %265 : vector<2x8x32xf32>
    %cst_101 = arith.constant 9.99999997E-7 : f32
    %267 = vector.broadcast %cst_101 : f32 to vector<2x8x1xf32>
    %268 = arith.addf %264, %267 : vector<2x8x1xf32>
    %269 = math.rsqrt %268 : vector<2x8x1xf32>
    %270 = vector.broadcast %269 : vector<2x8x1xf32> to vector<2x8x32xf32>
    %271 = arith.mulf %266, %270 : vector<2x8x32xf32>
    %c4_102 = arith.constant 4 : index
    %c0_103 = arith.constant 0 : index
    %272 = vector.load %arg7[%c4_102, %c0_103] : memref<16x32xf32, #tpu.memory_space<vmem>>, vector<1x32xf32>
    %273 = vector.shape_cast %272 : vector<1x32xf32> to vector<1x1x32xf32>
    %274 = vector.broadcast %273 : vector<1x1x32xf32> to vector<2x8x32xf32>
    %275 = arith.mulf %271, %274 : vector<2x8x32xf32>
    %c5_104 = arith.constant 5 : index
    %c0_105 = arith.constant 0 : index
    %276 = vector.load %arg7[%c5_104, %c0_105] : memref<16x32xf32, #tpu.memory_space<vmem>>, vector<1x32xf32>
    %277 = vector.shape_cast %276 : vector<1x32xf32> to vector<1x1x32xf32>
    %278 = vector.broadcast %277 : vector<1x1x32xf32> to vector<2x8x32xf32>
    %279 = arith.addf %275, %278 : vector<2x8x32xf32>
    %280 = vector.shape_cast %279 : vector<2x8x32xf32> to vector<16x32xf32>
    %c0_106 = arith.constant 0 : index
    %c0_107 = arith.constant 0 : index
    %c0_108 = arith.constant 0 : index
    %281 = vector.load %arg6[%c0_106, %c0_107, %c0_108] : memref<2x32x64xf32, #tpu.memory_space<vmem>>, vector<1x32x64xf32>
    %282 = vector.shape_cast %281 : vector<1x32x64xf32> to vector<32x64xf32>
    %cst_109 = arith.constant dense<0.000000e+00> : vector<16x64xf32>
    %283 = tpu.matmul %280, %282, %cst_109 {dimension_numbers = #tpu.dot_dimension_numbers<[1], [0], [0], [1], [0, 0, 1, 1], [], []>} : vector<16x32xf32>, vector<32x64xf32>, vector<16x64xf32> -> vector<16x64xf32>
    %c0_110 = arith.constant 0 : index
    %c0_111 = arith.constant 0 : index
    %284 = vector.load %arg8[%c0_110, %c0_111] : memref<1x64xf32, #tpu.memory_space<vmem>>, vector<1x64xf32>
    %285 = vector.broadcast %284 : vector<1x64xf32> to vector<16x64xf32>
    %286 = arith.addf %283, %285 : vector<16x64xf32>
    %cst_112 = arith.constant 0.000000e+00 : f32
    %287 = vector.broadcast %cst_112 : f32 to vector<16x64xf32>
    %288 = arith.maximumf %286, %287 : vector<16x64xf32>
    %c1_113 = arith.constant 1 : index
    %c0_114 = arith.constant 0 : index
    %c0_115 = arith.constant 0 : index
    %289 = vector.load %arg6[%c1_113, %c0_114, %c0_115] : memref<2x32x64xf32, #tpu.memory_space<vmem>>, vector<1x32x64xf32>
    %290 = vector.shape_cast %289 : vector<1x32x64xf32> to vector<32x64xf32>
    %cst_116 = arith.constant dense<0.000000e+00> : vector<16x32xf32>
    %291 = tpu.matmul %288, %290, %cst_116 {dimension_numbers = #tpu.dot_dimension_numbers<[1], [1], [0], [0], [0, 0, 1, 0], [], []>} : vector<16x64xf32>, vector<32x64xf32>, vector<16x32xf32> -> vector<16x32xf32>
    %c14 = arith.constant 14 : index
    %c0_117 = arith.constant 0 : index
    %292 = vector.load %arg7[%c14, %c0_117] : memref<16x32xf32, #tpu.memory_space<vmem>>, vector<1x32xf32>
    %293 = vector.broadcast %292 : vector<1x32xf32> to vector<16x32xf32>
    %294 = arith.addf %291, %293 : vector<16x32xf32>
    %295 = vector.shape_cast %294 : vector<16x32xf32> to vector<2x8x32xf32>
    %296 = arith.addf %253, %295 : vector<2x8x32xf32>
    %c0_118 = arith.constant 0 : index
    %c0_119 = arith.constant 0 : index
    %c0_120 = arith.constant 0 : index
    %297 = vector.load %arg9[%c0_118, %c0_119, %c0_120] : memref<2x8x32xf32, #tpu.memory_space<vmem>>, vector<2x8x32xf32>
    tpu.vector_store %arg9[%c0_118, %c0_119, %c0_120], %296 {strides = array<i32>} : memref<2x8x32xf32, #tpu.memory_space<vmem>>, vector<2x8x32xf32>,
    return
  }
  func.func @transform_0(%arg0: i32) -> (i32, i32, i32) {
    %c0_i32 = arith.constant 0 : i32
    %c0_i32_0 = arith.constant 0 : i32
    %c0_i32_1 = arith.constant 0 : i32
    return %arg0, %c0_i32, %c0_i32_0 : i32, i32, i32
  }
  func.func @transform_1(%arg0: i32) -> (i32, i32, i32) {
    %c0_i32 = arith.constant 0 : i32
    %c0_i32_0 = arith.constant 0 : i32
    %c0_i32_1 = arith.constant 0 : i32
    return %arg0, %c0_i32, %c0_i32_0 : i32, i32, i32
  }
  func.func @transform_2(%arg0: i32) -> (i32, i32, i32) {
    %c0_i32 = arith.constant 0 : i32
    %c0_i32_0 = arith.constant 0 : i32
    %c0_i32_1 = arith.constant 0 : i32
    return %arg0, %c0_i32, %c0_i32_0 : i32, i32, i32
  }
  func.func @transform_3(%arg0: i32) -> (i32, i32, i32) {
    %c0_i32 = arith.constant 0 : i32
    %c0_i32_0 = arith.constant 0 : i32
    %c0_i32_1 = arith.constant 0 : i32
    return %arg0, %c0_i32, %c0_i32_0 : i32, i32, i32
  }
  func.func @transform_4(%arg0: i32) -> (i32, i32, i32) {
    %c0_i32 = arith.constant 0 : i32
    %c0_i32_0 = arith.constant 0 : i32
    %c0_i32_1 = arith.constant 0 : i32
    %c0_i32_2 = arith.constant 0 : i32
    return %c0_i32, %c0_i32_0, %c0_i32_1 : i32, i32, i32
  }
  func.func @transform_5(%arg0: i32) -> (i32, i32, i32) {
    %c0_i32 = arith.constant 0 : i32
    %c0_i32_0 = arith.constant 0 : i32
    %c0_i32_1 = arith.constant 0 : i32
    %c0_i32_2 = arith.constant 0 : i32
    return %c0_i32, %c0_i32_0, %c0_i32_1 : i32, i32, i32
  }
  func.func @transform_6(%arg0: i32) -> (i32, i32) {
    %c0_i32 = arith.constant 0 : i32
    %c0_i32_0 = arith.constant 0 : i32
    %c0_i32_1 = arith.constant 0 : i32
    return %c0_i32, %c0_i32_0 : i32, i32
  }
  func.func @transform_7(%arg0: i32) -> (i32, i32) {
    %c0_i32 = arith.constant 0 : i32
    %c0_i32_0 = arith.constant 0 : i32
    %c0_i32_1 = arith.constant 0 : i32
    return %c0_i32, %c0_i32_0 : i32, i32
  }
  func.func @transform_8(%arg0: i32) -> (i32, i32, i32) {
    %c0_i32 = arith.constant 0 : i32
    %c0_i32_0 = arith.constant 0 : i32
    %c0_i32_1 = arith.constant 0 : i32
    return %arg0, %c0_i32, %c0_i32_0 : i32, i32, i32
  }
}

</mosaic_0001>

<llo_original>
// kernel: tpu_custom_call.1
$region0: #{tpu_custom_call.1}
  #allocation0 [shape = 'u32[]', space=smem, size = 0x4, offset = 0x4, fixed_abs, tag = 'smem constant byte address 0x4 - core index']
  #allocation1 [shape = 'u32[144,128]{1,0:T(1,128)}', space=vmem, size = 0x12000, scoped, tag = 'internal scratch']
  %s0 = inlined_call_operand.hbm [shape: f32[2,8,32], index: 0, kind: input, shape index: {}]
  %s1 = inlined_call_operand.vmem [shape: f32[2,10,32], index: 1, kind: input, shape index: {}]
  %s2 = inlined_call_operand.hbm [shape: f32[2,8,8], index: 2, kind: input, shape index: {}]
  %s3 = inlined_call_operand.hbm [shape: f32[2,8,10], index: 3, kind: input, shape index: {}]
  %s4 = inlined_call_operand.hbm [shape: f32[8,32,32], index: 4, kind: input, shape index: {}]
  %s5 = inlined_call_operand.vmem [shape: f32[2,32,64], index: 5, kind: input, shape index: {}]
  %s6 = inlined_call_operand.hbm [shape: f32[16,32], index: 6, kind: input, shape index: {}]
  %s7 = inlined_call_operand.vmem [shape: f32[1,64], index: 7, kind: input, shape index: {}]
  %s8 = inlined_call_operand.hbm [shape: f32[2,8,32], index: 8, kind: output, shape index: {}]
  %s9 = sld [smem:[#allocation0]]
  $region62: #{tpu_custom_call.1} parent=0
    _
  %s11 = ssub.s32 1, %s9
  %s12 = scalar_select 0, %s11, %s9
  $region1: #{tpu_custom_call.1} parent=0
    #allocation2 [shape = 'u8[8192]{0}', space=vmem, size = 0x2000, scoped, tag = 'input window, operand 0, single buffered']
    #allocation3 [shape = 's32[1]{0}', space=sflag, size = 0x4, scoped, tag = 'scoped memory for tpu_custom_call.1']
    #allocation4 [shape = 's32[1]{0}', space=sflag, size = 0x4, scoped, tag = 'scoped memory for tpu_custom_call.1']
    #allocation5 [shape = 'u8[8192]{0}', space=vmem, size = 0x2000, scoped, tag = 'input window, operand 2, single buffered']
    #allocation6 [shape = 's32[1]{0}', space=sflag, size = 0x4, scoped, tag = 'scoped memory for tpu_custom_call.1']
    #allocation7 [shape = 'u8[8192]{0}', space=vmem, size = 0x2000, scoped, tag = 'input window, operand 3, single buffered']
    #allocation8 [shape = 'u8[131072]{0}', space=vmem, size = 0x20000, scoped, tag = 'input window, operand 4, single buffered']
    #allocation9 [shape = 's32[1]{0}', space=sflag, size = 0x4, scoped, tag = 'scoped memory for tpu_custom_call.1']
    #allocation10 [shape = 'u8[8192]{0}', space=vmem, size = 0x2000, scoped, tag = 'input window, operand 6, single buffered']
    #allocation11 [shape = 'u8[8192]{0}', space=vmem, size = 0x2000, scoped, tag = 'output window, operand 0, single buffered']
    %13 = vsyncpa [#allocation3], 0
    %14 = vsyncpa [#allocation6], 0
    %15 = vsyncpa [#allocation9], 0
    %16 = vsyncpa [#allocation4], 0
    // Predicated region
    $region2: #{tpu_custom_call.1} parent=1 // pred_check
      _
    $region3: #{tpu_custom_call.1} parent=1 // pred_check_branch
      %18 = sbr.rel (0) target = $region5
    $region4: #{tpu_custom_call.1} parent=1 // pred_region
      %s20 = ssub.s32 256, 256
      %21 = vsyncadd [#allocation3], %s20
      %s22 = sshll.u32 [#allocation2], 4
      %s23 = int_to_ptr.vmem [resolvable:$true] %s22
      %28 = dma.hbm_to_vmem [thread:$0]  %s0, 256, %s23, [#allocation3], 128, 128, 8
    $region5: #{tpu_custom_call.1} parent=1 // pred_fallthru
      _
    // Predicated region
    $region6: #{tpu_custom_call.1} parent=1 // pred_check
      _
    $region7: #{tpu_custom_call.1} parent=1 // pred_check_branch
      %30 = sbr.rel (0) target = $region9
    $region8: #{tpu_custom_call.1} parent=1 // pred_region
      _
    $region9: #{tpu_custom_call.1} parent=1 // pred_fallthru
      _
    // Predicated region
    $region10: #{tpu_custom_call.1} parent=1 // pred_check
      _
    $region11: #{tpu_custom_call.1} parent=1 // pred_check_branch
      %32 = sbr.rel (0) target = $region13
    $region12: #{tpu_custom_call.1} parent=1 // pred_region
      %s34 = ssub.s32 256, 256
      %35 = vsyncadd [#allocation6], %s34
      %s36 = sshll.u32 [#allocation5], 4
      %s37 = int_to_ptr.vmem [resolvable:$true] %s36
      %42 = dma.hbm_to_vmem [thread:$0]  %s2, 256, %s37, [#allocation6], 128, 128, 8
    $region13: #{tpu_custom_call.1} parent=1 // pred_fallthru
      _
    // Predicated region
    $region14: #{tpu_custom_call.1} parent=1 // pred_check
      _
    $region15: #{tpu_custom_call.1} parent=1 // pred_check_branch
      %44 = sbr.rel (0) target = $region17
    $region16: #{tpu_custom_call.1} parent=1 // pred_region
      %s46 = ssub.s32 256, 256
      %47 = vsyncadd [#allocation6], %s46
      %s48 = sshll.u32 [#allocation7], 4
      %s49 = int_to_ptr.vmem [resolvable:$true] %s48
      %54 = dma.hbm_to_vmem [thread:$0]  %s3, 256, %s49, [#allocation6], 128, 128, 8
    $region17: #{tpu_custom_call.1} parent=1 // pred_fallthru
      _
    // Predicated region
    $region18: #{tpu_custom_call.1} parent=1 // pred_check
      _
    $region19: #{tpu_custom_call.1} parent=1 // pred_check_branch
      %56 = sbr.rel (0) target = $region21
    $region20: #{tpu_custom_call.1} parent=1 // pred_region
      %s58 = ssub.s32 4096, 4096
      %59 = vsyncadd [#allocation9], %s58
      %s60 = sshll.u32 [#allocation8], 4
      %s61 = int_to_ptr.vmem [resolvable:$true] %s60
      %66 = dma.hbm_to_vmem [thread:$0]  %s4, 4096, %s61, [#allocation9], 128, 128, 8
    $region21: #{tpu_custom_call.1} parent=1 // pred_fallthru
      _
    // Predicated region
    $region22: #{tpu_custom_call.1} parent=1 // pred_check
      _
    $region23: #{tpu_custom_call.1} parent=1 // pred_check_branch
      %68 = sbr.rel (0) target = $region25
    $region24: #{tpu_custom_call.1} parent=1 // pred_region
      _
    $region25: #{tpu_custom_call.1} parent=1 // pred_fallthru
      _
    // Predicated region
    $region26: #{tpu_custom_call.1} parent=1 // pred_check
      _
    $region27: #{tpu_custom_call.1} parent=1 // pred_check_branch
      %70 = sbr.rel (0) target = $region29
    $region28: #{tpu_custom_call.1} parent=1 // pred_region
      %s72 = ssub.s32 256, 256
      %73 = vsyncadd [#allocation9], %s72
      %s74 = sshll.u32 [#allocation10], 4
      %s75 = int_to_ptr.vmem [resolvable:$true] %s74
      %80 = dma.hbm_to_vmem [thread:$0]  %s6, 256, %s75, [#allocation9], 128, 128, 8
    $region29: #{tpu_custom_call.1} parent=1 // pred_fallthru
      _
    // Predicated region
    $region30: #{tpu_custom_call.1} parent=1 // pred_check
      _
    $region31: #{tpu_custom_call.1} parent=1 // pred_check_branch
      %82 = sbr.rel (0) target = $region33
    $region32: #{tpu_custom_call.1} parent=1 // pred_region
      _
    $region33: #{tpu_custom_call.1} parent=1 // pred_fallthru
      _
    // Predicated region
    $region34: #{tpu_custom_call.1} parent=1 // pred_check
      _
    $region35: #{tpu_custom_call.1} parent=1 // pred_check_branch
      %84 = sbr.rel (0) target = $region37
    $region36: #{tpu_custom_call.1} parent=1 // pred_region
      %85 = dma.done [#allocation3], 256
    $region37: #{tpu_custom_call.1} parent=1 // pred_fallthru
      _
    // Predicated region
    $region38: #{tpu_custom_call.1} parent=1 // pred_check
      _
    $region39: #{tpu_custom_call.1} parent=1 // pred_check_branch
      %87 = sbr.rel (0) target = $region41
    $region40: #{tpu_custom_call.1} parent=1 // pred_region
      %88 = dma.done [#allocation6], 256
    $region41: #{tpu_custom_call.1} parent=1 // pred_fallthru
      _
    // Predicated region
    $region42: #{tpu_custom_call.1} parent=1 // pred_check
      _
    $region43: #{tpu_custom_call.1} parent=1 // pred_check_branch
      %90 = sbr.rel (0) target = $region45
    $region44: #{tpu_custom_call.1} parent=1 // pred_region
      %91 = dma.done [#allocation6], 256
    $region45: #{tpu_custom_call.1} parent=1 // pred_fallthru
      _
    // Predicated region
    $region46: #{tpu_custom_call.1} parent=1 // pred_check
      _
    $region47: #{tpu_custom_call.1} parent=1 // pred_check_branch
      %93 = sbr.rel (0) target = $region49
    $region48: #{tpu_custom_call.1} parent=1 // pred_region
      %94 = dma.done [#allocation9], 4096
    $region49: #{tpu_custom_call.1} parent=1 // pred_fallthru
      _
    // Predicated region
    $region50: #{tpu_custom_call.1} parent=1 // pred_check
      _
    $region51: #{tpu_custom_call.1} parent=1 // pred_check_branch
      %96 = sbr.rel (0) target = $region53
    $region52: #{tpu_custom_call.1} parent=1 // pred_region
      %97 = dma.done [#allocation9], 256
    $region53: #{tpu_custom_call.1} parent=1 // pred_fallthru
      _
    %v98 = vld [vmem:[#allocation2] sm:$0xff]
    %v99 = vld [vmem:[#allocation2 + $0x8] sm:$0xff]
    %v100 = vld [vmem:[%s1] sm:$0xff]
    %v101 = vld [vmem:[%s1 + $0x8] sm:$0x3]
    %v102 = vld [vmem:[%s1 + $0x10] sm:$0xff]
    %v103 = vld [vmem:[%s1 + $0x18] sm:$0x3]
    %v104 = vld [vmem:[#allocation5] sm:$0xff]
    %v105 = vld [vmem:[#allocation5 + $0x8] sm:$0xff]
    %v106 = vld [vmem:[#allocation7] sm:$0xff]
    %v107 = vld [vmem:[#allocation7 + $0x8] sm:$0xff]
    %vm108 = vcmask 261120
    %v109 = vsel %vm108, %v98, 0.0
    %110 = vadd.xlane.f32.xlu0 %v109
    %v111 = vpop.xlane.xlu0 %110
    %v112 = vsel %vm108, %v99, 0.0
    %113 = vadd.xlane.f32.xlu0 %v112
    %v114 = vpop.xlane.xlu0 %113
    %v115 = vrcp.pop 32.0
    %v116 = vmul.f32 %v111, %v115
    %v117 = vmul.f32 %v114, %v115
    %v118 = vsub.f32 %v98, %v116
    %v119 = vsub.f32 %v99, %v117
    %v120 = vmul.f32 %v118, %v118
    %v121 = vmul.f32 %v119, %v119
    %v122 = vsel %vm108, %v120, 0.0
    %123 = vadd.xlane.f32.xlu0 %v122
    %v124 = vpop.xlane.xlu0 %123
    %v125 = vsel %vm108, %v121, 0.0
    %126 = vadd.xlane.f32.xlu0 %v125
    %v127 = vpop.xlane.xlu0 %126
    %v128 = vmul.f32 %v124, %v115
    %v129 = vmul.f32 %v127, %v115
    %v130 = vadd.f32 %v128, 1e-06
    %v131 = vadd.f32 %v129, 1e-06
    %v132 = vrsqrt.pop %v130
    %v133 = vrsqrt.pop %v131
    %v134 = vmul.f32 %v118, %v132
    %v135 = vmul.f32 %v119, %v133
    %v136 = vld [vmem:[#allocation10] sm:$0x1]
    %v137 = vlaneseq
    %v138 = vshrl.u32 %v137, 7
    %v139 = vsub.s32 0, %v138
    %v140 = vrot.slane %v136, %v139
    %v141 = vmul.f32 %v134, %v140
    %v142 = vmul.f32 %v135, %v140
    %v143 = vld [vmem:[#allocation10 + $0x1] sm:$0x1]
    %v144 = vlaneseq
    %v145 = vshrl.u32 %v144, 7
    %v146 = vsub.s32 0, %v145
    %v147 = vrot.slane %v143, %v146
    %v148 = vadd.f32 %v141, %v147
    %v149 = vadd.f32 %v142, %v147
    %v150 = vld [vmem:[#allocation8] sm:$0xff]
    %v151 = vld [vmem:[#allocation8 + $0x8] sm:$0xff]
    %v152 = vld [vmem:[#allocation8 + $0x10] sm:$0xff]
    %v153 = vld [vmem:[#allocation8 + $0x18] sm:$0xff]
    %s154 = scalar_lea.vmem [#allocation8], 32
    %v155 = vld [vmem:[%s154] sm:$0xff]
    %v156 = vld [vmem:[%s154 + $0x8] sm:$0xff]
    %v157 = vld [vmem:[%s154 + $0x10] sm:$0xff]
    %v158 = vld [vmem:[%s154 + $0x18] sm:$0xff]
    %s159 = scalar_lea.vmem [#allocation8], 64
    %v160 = vld [vmem:[%s159] sm:$0xff]
    %v161 = vld [vmem:[%s159 + $0x8] sm:$0xff]
    %v162 = vld [vmem:[%s159 + $0x10] sm:$0xff]
    %v163 = vld [vmem:[%s159 + $0x18] sm:$0xff]
    %s164 = scalar_lea.vmem [#allocation8], 96
    %v165 = vld [vmem:[%s164] sm:$0xff]
    %v166 = vld [vmem:[%s164 + $0x8] sm:$0xff]
    %v167 = vld [vmem:[%s164 + $0x10] sm:$0xff]
    %v168 = vld [vmem:[%s164 + $0x18] sm:$0xff]
    %v169 = vld [vmem:[#allocation10 + $0x6] sm:$0x1]
    %v170 = vlaneseq
    %v171 = vshrl.u32 %v170, 7
    %v172 = vsub.s32 0, %v171
    %v173 = vrot.slane %v169, %v172
    %v175 = vsel %vm108, %v148, 0
    %v178 = vsel %vm108, %v149, 0
    %180 = vmatprep.subr.mxu0 0.0
    %181 = vmatpush1.msra.mxu0 %v150
    %182 = vmatprep.subr.mxu0 0.0
    %183 = vmatpush1.msra.mxu0 %v151
    %184 = vmatprep.subr.mxu0 0.0
    %185 = vmatpush1.msra.mxu0 %v152
    %186 = vmatprep.subr.mxu0 0.0
    %187 = vmatpush1.msra.mxu0 %v153
    %188 = vmatprep.subr.mxu0 0.0
    %189 = vmatpush1.msra.mxu0 0.0
    %190 = vmatprep.subr.mxu0 0.0
    %191 = vmatpush1.msra.mxu0 0.0
    %192 = vmatprep.subr.mxu0 0.0
    %193 = vmatpush1.msra.mxu0 0.0
    %194 = vmatprep.subr.mxu0 0.0
    %195 = vmatpush1.msra.mxu0 0.0
    %196 = vmatprep.subr.mxu0 0.0
    %197 = vmatpush1.msra.mxu0 0.0
    %198 = vmatprep.subr.mxu0 0.0
    %199 = vmatpush1.msra.mxu0 0.0
    %200 = vmatprep.subr.mxu0 0.0
    %201 = vmatpush1.msra.mxu0 0.0
    %202 = vmatprep.subr.mxu0 0.0
    %203 = vmatpush1.msra.mxu0 0.0
    %204 = vmatprep.subr.mxu0 0.0
    %205 = vmatpush1.msra.mxu0 0.0
    %206 = vmatprep.subr.mxu0 0.0
    %207 = vmatpush1.msra.mxu0 0.0
    %208 = vmatprep.subr.mxu0 0.0
    %209 = vmatpush1.msra.mxu0 0.0
    %210 = vmatprep.subr.mxu0 0.0
    %211 = vmatpush1.msra.mxu0 0.0
    %212 = vmatprep.subr.mxu0 0.0
    %213 = vmatpush1.msra.mxu0 0.0
    %214 = vmatprep.subr.mxu0 0.0
    %215 = vmatpush1.msra.mxu0 0.0
    %216 = vmatprep.subr.mxu0 0.0
    %217 = vmatpush1.msra.mxu0 0.0
    %218 = vmatprep.subr.mxu0 0.0
    %219 = vmatpush1.msra.mxu0 0.0
    %220 = vmatprep.subr.mxu0 0.0
    %221 = vmatpush1.msra.mxu0 0.0
    %222 = vmatprep.subr.mxu0 0.0
    %223 = vmatpush1.msra.mxu0 0.0
    %224 = vmatprep.subr.mxu0 0.0
    %225 = vmatpush1.msra.mxu0 0.0
    %226 = vmatprep.subr.mxu0 0.0
    %227 = vmatpush1.msra.mxu0 0.0
    %228 = vmatprep.subr.mxu0 0.0
    %229 = vmatpush1.msra.mxu0 0.0
    %230 = vmatprep.subr.mxu0 0.0
    %231 = vmatpush1.msra.mxu0 0.0
    %232 = vmatprep.subr.mxu0 0.0
    %233 = vmatpush1.msra.mxu0 0.0
    %234 = vmatprep.subr.mxu0 0.0
    %235 = vmatpush1.msra.mxu0 0.0
    %236 = vmatprep.subr.mxu0 0.0
    %237 = vmatpush1.msra.mxu0 0.0
    %238 = vmatprep.subr.mxu0 0.0
    %239 = vmatpush1.msra.mxu0 0.0
    %240 = vmatprep.subr.mxu0 0.0
    %241 = vmatpush1.msra.mxu0 0.0
    %242 = vmatprep.subr.mxu0 0.0
    %243 = vmatpush1.msra.mxu0 0.0
    %244 = vmatprep.mubr.f32.mxu0 0.0
    %245 = vmatmul.mubr.f32.gmra.mrb[0].mxu0 %v175
    %v246 = vpop.f32.mrb[0].mxu0
    %v247 = vadd.f32 %v173, %v246
    %v248 = vpop.f32.mrb[0].mxu0
    %249 = vmatprep.mubr.f32.mxu0 0.0
    %250 = vmatmul.mubr.f32.gmra.mrb[0].mxu0 %v178
    %v251 = vpop.f32.mrb[0].mxu0
    %v252 = vadd.f32 %v173, %v251
    %v253 = vpop.f32.mrb[0].mxu0
    %254 = vdwg.mxu0
    %v255 = vmul.f32 %v247, 0.35355338
    %v256 = vmul.f32 %v252, 0.35355338
    %v257 = vld [vmem:[#allocation10 + $0x7] sm:$0x1]
    %v258 = vlaneseq
    %v259 = vshrl.u32 %v258, 7
    %v260 = vsub.s32 0, %v259
    %v261 = vrot.slane %v257, %v260
    %262 = vmatprep.subr.mxu0 0.0
    %263 = vmatpush1.msra.mxu0 %v155
    %264 = vmatprep.subr.mxu0 0.0
    %265 = vmatpush1.msra.mxu0 %v156
    %266 = vmatprep.subr.mxu0 0.0
    %267 = vmatpush1.msra.mxu0 %v157
    %268 = vmatprep.subr.mxu0 0.0
    %269 = vmatpush1.msra.mxu0 %v158
    %270 = vmatprep.subr.mxu0 0.0
    %271 = vmatpush1.msra.mxu0 0.0
    %272 = vmatprep.subr.mxu0 0.0
    %273 = vmatpush1.msra.mxu0 0.0
    %274 = vmatprep.subr.mxu0 0.0
    %275 = vmatpush1.msra.mxu0 0.0
    %276 = vmatprep.subr.mxu0 0.0
    %277 = vmatpush1.msra.mxu0 0.0
    %278 = vmatprep.subr.mxu0 0.0
    %279 = vmatpush1.msra.mxu0 0.0
    %280 = vmatprep.subr.mxu0 0.0
    %281 = vmatpush1.msra.mxu0 0.0
    %282 = vmatprep.subr.mxu0 0.0
    %283 = vmatpush1.msra.mxu0 0.0
    %284 = vmatprep.subr.mxu0 0.0
    %285 = vmatpush1.msra.mxu0 0.0
    %286 = vmatprep.subr.mxu0 0.0
    %287 = vmatpush1.msra.mxu0 0.0
    %288 = vmatprep.subr.mxu0 0.0
    %289 = vmatpush1.msra.mxu0 0.0
    %290 = vmatprep.subr.mxu0 0.0
    %291 = vmatpush1.msra.mxu0 0.0
    %292 = vmatprep.subr.mxu0 0.0
    %293 = vmatpush1.msra.mxu0 0.0
    %294 = vmatprep.subr.mxu0 0.0
    %295 = vmatpush1.msra.mxu0 0.0
    %296 = vmatprep.subr.mxu0 0.0
    %297 = vmatpush1.msra.mxu0 0.0
    %298 = vmatprep.subr.mxu0 0.0
    %299 = vmatpush1.msra.mxu0 0.0
    %300 = vmatprep.subr.mxu0 0.0
    %301 = vmatpush1.msra.mxu0 0.0
    %302 = vmatprep.subr.mxu0 0.0
    %303 = vmatpush1.msra.mxu0 0.0
    %304 = vmatprep.subr.mxu0 0.0
    %305 = vmatpush1.msra.mxu0 0.0
    %306 = vmatprep.subr.mxu0 0.0
    %307 = vmatpush1.msra.mxu0 0.0
    %308 = vmatprep.subr.mxu0 0.0
    %309 = vmatpush1.msra.mxu0 0.0
    %310 = vmatprep.subr.mxu0 0.0
    %311 = vmatpush1.msra.mxu0 0.0
    %312 = vmatprep.subr.mxu0 0.0
    %313 = vmatpush1.msra.mxu0 0.0
    %314 = vmatprep.subr.mxu0 0.0
    %315 = vmatpush1.msra.mxu0 0.0
    %316 = vmatprep.subr.mxu0 0.0
    %317 = vmatpush1.msra.mxu0 0.0
    %318 = vmatprep.subr.mxu0 0.0
    %319 = vmatpush1.msra.mxu0 0.0
    %320 = vmatprep.subr.mxu0 0.0
    %321 = vmatpush1.msra.mxu0 0.0
    %322 = vmatprep.subr.mxu0 0.0
    %323 = vmatpush1.msra.mxu0 0.0
    %324 = vmatprep.subr.mxu0 0.0
    %325 = vmatpush1.msra.mxu0 0.0
    %326 = vmatprep.mubr.f32.mxu0 0.0
    %327 = vmatmul.mubr.f32.gmra.mrb[0].mxu0 %v175
    %v328 = vpop.f32.mrb[0].mxu0
    %v329 = vadd.f32 %v261, %v328
    %v330 = vpop.f32.mrb[0].mxu0
    %331 = vmatprep.mubr.f32.mxu0 0.0
    %332 = vmatmul.mubr.f32.gmra.mrb[0].mxu0 %v178
    %v333 = vpop.f32.mrb[0].mxu0
    %v334 = vadd.f32 %v261, %v333
    %v335 = vpop.f32.mrb[0].mxu0
    %336 = vdwg.mxu0
    %v337 = vld [vmem:[#allocation10 + $0x8] sm:$0x1]
    %v338 = vlaneseq
    %v339 = vshrl.u32 %v338, 7
    %v340 = vsub.s32 0, %v339
    %v341 = vrot.slane %v337, %v340
    %342 = vmatprep.subr.mxu0 0.0
    %343 = vmatpush1.msra.mxu0 %v160
    %344 = vmatprep.subr.mxu0 0.0
    %345 = vmatpush1.msra.mxu0 %v161
    %346 = vmatprep.subr.mxu0 0.0
    %347 = vmatpush1.msra.mxu0 %v162
    %348 = vmatprep.subr.mxu0 0.0
    %349 = vmatpush1.msra.mxu0 %v163
    %350 = vmatprep.subr.mxu0 0.0
    %351 = vmatpush1.msra.mxu0 0.0
    %352 = vmatprep.subr.mxu0 0.0
    %353 = vmatpush1.msra.mxu0 0.0
    %354 = vmatprep.subr.mxu0 0.0
    %355 = vmatpush1.msra.mxu0 0.0
    %356 = vmatprep.subr.mxu0 0.0
    %357 = vmatpush1.msra.mxu0 0.0
    %358 = vmatprep.subr.mxu0 0.0
    %359 = vmatpush1.msra.mxu0 0.0
    %360 = vmatprep.subr.mxu0 0.0
    %361 = vmatpush1.msra.mxu0 0.0
    %362 = vmatprep.subr.mxu0 0.0
    %363 = vmatpush1.msra.mxu0 0.0
    %364 = vmatprep.subr.mxu0 0.0
    %365 = vmatpush1.msra.mxu0 0.0
    %366 = vmatprep.subr.mxu0 0.0
    %367 = vmatpush1.msra.mxu0 0.0
    %368 = vmatprep.subr.mxu0 0.0
    %369 = vmatpush1.msra.mxu0 0.0
    %370 = vmatprep.subr.mxu0 0.0
    %371 = vmatpush1.msra.mxu0 0.0
    %372 = vmatprep.subr.mxu0 0.0
    %373 = vmatpush1.msra.mxu0 0.0
    %374 = vmatprep.subr.mxu0 0.0
    %375 = vmatpush1.msra.mxu0 0.0
    %376 = vmatprep.subr.mxu0 0.0
    %377 = vmatpush1.msra.mxu0 0.0
    %378 = vmatprep.subr.mxu0 0.0
    %379 = vmatpush1.msra.mxu0 0.0
    %380 = vmatprep.subr.mxu0 0.0
    %381 = vmatpush1.msra.mxu0 0.0
    %382 = vmatprep.subr.mxu0 0.0
    %383 = vmatpush1.msra.mxu0 0.0
    %384 = vmatprep.subr.mxu0 0.0
    %385 = vmatpush1.msra.mxu0 0.0
    %386 = vmatprep.subr.mxu0 0.0
    %387 = vmatpush1.msra.mxu0 0.0
    %388 = vmatprep.subr.mxu0 0.0
    %389 = vmatpush1.msra.mxu0 0.0
    %390 = vmatprep.subr.mxu0 0.0
    %391 = vmatpush1.msra.mxu0 0.0
    %392 = vmatprep.subr.mxu0 0.0
    %393 = vmatpush1.msra.mxu0 0.0
    %394 = vmatprep.subr.mxu0 0.0
    %395 = vmatpush1.msra.mxu0 0.0
    %396 = vmatprep.subr.mxu0 0.0
    %397 = vmatpush1.msra.mxu0 0.0
    %398 = vmatprep.subr.mxu0 0.0
    %399 = vmatpush1.msra.mxu0 0.0
    %400 = vmatprep.subr.mxu0 0.0
    %401 = vmatpush1.msra.mxu0 0.0
    %402 = vmatprep.subr.mxu0 0.0
    %403 = vmatpush1.msra.mxu0 0.0
    %404 = vmatprep.subr.mxu0 0.0
    %405 = vmatpush1.msra.mxu0 0.0
    %406 = vmatprep.mubr.f32.mxu0 0.0
    %407 = vmatmul.mubr.f32.gmra.mrb[0].mxu0 %v175
    %v408 = vpop.f32.mrb[0].mxu0
    %v409 = vadd.f32 %v341, %v408
    %v410 = vpop.f32.mrb[0].mxu0
    %411 = vmatprep.mubr.f32.mxu0 0.0
    %412 = vmatmul.mubr.f32.gmra.mrb[0].mxu0 %v178
    %v413 = vpop.f32.mrb[0].mxu0
    %v414 = vadd.f32 %v341, %v413
    %v415 = vpop.f32.mrb[0].mxu0
    %416 = vdwg.mxu0
    %vm417 = vcmask 64512
    %v419 = vsel %vm417, %v255, 0
    %v422 = vsel %vm417, %v329, 0
    %424 = vmatprep.subr.mxu0 0.0
    %425 = vmatpush1.xpose.msra.mxu0 %v422
    %426 = vmatprep.subr.mxu0 0.0
    %427 = vmatpush1.xpose.msra.mxu0 0.0
    %428 = vmatprep.subr.mxu0 0.0
    %429 = vmatpush1.xpose.msra.mxu0 0.0
    %430 = vmatprep.subr.mxu0 0.0
    %431 = vmatpush1.xpose.msra.mxu0 0.0
    %432 = vmatprep.subr.mxu0 0.0
    %433 = vmatpush1.xpose.msra.mxu0 0.0
    %434 = vmatprep.subr.mxu0 0.0
    %435 = vmatpush1.xpose.msra.mxu0 0.0
    %436 = vmatprep.subr.mxu0 0.0
    %437 = vmatpush1.xpose.msra.mxu0 0.0
    %438 = vmatprep.subr.mxu0 0.0
    %439 = vmatpush1.xpose.msra.mxu0 0.0
    %440 = vmatprep.subr.mxu0 0.0
    %441 = vmatpush1.xpose.msra.mxu0 0.0
    %442 = vmatprep.subr.mxu0 0.0
    %443 = vmatpush1.xpose.msra.mxu0 0.0
    %444 = vmatprep.subr.mxu0 0.0
    %445 = vmatpush1.xpose.msra.mxu0 0.0
    %446 = vmatprep.subr.mxu0 0.0
    %447 = vmatpush1.xpose.msra.mxu0 0.0
    %448 = vmatprep.subr.mxu0 0.0
    %449 = vmatpush1.xpose.msra.mxu0 0.0
    %450 = vmatprep.subr.mxu0 0.0
    %451 = vmatpush1.xpose.msra.mxu0 0.0
    %452 = vmatprep.subr.mxu0 0.0
    %453 = vmatpush1.xpose.msra.mxu0 0.0
    %454 = vmatprep.subr.mxu0 0.0
    %455 = vmatpush1.xpose.msra.mxu0 0.0
    %456 = vmatprep.subr.mxu0 0.0
    %457 = vmatpush1.xpose.msra.mxu0 0.0
    %458 = vmatprep.subr.mxu0 0.0
    %459 = vmatpush1.xpose.msra.mxu0 0.0
    %460 = vmatprep.subr.mxu0 0.0
    %461 = vmatpush1.xpose.msra.mxu0 0.0
    %462 = vmatprep.subr.mxu0 0.0
    %463 = vmatpush1.xpose.msra.mxu0 0.0
    %464 = vmatprep.subr.mxu0 0.0
    %465 = vmatpush1.xpose.msra.mxu0 0.0
    %466 = vmatprep.subr.mxu0 0.0
    %467 = vmatpush1.xpose.msra.mxu0 0.0
    %468 = vmatprep.subr.mxu0 0.0
    %469 = vmatpush1.xpose.msra.mxu0 0.0
    %470 = vmatprep.subr.mxu0 0.0
    %471 = vmatpush1.xpose.msra.mxu0 0.0
    %472 = vmatprep.subr.mxu0 0.0
    %473 = vmatpush1.xpose.msra.mxu0 0.0
    %474 = vmatprep.subr.mxu0 0.0
    %475 = vmatpush1.xpose.msra.mxu0 0.0
    %476 = vmatprep.subr.mxu0 0.0
    %477 = vmatpush1.xpose.msra.mxu0 0.0
    %478 = vmatprep.subr.mxu0 0.0
    %479 = vmatpush1.xpose.msra.mxu0 0.0
    %480 = vmatprep.subr.mxu0 0.0
    %481 = vmatpush1.xpose.msra.mxu0 0.0
    %482 = vmatprep.subr.mxu0 0.0
    %483 = vmatpush1.xpose.msra.mxu0 0.0
    %484 = vmatprep.subr.mxu0 0.0
    %485 = vmatpush1.xpose.msra.mxu0 0.0
    %486 = vmatprep.subr.mxu0 0.0
    %487 = vmatpush1.xpose.msra.mxu0 0.0
    %488 = vmatprep.mubr.f32.mxu0 0.0
    %489 = vmatmul.mubr.f32.gmra.mrb[0].mxu0 %v419
    %v490 = vpop.f32.mrb[0].mxu0
    %v491 = vadd.f32 %v104, %v490
    %v492 = vpop.f32.mrb[0].mxu0
    %493 = vdwg.mxu0
    %v495 = vsel %vm417, %v256, 0
    %v498 = vsel %vm417, %v334, 0
    %500 = vmatprep.subr.mxu0 0.0
    %501 = vmatpush1.xpose.msra.mxu0 %v498
    %502 = vmatprep.subr.mxu0 0.0
    %503 = vmatpush1.xpose.msra.mxu0 0.0
    %504 = vmatprep.subr.mxu0 0.0
    %505 = vmatpush1.xpose.msra.mxu0 0.0
    %506 = vmatprep.subr.mxu0 0.0
    %507 = vmatpush1.xpose.msra.mxu0 0.0
    %508 = vmatprep.subr.mxu0 0.0
    %509 = vmatpush1.xpose.msra.mxu0 0.0
    %510 = vmatprep.subr.mxu0 0.0
    %511 = vmatpush1.xpose.msra.mxu0 0.0
    %512 = vmatprep.subr.mxu0 0.0
    %513 = vmatpush1.xpose.msra.mxu0 0.0
    %514 = vmatprep.subr.mxu0 0.0
    %515 = vmatpush1.xpose.msra.mxu0 0.0
    %516 = vmatprep.subr.mxu0 0.0
    %517 = vmatpush1.xpose.msra.mxu0 0.0
    %518 = vmatprep.subr.mxu0 0.0
    %519 = vmatpush1.xpose.msra.mxu0 0.0
    %520 = vmatprep.subr.mxu0 0.0
    %521 = vmatpush1.xpose.msra.mxu0 0.0
    %522 = vmatprep.subr.mxu0 0.0
    %523 = vmatpush1.xpose.msra.mxu0 0.0
    %524 = vmatprep.subr.mxu0 0.0
    %525 = vmatpush1.xpose.msra.mxu0 0.0
    %526 = vmatprep.subr.mxu0 0.0
    %527 = vmatpush1.xpose.msra.mxu0 0.0
    %528 = vmatprep.subr.mxu0 0.0
    %529 = vmatpush1.xpose.msra.mxu0 0.0
    %530 = vmatprep.subr.mxu0 0.0
    %531 = vmatpush1.xpose.msra.mxu0 0.0
    %532 = vmatprep.subr.mxu0 0.0
    %533 = vmatpush1.xpose.msra.mxu0 0.0
    %534 = vmatprep.subr.mxu0 0.0
    %535 = vmatpush1.xpose.msra.mxu0 0.0
    %536 = vmatprep.subr.mxu0 0.0
    %537 = vmatpush1.xpose.msra.mxu0 0.0
    %538 = vmatprep.subr.mxu0 0.0
    %539 = vmatpush1.xpose.msra.mxu0 0.0
    %540 = vmatprep.subr.mxu0 0.0
    %541 = vmatpush1.xpose.msra.mxu0 0.0
    %542 = vmatprep.subr.mxu0 0.0
    %543 = vmatpush1.xpose.msra.mxu0 0.0
    %544 = vmatprep.subr.mxu0 0.0
    %545 = vmatpush1.xpose.msra.mxu0 0.0
    %546 = vmatprep.subr.mxu0 0.0
    %547 = vmatpush1.xpose.msra.mxu0 0.0
    %548 = vmatprep.subr.mxu0 0.0
    %549 = vmatpush1.xpose.msra.mxu0 0.0
    %550 = vmatprep.subr.mxu0 0.0
    %551 = vmatpush1.xpose.msra.mxu0 0.0
    %552 = vmatprep.subr.mxu0 0.0
    %553 = vmatpush1.xpose.msra.mxu0 0.0
    %554 = vmatprep.subr.mxu0 0.0
    %555 = vmatpush1.xpose.msra.mxu0 0.0
    %556 = vmatprep.subr.mxu0 0.0
    %557 = vmatpush1.xpose.msra.mxu0 0.0
    %558 = vmatprep.subr.mxu0 0.0
    %559 = vmatpush1.xpose.msra.mxu0 0.0
    %560 = vmatprep.subr.mxu0 0.0
    %561 = vmatpush1.xpose.msra.mxu0 0.0
    %562 = vmatprep.subr.mxu0 0.0
    %563 = vmatpush1.xpose.msra.mxu0 0.0
    %564 = vmatprep.mubr.f32.mxu0 0.0
    %565 = vmatmul.mubr.f32.gmra.mrb[0].mxu0 %v495
    %v566 = vpop.f32.mrb[0].mxu0
    %v567 = vadd.f32 %v105, %v566
    %v568 = vpop.f32.mrb[0].mxu0
    %569 = vdwg.mxu0
    %v570 = vsel %vm417, %v491, -inf
    %571 = vmax.xlane.f32.xlu0 %v570
    %v572 = vpop.xlane.xlu0 %571
    %v573 = vsel %vm417, %v567, -inf
    %574 = vmax.xlane.f32.xlu0 %v573
    %v575 = vpop.xlane.xlu0 %574
    %v576 = vsub.f32 %v491, %v572
    %v577 = vsub.f32 %v567, %v575
    %v578 = vmul.f32 %v576, 1.442695
    %v579 = vpow.pop %v578
    %v580 = vmul.f32 %v577, 1.442695
    %v581 = vpow.pop %v580
    %v582 = vsel %vm417, %v579, 0.0
    %583 = vadd.xlane.f32.xlu0 %v582
    %v584 = vpop.xlane.xlu0 %583
    %v585 = vsel %vm417, %v581, 0.0
    %586 = vadd.xlane.f32.xlu0 %v585
    %v587 = vpop.xlane.xlu0 %586
    %v588 = vrcp.pop %v584
    %v589 = vrcp.pop %v587
    %v590 = vmul.f32 %v579, %v588
    %v591 = vmul.f32 %v581, %v589
    %v593 = vsel %vm417, %v590, 0
    %595 = vmatprep.subr.mxu0 0.0
    %596 = vmatpush1.msra.mxu0 %v409
    %597 = vmatprep.subr.mxu0 0.0
    %598 = vmatpush1.msra.mxu0 0.0
    %599 = vmatprep.subr.mxu0 0.0
    %600 = vmatpush1.msra.mxu0 0.0
    %601 = vmatprep.subr.mxu0 0.0
    %602 = vmatpush1.msra.mxu0 0.0
    %603 = vmatprep.subr.mxu0 0.0
    %604 = vmatpush1.msra.mxu0 0.0
    %605 = vmatprep.subr.mxu0 0.0
    %606 = vmatpush1.msra.mxu0 0.0
    %607 = vmatprep.subr.mxu0 0.0
    %608 = vmatpush1.msra.mxu0 0.0
    %609 = vmatprep.subr.mxu0 0.0
    %610 = vmatpush1.msra.mxu0 0.0
    %611 = vmatprep.subr.mxu0 0.0
    %612 = vmatpush1.msra.mxu0 0.0
    %613 = vmatprep.subr.mxu0 0.0
    %614 = vmatpush1.msra.mxu0 0.0
    %615 = vmatprep.subr.mxu0 0.0
    %616 = vmatpush1.msra.mxu0 0.0
    %617 = vmatprep.subr.mxu0 0.0
    %618 = vmatpush1.msra.mxu0 0.0
    %619 = vmatprep.subr.mxu0 0.0
    %620 = vmatpush1.msra.mxu0 0.0
    %621 = vmatprep.subr.mxu0 0.0
    %622 = vmatpush1.msra.mxu0 0.0
    %623 = vmatprep.subr.mxu0 0.0
    %624 = vmatpush1.msra.mxu0 0.0
    %625 = vmatprep.subr.mxu0 0.0
    %626 = vmatpush1.msra.mxu0 0.0
    %627 = vmatprep.subr.mxu0 0.0
    %628 = vmatpush1.msra.mxu0 0.0
    %629 = vmatprep.subr.mxu0 0.0
    %630 = vmatpush1.msra.mxu0 0.0
    %631 = vmatprep.subr.mxu0 0.0
    %632 = vmatpush1.msra.mxu0 0.0
    %633 = vmatprep.subr.mxu0 0.0
    %634 = vmatpush1.msra.mxu0 0.0
    %635 = vmatprep.subr.mxu0 0.0
    %636 = vmatpush1.msra.mxu0 0.0
    %637 = vmatprep.subr.mxu0 0.0
    %638 = vmatpush1.msra.mxu0 0.0
    %639 = vmatprep.subr.mxu0 0.0
    %640 = vmatpush1.msra.mxu0 0.0
    %641 = vmatprep.subr.mxu0 0.0
    %642 = vmatpush1.msra.mxu0 0.0
    %643 = vmatprep.subr.mxu0 0.0
    %644 = vmatpush1.msra.mxu0 0.0
    %645 = vmatprep.subr.mxu0 0.0
    %646 = vmatpush1.msra.mxu0 0.0
    %647 = vmatprep.subr.mxu0 0.0
    %648 = vmatpush1.msra.mxu0 0.0
    %649 = vmatprep.subr.mxu0 0.0
    %650 = vmatpush1.msra.mxu0 0.0
    %651 = vmatprep.subr.mxu0 0.0
    %652 = vmatpush1.msra.mxu0 0.0
    %653 = vmatprep.subr.mxu0 0.0
    %654 = vmatpush1.msra.mxu0 0.0
    %655 = vmatprep.subr.mxu0 0.0
    %656 = vmatpush1.msra.mxu0 0.0
    %657 = vmatprep.subr.mxu0 0.0
    %658 = vmatpush1.msra.mxu0 0.0
    %659 = vmatprep.mubr.f32.mxu0 0.0
    %660 = vmatmul.mubr.f32.gmra.mrb[0].mxu0 %v593
    %v661 = vpop.f32.mrb[0].mxu0
    %v662 = vadd.f32 0.0, %v661
    %v663 = vpop.f32.mrb[0].mxu0
    %664 = vdwg.mxu0
    %v666 = vsel %vm417, %v591, 0
    %668 = vmatprep.subr.mxu0 0.0
    %669 = vmatpush1.msra.mxu0 %v414
    %670 = vmatprep.subr.mxu0 0.0
    %671 = vmatpush1.msra.mxu0 0.0
    %672 = vmatprep.subr.mxu0 0.0
    %673 = vmatpush1.msra.mxu0 0.0
    %674 = vmatprep.subr.mxu0 0.0
    %675 = vmatpush1.msra.mxu0 0.0
    %676 = vmatprep.subr.mxu0 0.0
    %677 = vmatpush1.msra.mxu0 0.0
    %678 = vmatprep.subr.mxu0 0.0
    %679 = vmatpush1.msra.mxu0 0.0
    %680 = vmatprep.subr.mxu0 0.0
    %681 = vmatpush1.msra.mxu0 0.0
    %682 = vmatprep.subr.mxu0 0.0
    %683 = vmatpush1.msra.mxu0 0.0
    %684 = vmatprep.subr.mxu0 0.0
    %685 = vmatpush1.msra.mxu0 0.0
    %686 = vmatprep.subr.mxu0 0.0
    %687 = vmatpush1.msra.mxu0 0.0
    %688 = vmatprep.subr.mxu0 0.0
    %689 = vmatpush1.msra.mxu0 0.0
    %690 = vmatprep.subr.mxu0 0.0
    %691 = vmatpush1.msra.mxu0 0.0
    %692 = vmatprep.subr.mxu0 0.0
    %693 = vmatpush1.msra.mxu0 0.0
    %694 = vmatprep.subr.mxu0 0.0
    %695 = vmatpush1.msra.mxu0 0.0
    %696 = vmatprep.subr.mxu0 0.0
    %697 = vmatpush1.msra.mxu0 0.0
    %698 = vmatprep.subr.mxu0 0.0
    %699 = vmatpush1.msra.mxu0 0.0
    %700 = vmatprep.subr.mxu0 0.0
    %701 = vmatpush1.msra.mxu0 0.0
    %702 = vmatprep.subr.mxu0 0.0
    %703 = vmatpush1.msra.mxu0 0.0
    %704 = vmatprep.subr.mxu0 0.0
    %705 = vmatpush1.msra.mxu0 0.0
    %706 = vmatprep.subr.mxu0 0.0
    %707 = vmatpush1.msra.mxu0 0.0
    %708 = vmatprep.subr.mxu0 0.0
    %709 = vmatpush1.msra.mxu0 0.0
    %710 = vmatprep.subr.mxu0 0.0
    %711 = vmatpush1.msra.mxu0 0.0
    %712 = vmatprep.subr.mxu0 0.0
    %713 = vmatpush1.msra.mxu0 0.0
    %714 = vmatprep.subr.mxu0 0.0
    %715 = vmatpush1.msra.mxu0 0.0
    %716 = vmatprep.subr.mxu0 0.0
    %717 = vmatpush1.msra.mxu0 0.0
    %718 = vmatprep.subr.mxu0 0.0
    %719 = vmatpush1.msra.mxu0 0.0
    %720 = vmatprep.subr.mxu0 0.0
    %721 = vmatpush1.msra.mxu0 0.0
    %722 = vmatprep.subr.mxu0 0.0
    %723 = vmatpush1.msra.mxu0 0.0
    %724 = vmatprep.subr.mxu0 0.0
    %725 = vmatpush1.msra.mxu0 0.0
    %726 = vmatprep.subr.mxu0 0.0
    %727 = vmatpush1.msra.mxu0 0.0
    %728 = vmatprep.subr.mxu0 0.0
    %729 = vmatpush1.msra.mxu0 0.0
    %730 = vmatprep.subr.mxu0 0.0
    %731 = vmatpush1.msra.mxu0 0.0
    %732 = vmatprep.mubr.f32.mxu0 0.0
    %733 = vmatmul.mubr.f32.gmra.mrb[0].mxu0 %v666
    %v734 = vpop.f32.mrb[0].mxu0
    %v735 = vadd.f32 0.0, %v734
    %v736 = vpop.f32.mrb[0].mxu0
    %737 = vdwg.mxu0
    %738 = vrot.lane.b32.xlu0 %v255, 120
    %v739 = vpop.permute.xlu0 %738
    %740 = vrot.lane.b32.xlu0 %v329, 120
    %v741 = vpop.permute.xlu0 %740
    %v742 = vsel %vm417, %v739, 0
    %v744 = vsel %vm417, %v741, 0
    %746 = vmatprep.subr.mxu0 0.0
    %747 = vmatpush1.xpose.msra.mxu0 %v744
    %748 = vmatprep.subr.mxu0 0.0
    %749 = vmatpush1.xpose.msra.mxu0 0.0
    %750 = vmatprep.subr.mxu0 0.0
    %751 = vmatpush1.xpose.msra.mxu0 0.0
    %752 = vmatprep.subr.mxu0 0.0
    %753 = vmatpush1.xpose.msra.mxu0 0.0
    %754 = vmatprep.subr.mxu0 0.0
    %755 = vmatpush1.xpose.msra.mxu0 0.0
    %756 = vmatprep.subr.mxu0 0.0
    %757 = vmatpush1.xpose.msra.mxu0 0.0
    %758 = vmatprep.subr.mxu0 0.0
    %759 = vmatpush1.xpose.msra.mxu0 0.0
    %760 = vmatprep.subr.mxu0 0.0
    %761 = vmatpush1.xpose.msra.mxu0 0.0
    %762 = vmatprep.subr.mxu0 0.0
    %763 = vmatpush1.xpose.msra.mxu0 0.0
    %764 = vmatprep.subr.mxu0 0.0
    %765 = vmatpush1.xpose.msra.mxu0 0.0
    %766 = vmatprep.subr.mxu0 0.0
    %767 = vmatpush1.xpose.msra.mxu0 0.0
    %768 = vmatprep.subr.mxu0 0.0
    %769 = vmatpush1.xpose.msra.mxu0 0.0
    %770 = vmatprep.subr.mxu0 0.0
    %771 = vmatpush1.xpose.msra.mxu0 0.0
    %772 = vmatprep.subr.mxu0 0.0
    %773 = vmatpush1.xpose.msra.mxu0 0.0
    %774 = vmatprep.subr.mxu0 0.0
    %775 = vmatpush1.xpose.msra.mxu0 0.0
    %776 = vmatprep.subr.mxu0 0.0
    %777 = vmatpush1.xpose.msra.mxu0 0.0
    %778 = vmatprep.subr.mxu0 0.0
    %779 = vmatpush1.xpose.msra.mxu0 0.0
    %780 = vmatprep.subr.mxu0 0.0
    %781 = vmatpush1.xpose.msra.mxu0 0.0
    %782 = vmatprep.subr.mxu0 0.0
    %783 = vmatpush1.xpose.msra.mxu0 0.0
    %784 = vmatprep.subr.mxu0 0.0
    %785 = vmatpush1.xpose.msra.mxu0 0.0
    %786 = vmatprep.subr.mxu0 0.0
    %787 = vmatpush1.xpose.msra.mxu0 0.0
    %788 = vmatprep.subr.mxu0 0.0
    %789 = vmatpush1.xpose.msra.mxu0 0.0
    %790 = vmatprep.subr.mxu0 0.0
    %791 = vmatpush1.xpose.msra.mxu0 0.0
    %792 = vmatprep.subr.mxu0 0.0
    %793 = vmatpush1.xpose.msra.mxu0 0.0
    %794 = vmatprep.subr.mxu0 0.0
    %795 = vmatpush1.xpose.msra.mxu0 0.0
    %796 = vmatprep.subr.mxu0 0.0
    %797 = vmatpush1.xpose.msra.mxu0 0.0
    %798 = vmatprep.subr.mxu0 0.0
    %799 = vmatpush1.xpose.msra.mxu0 0.0
    %800 = vmatprep.subr.mxu0 0.0
    %801 = vmatpush1.xpose.msra.mxu0 0.0
    %802 = vmatprep.subr.mxu0 0.0
    %803 = vmatpush1.xpose.msra.mxu0 0.0
    %804 = vmatprep.subr.mxu0 0.0
    %805 = vmatpush1.xpose.msra.mxu0 0.0
    %806 = vmatprep.subr.mxu0 0.0
    %807 = vmatpush1.xpose.msra.mxu0 0.0
    %808 = vmatprep.subr.mxu0 0.0
    %809 = vmatpush1.xpose.msra.mxu0 0.0
    %810 = vmatprep.mubr.f32.mxu0 0.0
    %811 = vmatmul.mubr.f32.gmra.mrb[0].mxu0 %v742
    %v812 = vpop.f32.mrb[0].mxu0
    %v813 = vadd.f32 %v104, %v812
    %v814 = vpop.f32.mrb[0].mxu0
    %815 = vdwg.mxu0
    %816 = vrot.lane.b32.xlu0 %v256, 120
    %v817 = vpop.permute.xlu0 %816
    %818 = vrot.lane.b32.xlu0 %v334, 120
    %v819 = vpop.permute.xlu0 %818
    %v820 = vsel %vm417, %v817, 0
    %v822 = vsel %vm417, %v819, 0
    %824 = vmatprep.subr.mxu0 0.0
    %825 = vmatpush1.xpose.msra.mxu0 %v822
    %826 = vmatprep.subr.mxu0 0.0
    %827 = vmatpush1.xpose.msra.mxu0 0.0
    %828 = vmatprep.subr.mxu0 0.0
    %829 = vmatpush1.xpose.msra.mxu0 0.0
    %830 = vmatprep.subr.mxu0 0.0
    %831 = vmatpush1.xpose.msra.mxu0 0.0
    %832 = vmatprep.subr.mxu0 0.0
    %833 = vmatpush1.xpose.msra.mxu0 0.0
    %834 = vmatprep.subr.mxu0 0.0
    %835 = vmatpush1.xpose.msra.mxu0 0.0
    %836 = vmatprep.subr.mxu0 0.0
    %837 = vmatpush1.xpose.msra.mxu0 0.0
    %838 = vmatprep.subr.mxu0 0.0
    %839 = vmatpush1.xpose.msra.mxu0 0.0
    %840 = vmatprep.subr.mxu0 0.0
    %841 = vmatpush1.xpose.msra.mxu0 0.0
    %842 = vmatprep.subr.mxu0 0.0
    %843 = vmatpush1.xpose.msra.mxu0 0.0
    %844 = vmatprep.subr.mxu0 0.0
    %845 = vmatpush1.xpose.msra.mxu0 0.0
    %846 = vmatprep.subr.mxu0 0.0
    %847 = vmatpush1.xpose.msra.mxu0 0.0
    %848 = vmatprep.subr.mxu0 0.0
    %849 = vmatpush1.xpose.msra.mxu0 0.0
    %850 = vmatprep.subr.mxu0 0.0
    %851 = vmatpush1.xpose.msra.mxu0 0.0
    %852 = vmatprep.subr.mxu0 0.0
    %853 = vmatpush1.xpose.msra.mxu0 0.0
    %854 = vmatprep.subr.mxu0 0.0
    %855 = vmatpush1.xpose.msra.mxu0 0.0
    %856 = vmatprep.subr.mxu0 0.0
    %857 = vmatpush1.xpose.msra.mxu0 0.0
    %858 = vmatprep.subr.mxu0 0.0
    %859 = vmatpush1.xpose.msra.mxu0 0.0
    %860 = vmatprep.subr.mxu0 0.0
    %861 = vmatpush1.xpose.msra.mxu0 0.0
    %862 = vmatprep.subr.mxu0 0.0
    %863 = vmatpush1.xpose.msra.mxu0 0.0
    %864 = vmatprep.subr.mxu0 0.0
    %865 = vmatpush1.xpose.msra.mxu0 0.0
    %866 = vmatprep.subr.mxu0 0.0
    %867 = vmatpush1.xpose.msra.mxu0 0.0
    %868 = vmatprep.subr.mxu0 0.0
    %869 = vmatpush1.xpose.msra.mxu0 0.0
    %870 = vmatprep.subr.mxu0 0.0
    %871 = vmatpush1.xpose.msra.mxu0 0.0
    %872 = vmatprep.subr.mxu0 0.0
    %873 = vmatpush1.xpose.msra.mxu0 0.0
    %874 = vmatprep.subr.mxu0 0.0
    %875 = vmatpush1.xpose.msra.mxu0 0.0
    %876 = vmatprep.subr.mxu0 0.0
    %877 = vmatpush1.xpose.msra.mxu0 0.0
    %878 = vmatprep.subr.mxu0 0.0
    %879 = vmatpush1.xpose.msra.mxu0 0.0
    %880 = vmatprep.subr.mxu0 0.0
    %881 = vmatpush1.xpose.msra.mxu0 0.0
    %882 = vmatprep.subr.mxu0 0.0
    %883 = vmatpush1.xpose.msra.mxu0 0.0
    %884 = vmatprep.subr.mxu0 0.0
    %885 = vmatpush1.xpose.msra.mxu0 0.0
    %886 = vmatprep.subr.mxu0 0.0
    %887 = vmatpush1.xpose.msra.mxu0 0.0
    %888 = vmatprep.mubr.f32.mxu0 0.0
    %889 = vmatmul.mubr.f32.gmra.mrb[0].mxu0 %v820
    %v890 = vpop.f32.mrb[0].mxu0
    %v891 = vadd.f32 %v105, %v890
    %v892 = vpop.f32.mrb[0].mxu0
    %893 = vdwg.mxu0
    %v894 = vsel %vm417, %v813, -inf
    %895 = vmax.xlane.f32.xlu0 %v894
    %v896 = vpop.xlane.xlu0 %895
    %v897 = vsel %vm417, %v891, -inf
    %898 = vmax.xlane.f32.xlu0 %v897
    %v899 = vpop.xlane.xlu0 %898
    %v900 = vsub.f32 %v813, %v896
    %v901 = vsub.f32 %v891, %v899
    %v902 = vmul.f32 %v900, 1.442695
    %v903 = vpow.pop %v902
    %v904 = vmul.f32 %v901, 1.442695
    %v905 = vpow.pop %v904
    %v906 = vsel %vm417, %v903, 0.0
    %907 = vadd.xlane.f32.xlu0 %v906
    %v908 = vpop.xlane.xlu0 %907
    %v909 = vsel %vm417, %v905, 0.0
    %910 = vadd.xlane.f32.xlu0 %v909
    %v911 = vpop.xlane.xlu0 %910
    %v912 = vrcp.pop %v908
    %v913 = vrcp.pop %v911
    %v914 = vmul.f32 %v903, %v912
    %v915 = vmul.f32 %v905, %v913
    %917 = vrot.lane.b32.xlu0 %v409, 120
    %v918 = vpop.permute.xlu0 %917
    %v921 = vsel %vm417, %v914, 0
    %923 = vmatprep.subr.mxu0 0.0
    %924 = vmatpush1.msra.mxu0 %v918
    %925 = vmatprep.subr.mxu0 0.0
    %926 = vmatpush1.msra.mxu0 0.0
    %927 = vmatprep.subr.mxu0 0.0
    %928 = vmatpush1.msra.mxu0 0.0
    %929 = vmatprep.subr.mxu0 0.0
    %930 = vmatpush1.msra.mxu0 0.0
    %931 = vmatprep.subr.mxu0 0.0
    %932 = vmatpush1.msra.mxu0 0.0
    %933 = vmatprep.subr.mxu0 0.0
    %934 = vmatpush1.msra.mxu0 0.0
    %935 = vmatprep.subr.mxu0 0.0
    %936 = vmatpush1.msra.mxu0 0.0
    %937 = vmatprep.subr.mxu0 0.0
    %938 = vmatpush1.msra.mxu0 0.0
    %939 = vmatprep.subr.mxu0 0.0
    %940 = vmatpush1.msra.mxu0 0.0
    %941 = vmatprep.subr.mxu0 0.0
    %942 = vmatpush1.msra.mxu0 0.0
    %943 = vmatprep.subr.mxu0 0.0
    %944 = vmatpush1.msra.mxu0 0.0
    %945 = vmatprep.subr.mxu0 0.0
    %946 = vmatpush1.msra.mxu0 0.0
    %947 = vmatprep.subr.mxu0 0.0
    %948 = vmatpush1.msra.mxu0 0.0
    %949 = vmatprep.subr.mxu0 0.0
    %950 = vmatpush1.msra.mxu0 0.0
    %951 = vmatprep.subr.mxu0 0.0
    %952 = vmatpush1.msra.mxu0 0.0
    %953 = vmatprep.subr.mxu0 0.0
    %954 = vmatpush1.msra.mxu0 0.0
    %955 = vmatprep.subr.mxu0 0.0
    %956 = vmatpush1.msra.mxu0 0.0
    %957 = vmatprep.subr.mxu0 0.0
    %958 = vmatpush1.msra.mxu0 0.0
    %959 = vmatprep.subr.mxu0 0.0
    %960 = vmatpush1.msra.mxu0 0.0
    %961 = vmatprep.subr.mxu0 0.0
    %962 = vmatpush1.msra.mxu0 0.0
    %963 = vmatprep.subr.mxu0 0.0
    %964 = vmatpush1.msra.mxu0 0.0
    %965 = vmatprep.subr.mxu0 0.0
    %966 = vmatpush1.msra.mxu0 0.0
    %967 = vmatprep.subr.mxu0 0.0
    %968 = vmatpush1.msra.mxu0 0.0
    %969 = vmatprep.subr.mxu0 0.0
    %970 = vmatpush1.msra.mxu0 0.0
    %971 = vmatprep.subr.mxu0 0.0
    %972 = vmatpush1.msra.mxu0 0.0
    %973 = vmatprep.subr.mxu0 0.0
    %974 = vmatpush1.msra.mxu0 0.0
    %975 = vmatprep.subr.mxu0 0.0
    %976 = vmatpush1.msra.mxu0 0.0
    %977 = vmatprep.subr.mxu0 0.0
    %978 = vmatpush1.msra.mxu0 0.0
    %979 = vmatprep.subr.mxu0 0.0
    %980 = vmatpush1.msra.mxu0 0.0
    %981 = vmatprep.subr.mxu0 0.0
    %982 = vmatpush1.msra.mxu0 0.0
    %983 = vmatprep.subr.mxu0 0.0
    %984 = vmatpush1.msra.mxu0 0.0
    %985 = vmatprep.subr.mxu0 0.0
    %986 = vmatpush1.msra.mxu0 0.0
    %987 = vmatprep.mubr.f32.mxu0 0.0
    %988 = vmatmul.mubr.f32.gmra.mrb[0].mxu0 %v921
    %v989 = vpop.f32.mrb[0].mxu0
    %v990 = vadd.f32 0.0, %v989
    %v991 = vpop.f32.mrb[0].mxu0
    %992 = vdwg.mxu0
    %994 = vrot.lane.b32.xlu0 %v414, 120
    %v995 = vpop.permute.xlu0 %994
    %v998 = vsel %vm417, %v915, 0
    %1000 = vmatprep.subr.mxu0 0.0
    %1001 = vmatpush1.msra.mxu0 %v995
    %1002 = vmatprep.subr.mxu0 0.0
    %1003 = vmatpush1.msra.mxu0 0.0
    %1004 = vmatprep.subr.mxu0 0.0
    %1005 = vmatpush1.msra.mxu0 0.0
    %1006 = vmatprep.subr.mxu0 0.0
    %1007 = vmatpush1.msra.mxu0 0.0
    %1008 = vmatprep.subr.mxu0 0.0
    %1009 = vmatpush1.msra.mxu0 0.0
    %1010 = vmatprep.subr.mxu0 0.0
    %1011 = vmatpush1.msra.mxu0 0.0
    %1012 = vmatprep.subr.mxu0 0.0
    %1013 = vmatpush1.msra.mxu0 0.0
    %1014 = vmatprep.subr.mxu0 0.0
    %1015 = vmatpush1.msra.mxu0 0.0
    %1016 = vmatprep.subr.mxu0 0.0
    %1017 = vmatpush1.msra.mxu0 0.0
    %1018 = vmatprep.subr.mxu0 0.0
    %1019 = vmatpush1.msra.mxu0 0.0
    %1020 = vmatprep.subr.mxu0 0.0
    %1021 = vmatpush1.msra.mxu0 0.0
    %1022 = vmatprep.subr.mxu0 0.0
    %1023 = vmatpush1.msra.mxu0 0.0
    %1024 = vmatprep.subr.mxu0 0.0
    %1025 = vmatpush1.msra.mxu0 0.0
    %1026 = vmatprep.subr.mxu0 0.0
    %1027 = vmatpush1.msra.mxu0 0.0
    %1028 = vmatprep.subr.mxu0 0.0
    %1029 = vmatpush1.msra.mxu0 0.0
    %1030 = vmatprep.subr.mxu0 0.0
    %1031 = vmatpush1.msra.mxu0 0.0
    %1032 = vmatprep.subr.mxu0 0.0
    %1033 = vmatpush1.msra.mxu0 0.0
    %1034 = vmatprep.subr.mxu0 0.0
    %1035 = vmatpush1.msra.mxu0 0.0
    %1036 = vmatprep.subr.mxu0 0.0
    %1037 = vmatpush1.msra.mxu0 0.0
    %1038 = vmatprep.subr.mxu0 0.0
    %1039 = vmatpush1.msra.mxu0 0.0
    %1040 = vmatprep.subr.mxu0 0.0
    %1041 = vmatpush1.msra.mxu0 0.0
    %1042 = vmatprep.subr.mxu0 0.0
    %1043 = vmatpush1.msra.mxu0 0.0
    %1044 = vmatprep.subr.mxu0 0.0
    %1045 = vmatpush1.msra.mxu0 0.0
    %1046 = vmatprep.subr.mxu0 0.0
    %1047 = vmatpush1.msra.mxu0 0.0
    %1048 = vmatprep.subr.mxu0 0.0
    %1049 = vmatpush1.msra.mxu0 0.0
    %1050 = vmatprep.subr.mxu0 0.0
    %1051 = vmatpush1.msra.mxu0 0.0
    %1052 = vmatprep.subr.mxu0 0.0
    %1053 = vmatpush1.msra.mxu0 0.0
    %1054 = vmatprep.subr.mxu0 0.0
    %1055 = vmatpush1.msra.mxu0 0.0
    %1056 = vmatprep.subr.mxu0 0.0
    %1057 = vmatpush1.msra.mxu0 0.0
    %1058 = vmatprep.subr.mxu0 0.0
    %1059 = vmatpush1.msra.mxu0 0.0
    %1060 = vmatprep.subr.mxu0 0.0
    %1061 = vmatpush1.msra.mxu0 0.0
    %1062 = vmatprep.subr.mxu0 0.0
    %1063 = vmatpush1.msra.mxu0 0.0
    %1064 = vmatprep.mubr.f32.mxu0 0.0
    %1065 = vmatmul.mubr.f32.gmra.mrb[0].mxu0 %v998
    %v1066 = vpop.f32.mrb[0].mxu0
    %v1067 = vadd.f32 0.0, %v1066
    %v1068 = vpop.f32.mrb[0].mxu0
    %1069 = vdwg.mxu0
    %1070 = vrot.lane.b32.xlu0 %v255, 112
    %v1071 = vpop.permute.xlu0 %1070
    %1072 = vrot.lane.b32.xlu0 %v329, 112
    %v1073 = vpop.permute.xlu0 %1072
    %v1074 = vsel %vm417, %v1071, 0
    %v1076 = vsel %vm417, %v1073, 0
    %1078 = vmatprep.subr.mxu0 0.0
    %1079 = vmatpush1.xpose.msra.mxu0 %v1076
    %1080 = vmatprep.subr.mxu0 0.0
    %1081 = vmatpush1.xpose.msra.mxu0 0.0
    %1082 = vmatprep.subr.mxu0 0.0
    %1083 = vmatpush1.xpose.msra.mxu0 0.0
    %1084 = vmatprep.subr.mxu0 0.0
    %1085 = vmatpush1.xpose.msra.mxu0 0.0
    %1086 = vmatprep.subr.mxu0 0.0
    %1087 = vmatpush1.xpose.msra.mxu0 0.0
    %1088 = vmatprep.subr.mxu0 0.0
    %1089 = vmatpush1.xpose.msra.mxu0 0.0
    %1090 = vmatprep.subr.mxu0 0.0
    %1091 = vmatpush1.xpose.msra.mxu0 0.0
    %1092 = vmatprep.subr.mxu0 0.0
    %1093 = vmatpush1.xpose.msra.mxu0 0.0
    %1094 = vmatprep.subr.mxu0 0.0
    %1095 = vmatpush1.xpose.msra.mxu0 0.0
    %1096 = vmatprep.subr.mxu0 0.0
    %1097 = vmatpush1.xpose.msra.mxu0 0.0
    %1098 = vmatprep.subr.mxu0 0.0
    %1099 = vmatpush1.xpose.msra.mxu0 0.0
    %1100 = vmatprep.subr.mxu0 0.0
    %1101 = vmatpush1.xpose.msra.mxu0 0.0
    %1102 = vmatprep.subr.mxu0 0.0
    %1103 = vmatpush1.xpose.msra.mxu0 0.0
    %1104 = vmatprep.subr.mxu0 0.0
    %1105 = vmatpush1.xpose.msra.mxu0 0.0
    %1106 = vmatprep.subr.mxu0 0.0
    %1107 = vmatpush1.xpose.msra.mxu0 0.0
    %1108 = vmatprep.subr.mxu0 0.0
    %1109 = vmatpush1.xpose.msra.mxu0 0.0
    %1110 = vmatprep.subr.mxu0 0.0
    %1111 = vmatpush1.xpose.msra.mxu0 0.0
    %1112 = vmatprep.subr.mxu0 0.0
    %1113 = vmatpush1.xpose.msra.mxu0 0.0
    %1114 = vmatprep.subr.mxu0 0.0
    %1115 = vmatpush1.xpose.msra.mxu0 0.0
    %1116 = vmatprep.subr.mxu0 0.0
    %1117 = vmatpush1.xpose.msra.mxu0 0.0
    %1118 = vmatprep.subr.mxu0 0.0
    %1119 = vmatpush1.xpose.msra.mxu0 0.0
    %1120 = vmatprep.subr.mxu0 0.0
    %1121 = vmatpush1.xpose.msra.mxu0 0.0
    %1122 = vmatprep.subr.mxu0 0.0
    %1123 = vmatpush1.xpose.msra.mxu0 0.0
    %1124 = vmatprep.subr.mxu0 0.0
    %1125 = vmatpush1.xpose.msra.mxu0 0.0
    %1126 = vmatprep.subr.mxu0 0.0
    %1127 = vmatpush1.xpose.msra.mxu0 0.0
    %1128 = vmatprep.subr.mxu0 0.0
    %1129 = vmatpush1.xpose.msra.mxu0 0.0
    %1130 = vmatprep.subr.mxu0 0.0
    %1131 = vmatpush1.xpose.msra.mxu0 0.0
    %1132 = vmatprep.subr.mxu0 0.0
    %1133 = vmatpush1.xpose.msra.mxu0 0.0
    %1134 = vmatprep.subr.mxu0 0.0
    %1135 = vmatpush1.xpose.msra.mxu0 0.0
    %1136 = vmatprep.subr.mxu0 0.0
    %1137 = vmatpush1.xpose.msra.mxu0 0.0
    %1138 = vmatprep.subr.mxu0 0.0
    %1139 = vmatpush1.xpose.msra.mxu0 0.0
    %1140 = vmatprep.subr.mxu0 0.0
    %1141 = vmatpush1.xpose.msra.mxu0 0.0
    %1142 = vmatprep.mubr.f32.mxu0 0.0
    %1143 = vmatmul.mubr.f32.gmra.mrb[0].mxu0 %v1074
    %v1144 = vpop.f32.mrb[0].mxu0
    %v1145 = vadd.f32 %v104, %v1144
    %v1146 = vpop.f32.mrb[0].mxu0
    %1147 = vdwg.mxu0
    %1148 = vrot.lane.b32.xlu0 %v256, 112
    %v1149 = vpop.permute.xlu0 %1148
    %1150 = vrot.lane.b32.xlu0 %v334, 112
    %v1151 = vpop.permute.xlu0 %1150
    %v1152 = vsel %vm417, %v1149, 0
    %v1154 = vsel %vm417, %v1151, 0
    %1156 = vmatprep.subr.mxu0 0.0
    %1157 = vmatpush1.xpose.msra.mxu0 %v1154
    %1158 = vmatprep.subr.mxu0 0.0
    %1159 = vmatpush1.xpose.msra.mxu0 0.0
    %1160 = vmatprep.subr.mxu0 0.0
    %1161 = vmatpush1.xpose.msra.mxu0 0.0
    %1162 = vmatprep.subr.mxu0 0.0
    %1163 = vmatpush1.xpose.msra.mxu0 0.0
    %1164 = vmatprep.subr.mxu0 0.0
    %1165 = vmatpush1.xpose.msra.mxu0 0.0
    %1166 = vmatprep.subr.mxu0 0.0
    %1167 = vmatpush1.xpose.msra.mxu0 0.0
    %1168 = vmatprep.subr.mxu0 0.0
    %1169 = vmatpush1.xpose.msra.mxu0 0.0
    %1170 = vmatprep.subr.mxu0 0.0
    %1171 = vmatpush1.xpose.msra.mxu0 0.0
    %1172 = vmatprep.subr.mxu0 0.0
    %1173 = vmatpush1.xpose.msra.mxu0 0.0
    %1174 = vmatprep.subr.mxu0 0.0
    %1175 = vmatpush1.xpose.msra.mxu0 0.0
    %1176 = vmatprep.subr.mxu0 0.0
    %1177 = vmatpush1.xpose.msra.mxu0 0.0
    %1178 = vmatprep.subr.mxu0 0.0
    %1179 = vmatpush1.xpose.msra.mxu0 0.0
    %1180 = vmatprep.subr.mxu0 0.0
    %1181 = vmatpush1.xpose.msra.mxu0 0.0
    %1182 = vmatprep.subr.mxu0 0.0
    %1183 = vmatpush1.xpose.msra.mxu0 0.0
    %1184 = vmatprep.subr.mxu0 0.0
    %1185 = vmatpush1.xpose.msra.mxu0 0.0
    %1186 = vmatprep.subr.mxu0 0.0
    %1187 = vmatpush1.xpose.msra.mxu0 0.0
    %1188 = vmatprep.subr.mxu0 0.0
    %1189 = vmatpush1.xpose.msra.mxu0 0.0
    %1190 = vmatprep.subr.mxu0 0.0
    %1191 = vmatpush1.xpose.msra.mxu0 0.0
    %1192 = vmatprep.subr.mxu0 0.0
    %1193 = vmatpush1.xpose.msra.mxu0 0.0
    %1194 = vmatprep.subr.mxu0 0.0
    %1195 = vmatpush1.xpose.msra.mxu0 0.0
    %1196 = vmatprep.subr.mxu0 0.0
    %1197 = vmatpush1.xpose.msra.mxu0 0.0
    %1198 = vmatprep.subr.mxu0 0.0
    %1199 = vmatpush1.xpose.msra.mxu0 0.0
    %1200 = vmatprep.subr.mxu0 0.0
    %1201 = vmatpush1.xpose.msra.mxu0 0.0
    %1202 = vmatprep.subr.mxu0 0.0
    %1203 = vmatpush1.xpose.msra.mxu0 0.0
    %1204 = vmatprep.subr.mxu0 0.0
    %1205 = vmatpush1.xpose.msra.mxu0 0.0
    %1206 = vmatprep.subr.mxu0 0.0
    %1207 = vmatpush1.xpose.msra.mxu0 0.0
    %1208 = vmatprep.subr.mxu0 0.0
    %1209 = vmatpush1.xpose.msra.mxu0 0.0
    %1210 = vmatprep.subr.mxu0 0.0
    %1211 = vmatpush1.xpose.msra.mxu0 0.0
    %1212 = vmatprep.subr.mxu0 0.0
    %1213 = vmatpush1.xpose.msra.mxu0 0.0
    %1214 = vmatprep.subr.mxu0 0.0
    %1215 = vmatpush1.xpose.msra.mxu0 0.0
    %1216 = vmatprep.subr.mxu0 0.0
    %1217 = vmatpush1.xpose.msra.mxu0 0.0
    %1218 = vmatprep.subr.mxu0 0.0
    %1219 = vmatpush1.xpose.msra.mxu0 0.0
    %1220 = vmatprep.mubr.f32.mxu0 0.0
    %1221 = vmatmul.mubr.f32.gmra.mrb[0].mxu0 %v1152
    %v1222 = vpop.f32.mrb[0].mxu0
    %v1223 = vadd.f32 %v105, %v1222
    %v1224 = vpop.f32.mrb[0].mxu0
    %1225 = vdwg.mxu0
    %v1226 = vsel %vm417, %v1145, -inf
    %1227 = vmax.xlane.f32.xlu0 %v1226
    %v1228 = vpop.xlane.xlu0 %1227
    %v1229 = vsel %vm417, %v1223, -inf
    %1230 = vmax.xlane.f32.xlu0 %v1229
    %v1231 = vpop.xlane.xlu0 %1230
    %v1232 = vsub.f32 %v1145, %v1228
    %v1233 = vsub.f32 %v1223, %v1231
    %v1234 = vmul.f32 %v1232, 1.442695
    %v1235 = vpow.pop %v1234
    %v1236 = vmul.f32 %v1233, 1.442695
    %v1237 = vpow.pop %v1236
    %v1238 = vsel %vm417, %v1235, 0.0
    %1239 = vadd.xlane.f32.xlu0 %v1238
    %v1240 = vpop.xlane.xlu0 %1239
    %v1241 = vsel %vm417, %v1237, 0.0
    %1242 = vadd.xlane.f32.xlu0 %v1241
    %v1243 = vpop.xlane.xlu0 %1242
    %v1244 = vrcp.pop %v1240
    %v1245 = vrcp.pop %v1243
    %v1246 = vmul.f32 %v1235, %v1244
    %v1247 = vmul.f32 %v1237, %v1245
    %1248 = vrot.lane.b32.xlu0 %v409, 112
    %v1249 = vpop.permute.xlu0 %1248
    %v1252 = vsel %vm417, %v1246, 0
    %1254 = vmatprep.subr.mxu0 0.0
    %1255 = vmatpush1.msra.mxu0 %v1249
    %1256 = vmatprep.subr.mxu0 0.0
    %1257 = vmatpush1.msra.mxu0 0.0
    %1258 = vmatprep.subr.mxu0 0.0
    %1259 = vmatpush1.msra.mxu0 0.0
    %1260 = vmatprep.subr.mxu0 0.0
    %1261 = vmatpush1.msra.mxu0 0.0
    %1262 = vmatprep.subr.mxu0 0.0
    %1263 = vmatpush1.msra.mxu0 0.0
    %1264 = vmatprep.subr.mxu0 0.0
    %1265 = vmatpush1.msra.mxu0 0.0
    %1266 = vmatprep.subr.mxu0 0.0
    %1267 = vmatpush1.msra.mxu0 0.0
    %1268 = vmatprep.subr.mxu0 0.0
    %1269 = vmatpush1.msra.mxu0 0.0
    %1270 = vmatprep.subr.mxu0 0.0
    %1271 = vmatpush1.msra.mxu0 0.0
    %1272 = vmatprep.subr.mxu0 0.0
    %1273 = vmatpush1.msra.mxu0 0.0
    %1274 = vmatprep.subr.mxu0 0.0
    %1275 = vmatpush1.msra.mxu0 0.0
    %1276 = vmatprep.subr.mxu0 0.0
    %1277 = vmatpush1.msra.mxu0 0.0
    %1278 = vmatprep.subr.mxu0 0.0
    %1279 = vmatpush1.msra.mxu0 0.0
    %1280 = vmatprep.subr.mxu0 0.0
    %1281 = vmatpush1.msra.mxu0 0.0
    %1282 = vmatprep.subr.mxu0 0.0
    %1283 = vmatpush1.msra.mxu0 0.0
    %1284 = vmatprep.subr.mxu0 0.0
    %1285 = vmatpush1.msra.mxu0 0.0
    %1286 = vmatprep.subr.mxu0 0.0
    %1287 = vmatpush1.msra.mxu0 0.0
    %1288 = vmatprep.subr.mxu0 0.0
    %1289 = vmatpush1.msra.mxu0 0.0
    %1290 = vmatprep.subr.mxu0 0.0
    %1291 = vmatpush1.msra.mxu0 0.0
    %1292 = vmatprep.subr.mxu0 0.0
    %1293 = vmatpush1.msra.mxu0 0.0
    %1294 = vmatprep.subr.mxu0 0.0
    %1295 = vmatpush1.msra.mxu0 0.0
    %1296 = vmatprep.subr.mxu0 0.0
    %1297 = vmatpush1.msra.mxu0 0.0
    %1298 = vmatprep.subr.mxu0 0.0
    %1299 = vmatpush1.msra.mxu0 0.0
    %1300 = vmatprep.subr.mxu0 0.0
    %1301 = vmatpush1.msra.mxu0 0.0
    %1302 = vmatprep.subr.mxu0 0.0
    %1303 = vmatpush1.msra.mxu0 0.0
    %1304 = vmatprep.subr.mxu0 0.0
    %1305 = vmatpush1.msra.mxu0 0.0
    %1306 = vmatprep.subr.mxu0 0.0
    %1307 = vmatpush1.msra.mxu0 0.0
    %1308 = vmatprep.subr.mxu0 0.0
    %1309 = vmatpush1.msra.mxu0 0.0
    %1310 = vmatprep.subr.mxu0 0.0
    %1311 = vmatpush1.msra.mxu0 0.0
    %1312 = vmatprep.subr.mxu0 0.0
    %1313 = vmatpush1.msra.mxu0 0.0
    %1314 = vmatprep.subr.mxu0 0.0
    %1315 = vmatpush1.msra.mxu0 0.0
    %1316 = vmatprep.subr.mxu0 0.0
    %1317 = vmatpush1.msra.mxu0 0.0
    %1318 = vmatprep.mubr.f32.mxu0 0.0
    %1319 = vmatmul.mubr.f32.gmra.mrb[0].mxu0 %v1252
    %v1320 = vpop.f32.mrb[0].mxu0
    %v1321 = vadd.f32 0.0, %v1320
    %v1322 = vpop.f32.mrb[0].mxu0
    %1323 = vdwg.mxu0
    %1324 = vrot.lane.b32.xlu0 %v414, 112
    %v1325 = vpop.permute.xlu0 %1324
    %v1328 = vsel %vm417, %v1247, 0
    %1330 = vmatprep.subr.mxu0 0.0
    %1331 = vmatpush1.msra.mxu0 %v1325
    %1332 = vmatprep.subr.mxu0 0.0
    %1333 = vmatpush1.msra.mxu0 0.0
    %1334 = vmatprep.subr.mxu0 0.0
    %1335 = vmatpush1.msra.mxu0 0.0
    %1336 = vmatprep.subr.mxu0 0.0
    %1337 = vmatpush1.msra.mxu0 0.0
    %1338 = vmatprep.subr.mxu0 0.0
    %1339 = vmatpush1.msra.mxu0 0.0
    %1340 = vmatprep.subr.mxu0 0.0
    %1341 = vmatpush1.msra.mxu0 0.0
    %1342 = vmatprep.subr.mxu0 0.0
    %1343 = vmatpush1.msra.mxu0 0.0
    %1344 = vmatprep.subr.mxu0 0.0
    %1345 = vmatpush1.msra.mxu0 0.0
    %1346 = vmatprep.subr.mxu0 0.0
    %1347 = vmatpush1.msra.mxu0 0.0
    %1348 = vmatprep.subr.mxu0 0.0
    %1349 = vmatpush1.msra.mxu0 0.0
    %1350 = vmatprep.subr.mxu0 0.0
    %1351 = vmatpush1.msra.mxu0 0.0
    %1352 = vmatprep.subr.mxu0 0.0
    %1353 = vmatpush1.msra.mxu0 0.0
    %1354 = vmatprep.subr.mxu0 0.0
    %1355 = vmatpush1.msra.mxu0 0.0
    %1356 = vmatprep.subr.mxu0 0.0
    %1357 = vmatpush1.msra.mxu0 0.0
    %1358 = vmatprep.subr.mxu0 0.0
    %1359 = vmatpush1.msra.mxu0 0.0
    %1360 = vmatprep.subr.mxu0 0.0
    %1361 = vmatpush1.msra.mxu0 0.0
    %1362 = vmatprep.subr.mxu0 0.0
    %1363 = vmatpush1.msra.mxu0 0.0
    %1364 = vmatprep.subr.mxu0 0.0
    %1365 = vmatpush1.msra.mxu0 0.0
    %1366 = vmatprep.subr.mxu0 0.0
    %1367 = vmatpush1.msra.mxu0 0.0
    %1368 = vmatprep.subr.mxu0 0.0
    %1369 = vmatpush1.msra.mxu0 0.0
    %1370 = vmatprep.subr.mxu0 0.0
    %1371 = vmatpush1.msra.mxu0 0.0
    %1372 = vmatprep.subr.mxu0 0.0
    %1373 = vmatpush1.msra.mxu0 0.0
    %1374 = vmatprep.subr.mxu0 0.0
    %1375 = vmatpush1.msra.mxu0 0.0
    %1376 = vmatprep.subr.mxu0 0.0
    %1377 = vmatpush1.msra.mxu0 0.0
    %1378 = vmatprep.subr.mxu0 0.0
    %1379 = vmatpush1.msra.mxu0 0.0
    %1380 = vmatprep.subr.mxu0 0.0
    %1381 = vmatpush1.msra.mxu0 0.0
    %1382 = vmatprep.subr.mxu0 0.0
    %1383 = vmatpush1.msra.mxu0 0.0
    %1384 = vmatprep.subr.mxu0 0.0
    %1385 = vmatpush1.msra.mxu0 0.0
    %1386 = vmatprep.subr.mxu0 0.0
    %1387 = vmatpush1.msra.mxu0 0.0
    %1388 = vmatprep.subr.mxu0 0.0
    %1389 = vmatpush1.msra.mxu0 0.0
    %1390 = vmatprep.subr.mxu0 0.0
    %1391 = vmatpush1.msra.mxu0 0.0
    %1392 = vmatprep.subr.mxu0 0.0
    %1393 = vmatpush1.msra.mxu0 0.0
    %1394 = vmatprep.mubr.f32.mxu0 0.0
    %1395 = vmatmul.mubr.f32.gmra.mrb[0].mxu0 %v1328
    %v1396 = vpop.f32.mrb[0].mxu0
    %v1397 = vadd.f32 0.0, %v1396
    %v1398 = vpop.f32.mrb[0].mxu0
    %1399 = vdwg.mxu0
    %1400 = vrot.lane.b32.xlu0 %v255, 104
    %v1401 = vpop.permute.xlu0 %1400
    %1402 = vrot.lane.b32.xlu0 %v329, 104
    %v1403 = vpop.permute.xlu0 %1402
    %v1404 = vsel %vm417, %v1401, 0
    %v1406 = vsel %vm417, %v1403, 0
    %1408 = vmatprep.subr.mxu0 0.0
    %1409 = vmatpush1.xpose.msra.mxu0 %v1406
    %1410 = vmatprep.subr.mxu0 0.0
    %1411 = vmatpush1.xpose.msra.mxu0 0.0
    %1412 = vmatprep.subr.mxu0 0.0
    %1413 = vmatpush1.xpose.msra.mxu0 0.0
    %1414 = vmatprep.subr.mxu0 0.0
    %1415 = vmatpush1.xpose.msra.mxu0 0.0
    %1416 = vmatprep.subr.mxu0 0.0
    %1417 = vmatpush1.xpose.msra.mxu0 0.0
    %1418 = vmatprep.subr.mxu0 0.0
    %1419 = vmatpush1.xpose.msra.mxu0 0.0
    %1420 = vmatprep.subr.mxu0 0.0
    %1421 = vmatpush1.xpose.msra.mxu0 0.0
    %1422 = vmatprep.subr.mxu0 0.0
    %1423 = vmatpush1.xpose.msra.mxu0 0.0
    %1424 = vmatprep.subr.mxu0 0.0
    %1425 = vmatpush1.xpose.msra.mxu0 0.0
    %1426 = vmatprep.subr.mxu0 0.0
    %1427 = vmatpush1.xpose.msra.mxu0 0.0
    %1428 = vmatprep.subr.mxu0 0.0
    %1429 = vmatpush1.xpose.msra.mxu0 0.0
    %1430 = vmatprep.subr.mxu0 0.0
    %1431 = vmatpush1.xpose.msra.mxu0 0.0
    %1432 = vmatprep.subr.mxu0 0.0
    %1433 = vmatpush1.xpose.msra.mxu0 0.0
    %1434 = vmatprep.subr.mxu0 0.0
    %1435 = vmatpush1.xpose.msra.mxu0 0.0
    %1436 = vmatprep.subr.mxu0 0.0
    %1437 = vmatpush1.xpose.msra.mxu0 0.0
    %1438 = vmatprep.subr.mxu0 0.0
    %1439 = vmatpush1.xpose.msra.mxu0 0.0
    %1440 = vmatprep.subr.mxu0 0.0
    %1441 = vmatpush1.xpose.msra.mxu0 0.0
    %1442 = vmatprep.subr.mxu0 0.0
    %1443 = vmatpush1.xpose.msra.mxu0 0.0
    %1444 = vmatprep.subr.mxu0 0.0
    %1445 = vmatpush1.xpose.msra.mxu0 0.0
    %1446 = vmatprep.subr.mxu0 0.0
    %1447 = vmatpush1.xpose.msra.mxu0 0.0
    %1448 = vmatprep.subr.mxu0 0.0
    %1449 = vmatpush1.xpose.msra.mxu0 0.0
    %1450 = vmatprep.subr.mxu0 0.0
    %1451 = vmatpush1.xpose.msra.mxu0 0.0
    %1452 = vmatprep.subr.mxu0 0.0
    %1453 = vmatpush1.xpose.msra.mxu0 0.0
    %1454 = vmatprep.subr.mxu0 0.0
    %1455 = vmatpush1.xpose.msra.mxu0 0.0
    %1456 = vmatprep.subr.mxu0 0.0
    %1457 = vmatpush1.xpose.msra.mxu0 0.0
    %1458 = vmatprep.subr.mxu0 0.0
    %1459 = vmatpush1.xpose.msra.mxu0 0.0
    %1460 = vmatprep.subr.mxu0 0.0
    %1461 = vmatpush1.xpose.msra.mxu0 0.0
    %1462 = vmatprep.subr.mxu0 0.0
    %1463 = vmatpush1.xpose.msra.mxu0 0.0
    %1464 = vmatprep.subr.mxu0 0.0
    %1465 = vmatpush1.xpose.msra.mxu0 0.0
    %1466 = vmatprep.subr.mxu0 0.0
    %1467 = vmatpush1.xpose.msra.mxu0 0.0
    %1468 = vmatprep.subr.mxu0 0.0
    %1469 = vmatpush1.xpose.msra.mxu0 0.0
    %1470 = vmatprep.subr.mxu0 0.0
    %1471 = vmatpush1.xpose.msra.mxu0 0.0
    %1472 = vmatprep.mubr.f32.mxu0 0.0
    %1473 = vmatmul.mubr.f32.gmra.mrb[0].mxu0 %v1404
    %v1474 = vpop.f32.mrb[0].mxu0
    %v1475 = vadd.f32 %v104, %v1474
    %v1476 = vpop.f32.mrb[0].mxu0
    %1477 = vdwg.mxu0
    %1478 = vrot.lane.b32.xlu0 %v256, 104
    %v1479 = vpop.permute.xlu0 %1478
    %1480 = vrot.lane.b32.xlu0 %v334, 104
    %v1481 = vpop.permute.xlu0 %1480
    %v1482 = vsel %vm417, %v1479, 0
    %v1484 = vsel %vm417, %v1481, 0
    %1486 = vmatprep.subr.mxu0 0.0
    %1487 = vmatpush1.xpose.msra.mxu0 %v1484
    %1488 = vmatprep.subr.mxu0 0.0
    %1489 = vmatpush1.xpose.msra.mxu0 0.0
    %1490 = vmatprep.subr.mxu0 0.0
    %1491 = vmatpush1.xpose.msra.mxu0 0.0
    %1492 = vmatprep.subr.mxu0 0.0
    %1493 = vmatpush1.xpose.msra.mxu0 0.0
    %1494 = vmatprep.subr.mxu0 0.0
    %1495 = vmatpush1.xpose.msra.mxu0 0.0
    %1496 = vmatprep.subr.mxu0 0.0
    %1497 = vmatpush1.xpose.msra.mxu0 0.0
    %1498 = vmatprep.subr.mxu0 0.0
    %1499 = vmatpush1.xpose.msra.mxu0 0.0
    %1500 = vmatprep.subr.mxu0 0.0
    %1501 = vmatpush1.xpose.msra.mxu0 0.0
    %1502 = vmatprep.subr.mxu0 0.0
    %1503 = vmatpush1.xpose.msra.mxu0 0.0
    %1504 = vmatprep.subr.mxu0 0.0
    %1505 = vmatpush1.xpose.msra.mxu0 0.0
    %1506 = vmatprep.subr.mxu0 0.0
    %1507 = vmatpush1.xpose.msra.mxu0 0.0
    %1508 = vmatprep.subr.mxu0 0.0
    %1509 = vmatpush1.xpose.msra.mxu0 0.0
    %1510 = vmatprep.subr.mxu0 0.0
    %1511 = vmatpush1.xpose.msra.mxu0 0.0
    %1512 = vmatprep.subr.mxu0 0.0
    %1513 = vmatpush1.xpose.msra.mxu0 0.0
    %1514 = vmatprep.subr.mxu0 0.0
    %1515 = vmatpush1.xpose.msra.mxu0 0.0
    %1516 = vmatprep.subr.mxu0 0.0
    %1517 = vmatpush1.xpose.msra.mxu0 0.0
    %1518 = vmatprep.subr.mxu0 0.0
    %1519 = vmatpush1.xpose.msra.mxu0 0.0
    %1520 = vmatprep.subr.mxu0 0.0
    %1521 = vmatpush1.xpose.msra.mxu0 0.0
    %1522 = vmatprep.subr.mxu0 0.0
    %1523 = vmatpush1.xpose.msra.mxu0 0.0
    %1524 = vmatprep.subr.mxu0 0.0
    %1525 = vmatpush1.xpose.msra.mxu0 0.0
    %1526 = vmatprep.subr.mxu0 0.0
    %1527 = vmatpush1.xpose.msra.mxu0 0.0
    %1528 = vmatprep.subr.mxu0 0.0
    %1529 = vmatpush1.xpose.msra.mxu0 0.0
    %1530 = vmatprep.subr.mxu0 0.0
    %1531 = vmatpush1.xpose.msra.mxu0 0.0
    %1532 = vmatprep.subr.mxu0 0.0
    %1533 = vmatpush1.xpose.msra.mxu0 0.0
    %1534 = vmatprep.subr.mxu0 0.0
    %1535 = vmatpush1.xpose.msra.mxu0 0.0
    %1536 = vmatprep.subr.mxu0 0.0
    %1537 = vmatpush1.xpose.msra.mxu0 0.0
    %1538 = vmatprep.subr.mxu0 0.0
    %1539 = vmatpush1.xpose.msra.mxu0 0.0
    %1540 = vmatprep.subr.mxu0 0.0
    %1541 = vmatpush1.xpose.msra.mxu0 0.0
    %1542 = vmatprep.subr.mxu0 0.0
    %1543 = vmatpush1.xpose.msra.mxu0 0.0
    %1544 = vmatprep.subr.mxu0 0.0
    %1545 = vmatpush1.xpose.msra.mxu0 0.0
    %1546 = vmatprep.subr.mxu0 0.0
    %1547 = vmatpush1.xpose.msra.mxu0 0.0
    %1548 = vmatprep.subr.mxu0 0.0
    %1549 = vmatpush1.xpose.msra.mxu0 0.0
    %1550 = vmatprep.mubr.f32.mxu0 0.0
    %1551 = vmatmul.mubr.f32.gmra.mrb[0].mxu0 %v1482
    %v1552 = vpop.f32.mrb[0].mxu0
    %v1553 = vadd.f32 %v105, %v1552
    %v1554 = vpop.f32.mrb[0].mxu0
    %1555 = vdwg.mxu0
    %v1556 = vsel %vm417, %v1475, -inf
    %1557 = vmax.xlane.f32.xlu0 %v1556
    %v1558 = vpop.xlane.xlu0 %1557
    %v1559 = vsel %vm417, %v1553, -inf
    %1560 = vmax.xlane.f32.xlu0 %v1559
    %v1561 = vpop.xlane.xlu0 %1560
    %v1562 = vsub.f32 %v1475, %v1558
    %v1563 = vsub.f32 %v1553, %v1561
    %v1564 = vmul.f32 %v1562, 1.442695
    %v1565 = vpow.pop %v1564
    %v1566 = vmul.f32 %v1563, 1.442695
    %v1567 = vpow.pop %v1566
    %v1568 = vsel %vm417, %v1565, 0.0
    %1569 = vadd.xlane.f32.xlu0 %v1568
    %v1570 = vpop.xlane.xlu0 %1569
    %v1571 = vsel %vm417, %v1567, 0.0
    %1572 = vadd.xlane.f32.xlu0 %v1571
    %v1573 = vpop.xlane.xlu0 %1572
    %v1574 = vrcp.pop %v1570
    %v1575 = vrcp.pop %v1573
    %v1576 = vmul.f32 %v1565, %v1574
    %v1577 = vmul.f32 %v1567, %v1575
    %1578 = vrot.lane.b32.xlu0 %v409, 104
    %v1579 = vpop.permute.xlu0 %1578
    %v1582 = vsel %vm417, %v1576, 0
    %1584 = vmatprep.subr.mxu0 0.0
    %1585 = vmatpush1.msra.mxu0 %v1579
    %1586 = vmatprep.subr.mxu0 0.0
    %1587 = vmatpush1.msra.mxu0 0.0
    %1588 = vmatprep.subr.mxu0 0.0
    %1589 = vmatpush1.msra.mxu0 0.0
    %1590 = vmatprep.subr.mxu0 0.0
    %1591 = vmatpush1.msra.mxu0 0.0
    %1592 = vmatprep.subr.mxu0 0.0
    %1593 = vmatpush1.msra.mxu0 0.0
    %1594 = vmatprep.subr.mxu0 0.0
    %1595 = vmatpush1.msra.mxu0 0.0
    %1596 = vmatprep.subr.mxu0 0.0
    %1597 = vmatpush1.msra.mxu0 0.0
    %1598 = vmatprep.subr.mxu0 0.0
    %1599 = vmatpush1.msra.mxu0 0.0
    %1600 = vmatprep.subr.mxu0 0.0
    %1601 = vmatpush1.msra.mxu0 0.0
    %1602 = vmatprep.subr.mxu0 0.0
    %1603 = vmatpush1.msra.mxu0 0.0
    %1604 = vmatprep.subr.mxu0 0.0
    %1605 = vmatpush1.msra.mxu0 0.0
    %1606 = vmatprep.subr.mxu0 0.0
    %1607 = vmatpush1.msra.mxu0 0.0
    %1608 = vmatprep.subr.mxu0 0.0
    %1609 = vmatpush1.msra.mxu0 0.0
    %1610 = vmatprep.subr.mxu0 0.0
    %1611 = vmatpush1.msra.mxu0 0.0
    %1612 = vmatprep.subr.mxu0 0.0
    %1613 = vmatpush1.msra.mxu0 0.0
    %1614 = vmatprep.subr.mxu0 0.0
    %1615 = vmatpush1.msra.mxu0 0.0
    %1616 = vmatprep.subr.mxu0 0.0
    %1617 = vmatpush1.msra.mxu0 0.0
    %1618 = vmatprep.subr.mxu0 0.0
    %1619 = vmatpush1.msra.mxu0 0.0
    %1620 = vmatprep.subr.mxu0 0.0
    %1621 = vmatpush1.msra.mxu0 0.0
    %1622 = vmatprep.subr.mxu0 0.0
    %1623 = vmatpush1.msra.mxu0 0.0
    %1624 = vmatprep.subr.mxu0 0.0
    %1625 = vmatpush1.msra.mxu0 0.0
    %1626 = vmatprep.subr.mxu0 0.0
    %1627 = vmatpush1.msra.mxu0 0.0
    %1628 = vmatprep.subr.mxu0 0.0
    %1629 = vmatpush1.msra.mxu0 0.0
    %1630 = vmatprep.subr.mxu0 0.0
    %1631 = vmatpush1.msra.mxu0 0.0
    %1632 = vmatprep.subr.mxu0 0.0
    %1633 = vmatpush1.msra.mxu0 0.0
    %1634 = vmatprep.subr.mxu0 0.0
    %1635 = vmatpush1.msra.mxu0 0.0
    %1636 = vmatprep.subr.mxu0 0.0
    %1637 = vmatpush1.msra.mxu0 0.0
    %1638 = vmatprep.subr.mxu0 0.0
    %1639 = vmatpush1.msra.mxu0 0.0
    %1640 = vmatprep.subr.mxu0 0.0
    %1641 = vmatpush1.msra.mxu0 0.0
    %1642 = vmatprep.subr.mxu0 0.0
    %1643 = vmatpush1.msra.mxu0 0.0
    %1644 = vmatprep.subr.mxu0 0.0
    %1645 = vmatpush1.msra.mxu0 0.0
    %1646 = vmatprep.subr.mxu0 0.0
    %1647 = vmatpush1.msra.mxu0 0.0
    %1648 = vmatprep.mubr.f32.mxu0 0.0
    %1649 = vmatmul.mubr.f32.gmra.mrb[0].mxu0 %v1582
    %v1650 = vpop.f32.mrb[0].mxu0
    %v1651 = vadd.f32 0.0, %v1650
    %v1652 = vpop.f32.mrb[0].mxu0
    %1653 = vdwg.mxu0
    %1654 = vrot.lane.b32.xlu0 %v414, 104
    %v1655 = vpop.permute.xlu0 %1654
    %v1658 = vsel %vm417, %v1577, 0
    %1660 = vmatprep.subr.mxu0 0.0
    %1661 = vmatpush1.msra.mxu0 %v1655
    %1662 = vmatprep.subr.mxu0 0.0
    %1663 = vmatpush1.msra.mxu0 0.0
    %1664 = vmatprep.subr.mxu0 0.0
    %1665 = vmatpush1.msra.mxu0 0.0
    %1666 = vmatprep.subr.mxu0 0.0
    %1667 = vmatpush1.msra.mxu0 0.0
    %1668 = vmatprep.subr.mxu0 0.0
    %1669 = vmatpush1.msra.mxu0 0.0
    %1670 = vmatprep.subr.mxu0 0.0
    %1671 = vmatpush1.msra.mxu0 0.0
    %1672 = vmatprep.subr.mxu0 0.0
    %1673 = vmatpush1.msra.mxu0 0.0
    %1674 = vmatprep.subr.mxu0 0.0
    %1675 = vmatpush1.msra.mxu0 0.0
    %1676 = vmatprep.subr.mxu0 0.0
    %1677 = vmatpush1.msra.mxu0 0.0
    %1678 = vmatprep.subr.mxu0 0.0
    %1679 = vmatpush1.msra.mxu0 0.0
    %1680 = vmatprep.subr.mxu0 0.0
    %1681 = vmatpush1.msra.mxu0 0.0
    %1682 = vmatprep.subr.mxu0 0.0
    %1683 = vmatpush1.msra.mxu0 0.0
    %1684 = vmatprep.subr.mxu0 0.0
    %1685 = vmatpush1.msra.mxu0 0.0
    %1686 = vmatprep.subr.mxu0 0.0
    %1687 = vmatpush1.msra.mxu0 0.0
    %1688 = vmatprep.subr.mxu0 0.0
    %1689 = vmatpush1.msra.mxu0 0.0
    %1690 = vmatprep.subr.mxu0 0.0
    %1691 = vmatpush1.msra.mxu0 0.0
    %1692 = vmatprep.subr.mxu0 0.0
    %1693 = vmatpush1.msra.mxu0 0.0
    %1694 = vmatprep.subr.mxu0 0.0
    %1695 = vmatpush1.msra.mxu0 0.0
    %1696 = vmatprep.subr.mxu0 0.0
    %1697 = vmatpush1.msra.mxu0 0.0
    %1698 = vmatprep.subr.mxu0 0.0
    %1699 = vmatpush1.msra.mxu0 0.0
    %1700 = vmatprep.subr.mxu0 0.0
    %1701 = vmatpush1.msra.mxu0 0.0
    %1702 = vmatprep.subr.mxu0 0.0
    %1703 = vmatpush1.msra.mxu0 0.0
    %1704 = vmatprep.subr.mxu0 0.0
    %1705 = vmatpush1.msra.mxu0 0.0
    %1706 = vmatprep.subr.mxu0 0.0
    %1707 = vmatpush1.msra.mxu0 0.0
    %1708 = vmatprep.subr.mxu0 0.0
    %1709 = vmatpush1.msra.mxu0 0.0
    %1710 = vmatprep.subr.mxu0 0.0
    %1711 = vmatpush1.msra.mxu0 0.0
    %1712 = vmatprep.subr.mxu0 0.0
    %1713 = vmatpush1.msra.mxu0 0.0
    %1714 = vmatprep.subr.mxu0 0.0
    %1715 = vmatpush1.msra.mxu0 0.0
    %1716 = vmatprep.subr.mxu0 0.0
    %1717 = vmatpush1.msra.mxu0 0.0
    %1718 = vmatprep.subr.mxu0 0.0
    %1719 = vmatpush1.msra.mxu0 0.0
    %1720 = vmatprep.subr.mxu0 0.0
    %1721 = vmatpush1.msra.mxu0 0.0
    %1722 = vmatprep.subr.mxu0 0.0
    %1723 = vmatpush1.msra.mxu0 0.0
    %1724 = vmatprep.mubr.f32.mxu0 0.0
    %1725 = vmatmul.mubr.f32.gmra.mrb[0].mxu0 %v1658
    %v1726 = vpop.f32.mrb[0].mxu0
    %v1727 = vadd.f32 0.0, %v1726
    %v1728 = vpop.f32.mrb[0].mxu0
    %1729 = vdwg.mxu0
    %1732 = vrot.lane.b32.xlu0 %v990, 8
    %v1733 = vpop.permute.xlu0 %1732
    %1734 = vrot.lane.b32.xlu0 %v1067, 8
    %v1735 = vpop.permute.xlu0 %1734
    %1740 = vrot.lane.b32.xlu0 %v1321, 16
    %v1741 = vpop.permute.xlu0 %1740
    %1742 = vrot.lane.b32.xlu0 %v1397, 16
    %v1743 = vpop.permute.xlu0 %1742
    %1748 = vrot.lane.b32.xlu0 %v1651, 24
    %v1749 = vpop.permute.xlu0 %1748
    %1750 = vrot.lane.b32.xlu0 %v1727, 24
    %v1751 = vpop.permute.xlu0 %1750
    %v1754 = vsel %vm417, %v662, %v1733
    %v1755 = vsel %vm417, %v735, %v1735
    %vm1756 = vcmask 130048
    %v1757 = vsel %vm1756, %v1754, %v1741
    %v1758 = vsel %vm1756, %v1755, %v1743
    %vm1759 = vcmask 195584
    %v1760 = vsel %vm1759, %v1757, %v1749
    %v1761 = vsel %vm1759, %v1758, %v1751
    %v1762 = vld [vmem:[#allocation10 + $0x9] sm:$0x1]
    %v1763 = vlaneseq
    %v1764 = vshrl.u32 %v1763, 7
    %v1765 = vsub.s32 0, %v1764
    %v1766 = vrot.slane %v1762, %v1765
    %v1768 = vsel %vm108, %v1760, 0
    %v1771 = vsel %vm108, %v1761, 0
    %1773 = vmatprep.subr.mxu0 0.0
    %1774 = vmatpush1.msra.mxu0 %v165
    %1775 = vmatprep.subr.mxu0 0.0
    %1776 = vmatpush1.msra.mxu0 %v166
    %1777 = vmatprep.subr.mxu0 0.0
    %1778 = vmatpush1.msra.mxu0 %v167
    %1779 = vmatprep.subr.mxu0 0.0
    %1780 = vmatpush1.msra.mxu0 %v168
    %1781 = vmatprep.subr.mxu0 0.0
    %1782 = vmatpush1.msra.mxu0 0.0
    %1783 = vmatprep.subr.mxu0 0.0
    %1784 = vmatpush1.msra.mxu0 0.0
    %1785 = vmatprep.subr.mxu0 0.0
    %1786 = vmatpush1.msra.mxu0 0.0
    %1787 = vmatprep.subr.mxu0 0.0
    %1788 = vmatpush1.msra.mxu0 0.0
    %1789 = vmatprep.subr.mxu0 0.0
    %1790 = vmatpush1.msra.mxu0 0.0
    %1791 = vmatprep.subr.mxu0 0.0
    %1792 = vmatpush1.msra.mxu0 0.0
    %1793 = vmatprep.subr.mxu0 0.0
    %1794 = vmatpush1.msra.mxu0 0.0
    %1795 = vmatprep.subr.mxu0 0.0
    %1796 = vmatpush1.msra.mxu0 0.0
    %1797 = vmatprep.subr.mxu0 0.0
    %1798 = vmatpush1.msra.mxu0 0.0
    %1799 = vmatprep.subr.mxu0 0.0
    %1800 = vmatpush1.msra.mxu0 0.0
    %1801 = vmatprep.subr.mxu0 0.0
    %1802 = vmatpush1.msra.mxu0 0.0
    %1803 = vmatprep.subr.mxu0 0.0
    %1804 = vmatpush1.msra.mxu0 0.0
    %1805 = vmatprep.subr.mxu0 0.0
    %1806 = vmatpush1.msra.mxu0 0.0
    %1807 = vmatprep.subr.mxu0 0.0
    %1808 = vmatpush1.msra.mxu0 0.0
    %1809 = vmatprep.subr.mxu0 0.0
    %1810 = vmatpush1.msra.mxu0 0.0
    %1811 = vmatprep.subr.mxu0 0.0
    %1812 = vmatpush1.msra.mxu0 0.0
    %1813 = vmatprep.subr.mxu0 0.0
    %1814 = vmatpush1.msra.mxu0 0.0
    %1815 = vmatprep.subr.mxu0 0.0
    %1816 = vmatpush1.msra.mxu0 0.0
    %1817 = vmatprep.subr.mxu0 0.0
    %1818 = vmatpush1.msra.mxu0 0.0
    %1819 = vmatprep.subr.mxu0 0.0
    %1820 = vmatpush1.msra.mxu0 0.0
    %1821 = vmatprep.subr.mxu0 0.0
    %1822 = vmatpush1.msra.mxu0 0.0
    %1823 = vmatprep.subr.mxu0 0.0
    %1824 = vmatpush1.msra.mxu0 0.0
    %1825 = vmatprep.subr.mxu0 0.0
    %1826 = vmatpush1.msra.mxu0 0.0
    %1827 = vmatprep.subr.mxu0 0.0
    %1828 = vmatpush1.msra.mxu0 0.0
    %1829 = vmatprep.subr.mxu0 0.0
    %1830 = vmatpush1.msra.mxu0 0.0
    %1831 = vmatprep.subr.mxu0 0.0
    %1832 = vmatpush1.msra.mxu0 0.0
    %1833 = vmatprep.subr.mxu0 0.0
    %1834 = vmatpush1.msra.mxu0 0.0
    %1835 = vmatprep.subr.mxu0 0.0
    %1836 = vmatpush1.msra.mxu0 0.0
    %1837 = vmatprep.mubr.f32.mxu0 0.0
    %1838 = vmatmul.mubr.f32.gmra.mrb[0].mxu0 %v1768
    %v1839 = vpop.f32.mrb[0].mxu0
    %v1840 = vadd.f32 %v1766, %v1839
    %v1841 = vpop.f32.mrb[0].mxu0
    %1842 = vmatprep.mubr.f32.mxu0 0.0
    %1843 = vmatmul.mubr.f32.gmra.mrb[0].mxu0 %v1771
    %v1844 = vpop.f32.mrb[0].mxu0
    %v1845 = vadd.f32 %v1766, %v1844
    %v1846 = vpop.f32.mrb[0].mxu0
    %1847 = vdwg.mxu0
    %v1848 = vadd.f32 %v98, %v1840
    %v1849 = vadd.f32 %v99, %v1845
    %v1850 = vsel %vm108, %v1848, 0.0
    %1851 = vadd.xlane.f32.xlu0 %v1850
    %v1852 = vpop.xlane.xlu0 %1851
    %v1853 = vsel %vm108, %v1849, 0.0
    %1854 = vadd.xlane.f32.xlu0 %v1853
    %v1855 = vpop.xlane.xlu0 %1854
    %v1856 = vmul.f32 %v1852, %v115
    %v1857 = vmul.f32 %v1855, %v115
    %v1858 = vsub.f32 %v1848, %v1856
    %v1859 = vsub.f32 %v1849, %v1857
    %v1860 = vmul.f32 %v1858, %v1858
    %v1861 = vmul.f32 %v1859, %v1859
    %v1862 = vsel %vm108, %v1860, 0.0
    %1863 = vadd.xlane.f32.xlu0 %v1862
    %v1864 = vpop.xlane.xlu0 %1863
    %v1865 = vsel %vm108, %v1861, 0.0
    %1866 = vadd.xlane.f32.xlu0 %v1865
    %v1867 = vpop.xlane.xlu0 %1866
    %v1868 = vmul.f32 %v1864, %v115
    %v1869 = vmul.f32 %v1867, %v115
    %v1870 = vadd.f32 %v1868, 1e-06
    %v1871 = vadd.f32 %v1869, 1e-06
    %v1872 = vrsqrt.pop %v1870
    %v1873 = vrsqrt.pop %v1871
    %v1874 = vmul.f32 %v1858, %v1872
    %v1875 = vmul.f32 %v1859, %v1873
    %v1876 = vld [vmem:[#allocation10 + $0x2] sm:$0x1]
    %v1877 = vlaneseq
    %v1878 = vshrl.u32 %v1877, 7
    %v1879 = vsub.s32 0, %v1878
    %v1880 = vrot.slane %v1876, %v1879
    %v1881 = vmul.f32 %v1874, %v1880
    %v1882 = vmul.f32 %v1875, %v1880
    %v1883 = vld [vmem:[#allocation10 + $0x3] sm:$0x1]
    %v1884 = vlaneseq
    %v1885 = vshrl.u32 %v1884, 7
    %v1886 = vsub.s32 0, %v1885
    %v1887 = vrot.slane %v1883, %v1886
    %v1888 = vadd.f32 %v1881, %v1887
    %v1889 = vadd.f32 %v1882, %v1887
    %s1890 = scalar_lea.vmem [#allocation8], 128
    %v1891 = vld [vmem:[%s1890] sm:$0xff]
    %v1892 = vld [vmem:[%s1890 + $0x8] sm:$0xff]
    %v1893 = vld [vmem:[%s1890 + $0x10] sm:$0xff]
    %v1894 = vld [vmem:[%s1890 + $0x18] sm:$0xff]
    %s1895 = scalar_lea.vmem [#allocation8], 160
    %v1896 = vld [vmem:[%s1895] sm:$0xff]
    %v1897 = vld [vmem:[%s1895 + $0x8] sm:$0xff]
    %v1898 = vld [vmem:[%s1895 + $0x10] sm:$0xff]
    %v1899 = vld [vmem:[%s1895 + $0x18] sm:$0xff]
    %s1900 = scalar_lea.vmem [#allocation8], 192
    %v1901 = vld [vmem:[%s1900] sm:$0xff]
    %v1902 = vld [vmem:[%s1900 + $0x8] sm:$0xff]
    %v1903 = vld [vmem:[%s1900 + $0x10] sm:$0xff]
    %v1904 = vld [vmem:[%s1900 + $0x18] sm:$0xff]
    %s1905 = scalar_lea.vmem [#allocation8], 224
    %v1906 = vld [vmem:[%s1905] sm:$0xff]
    %v1907 = vld [vmem:[%s1905 + $0x8] sm:$0xff]
    %v1908 = vld [vmem:[%s1905 + $0x10] sm:$0xff]
    %v1909 = vld [vmem:[%s1905 + $0x18] sm:$0xff]
    %v1914 = vcombine.high %v100, %v100
    %v1916 = vunpack.c.l.s4 1983009808
    %v1917 = vunpack.c.0.s8 %v1916
    %v1918 = vlaneseq
    %v1919 = vshrl.u32 %v1918, 7
    %v1920 = vsub.s32 %v1917, %v1919
    %v1921 = vrot.slane %v100, %v1920
    %v1923 = vunpack.c.l.s4 1983009808
    %v1924 = vunpack.c.0.s8 %v1923
    %v1925 = vlaneseq
    %v1926 = vshrl.u32 %v1925, 7
    %v1927 = vsub.s32 %v1924, %v1926
    %v1928 = vrot.slane %v1914, %v1927
    %v1929 = vcombine.high %v1921, %v1921
    %v1930 = vcombine.high %v1928, %v1928
    %v1932 = vunpack.c.l.s4 1983009808
    %v1933 = vunpack.c.0.s8 %v1932
    %v1934 = vlaneseq
    %v1935 = vshrl.u32 %v1934, 7
    %v1936 = vsub.s32 %v1933, %v1935
    %v1937 = vrot.slane %v101, %v1936
    %v1938 = vcombine.high %v102, %v102
    %v1940 = vunpack.c.l.s4 1983009808
    %v1941 = vunpack.c.0.s8 %v1940
    %v1942 = vlaneseq
    %v1943 = vshrl.u32 %v1942, 7
    %v1944 = vsub.s32 %v1941, %v1943
    %v1945 = vrot.slane %v102, %v1944
    %v1947 = vunpack.c.l.s4 1983009808
    %v1948 = vunpack.c.0.s8 %v1947
    %v1949 = vlaneseq
    %v1950 = vshrl.u32 %v1949, 7
    %v1951 = vsub.s32 %v1948, %v1950
    %v1952 = vrot.slane %v1938, %v1951
    %v1953 = vcombine.high %v1945, %v1945
    %v1954 = vcombine.high %v1952, %v1952
    %v1956 = vunpack.c.l.s4 1983009808
    %v1957 = vunpack.c.0.s8 %v1956
    %v1958 = vlaneseq
    %v1959 = vshrl.u32 %v1958, 7
    %v1960 = vsub.s32 %v1957, %v1959
    %v1961 = vrot.slane %v103, %v1960
    %v1962 = vld [vmem:[#allocation10 + $0xa] sm:$0x1]
    %v1963 = vlaneseq
    %v1964 = vshrl.u32 %v1963, 7
    %v1965 = vsub.s32 0, %v1964
    %v1966 = vrot.slane %v1962, %v1965
    %v1968 = vsel %vm108, %v1888, 0
    %v1971 = vsel %vm108, %v1889, 0
    %1973 = vmatprep.subr.mxu0 0.0
    %1974 = vmatpush1.msra.mxu0 %v1891
    %1975 = vmatprep.subr.mxu0 0.0
    %1976 = vmatpush1.msra.mxu0 %v1892
    %1977 = vmatprep.subr.mxu0 0.0
    %1978 = vmatpush1.msra.mxu0 %v1893
    %1979 = vmatprep.subr.mxu0 0.0
    %1980 = vmatpush1.msra.mxu0 %v1894
    %1981 = vmatprep.subr.mxu0 0.0
    %1982 = vmatpush1.msra.mxu0 0.0
    %1983 = vmatprep.subr.mxu0 0.0
    %1984 = vmatpush1.msra.mxu0 0.0
    %1985 = vmatprep.subr.mxu0 0.0
    %1986 = vmatpush1.msra.mxu0 0.0
    %1987 = vmatprep.subr.mxu0 0.0
    %1988 = vmatpush1.msra.mxu0 0.0
    %1989 = vmatprep.subr.mxu0 0.0
    %1990 = vmatpush1.msra.mxu0 0.0
    %1991 = vmatprep.subr.mxu0 0.0
    %1992 = vmatpush1.msra.mxu0 0.0
    %1993 = vmatprep.subr.mxu0 0.0
    %1994 = vmatpush1.msra.mxu0 0.0
    %1995 = vmatprep.subr.mxu0 0.0
    %1996 = vmatpush1.msra.mxu0 0.0
    %1997 = vmatprep.subr.mxu0 0.0
    %1998 = vmatpush1.msra.mxu0 0.0
    %1999 = vmatprep.subr.mxu0 0.0
    %2000 = vmatpush1.msra.mxu0 0.0
    %2001 = vmatprep.subr.mxu0 0.0
    %2002 = vmatpush1.msra.mxu0 0.0
    %2003 = vmatprep.subr.mxu0 0.0
    %2004 = vmatpush1.msra.mxu0 0.0
    %2005 = vmatprep.subr.mxu0 0.0
    %2006 = vmatpush1.msra.mxu0 0.0
    %2007 = vmatprep.subr.mxu0 0.0
    %2008 = vmatpush1.msra.mxu0 0.0
    %2009 = vmatprep.subr.mxu0 0.0
    %2010 = vmatpush1.msra.mxu0 0.0
    %2011 = vmatprep.subr.mxu0 0.0
    %2012 = vmatpush1.msra.mxu0 0.0
    %2013 = vmatprep.subr.mxu0 0.0
    %2014 = vmatpush1.msra.mxu0 0.0
    %2015 = vmatprep.subr.mxu0 0.0
    %2016 = vmatpush1.msra.mxu0 0.0
    %2017 = vmatprep.subr.mxu0 0.0
    %2018 = vmatpush1.msra.mxu0 0.0
    %2019 = vmatprep.subr.mxu0 0.0
    %2020 = vmatpush1.msra.mxu0 0.0
    %2021 = vmatprep.subr.mxu0 0.0
    %2022 = vmatpush1.msra.mxu0 0.0
    %2023 = vmatprep.subr.mxu0 0.0
    %2024 = vmatpush1.msra.mxu0 0.0
    %2025 = vmatprep.subr.mxu0 0.0
    %2026 = vmatpush1.msra.mxu0 0.0
    %2027 = vmatprep.subr.mxu0 0.0
    %2028 = vmatpush1.msra.mxu0 0.0
    %2029 = vmatprep.subr.mxu0 0.0
    %2030 = vmatpush1.msra.mxu0 0.0
    %2031 = vmatprep.subr.mxu0 0.0
    %2032 = vmatpush1.msra.mxu0 0.0
    %2033 = vmatprep.subr.mxu0 0.0
    %2034 = vmatpush1.msra.mxu0 0.0
    %2035 = vmatprep.subr.mxu0 0.0
    %2036 = vmatpush1.msra.mxu0 0.0
    %2037 = vmatprep.mubr.f32.mxu0 0.0
    %2038 = vmatmul.mubr.f32.gmra.mrb[0].mxu0 %v1968
    %v2039 = vpop.f32.mrb[0].mxu0
    %v2040 = vadd.f32 %v1966, %v2039
    %v2041 = vpop.f32.mrb[0].mxu0
    %2042 = vmatprep.mubr.f32.mxu0 0.0
    %2043 = vmatmul.mubr.f32.gmra.mrb[0].mxu0 %v1971
    %v2044 = vpop.f32.mrb[0].mxu0
    %v2045 = vadd.f32 %v1966, %v2044
    %v2046 = vpop.f32.mrb[0].mxu0
    %2047 = vdwg.mxu0
    %v2048 = vmul.f32 %v2040, 0.35355338
    %v2049 = vmul.f32 %v2045, 0.35355338
    %v2050 = vld [vmem:[#allocation10 + $0xb] sm:$0x1]
    %v2051 = vlaneseq
    %v2052 = vshrl.u32 %v2051, 7
    %v2053 = vsub.s32 0, %v2052
    %v2054 = vrot.slane %v2050, %v2053
    %v2055 = vcombine.low %v1921, %v1929
    %v2056 = vcombine.low %v1928, %v1930
    %v2058 = vunpack.c.l.s4 1983009808
    %v2059 = vunpack.c.0.s8 %v2058
    %v2060 = vlaneseq
    %v2061 = vshrl.u32 %v2060, 7
    %v2062 = vsub.s32 %v2059, %v2061
    %v2063 = vrot.slane %v2055, %v2062
    %v2065 = vunpack.c.l.s4 1983009808
    %v2066 = vunpack.c.0.s8 %v2065
    %v2067 = vlaneseq
    %v2068 = vshrl.u32 %v2067, 7
    %v2069 = vsub.s32 %v2066, %v2068
    %v2070 = vrot.slane %v2056, %v2069
    %v2071 = vcombine.low %v2063, %v2070
    %v2072 = vcombine.low %v1937, %v1945
    %v2073 = vcombine.low %v1953, %v1952
    %v2075 = vunpack.c.l.s4 1983009808
    %v2076 = vunpack.c.0.s8 %v2075
    %v2077 = vlaneseq
    %v2078 = vshrl.u32 %v2077, 7
    %v2079 = vsub.s32 %v2076, %v2078
    %v2080 = vrot.slane %v2072, %v2079
    %v2082 = vunpack.c.l.s4 1983009808
    %v2083 = vunpack.c.0.s8 %v2082
    %v2084 = vlaneseq
    %v2085 = vshrl.u32 %v2084, 7
    %v2086 = vsub.s32 %v2083, %v2085
    %v2087 = vrot.slane %v2073, %v2086
    %v2088 = vcombine.low %v2080, %v2087
    %v2089 = vcombine.low %v1954, %v1961
    %v2091 = vunpack.c.l.s4 1983009808
    %v2092 = vunpack.c.0.s8 %v2091
    %v2093 = vlaneseq
    %v2094 = vshrl.u32 %v2093, 7
    %v2095 = vsub.s32 %v2092, %v2094
    %v2096 = vrot.slane %v2089, %v2095
    %v2097 = vsel %vm108, %v2071, 0
    %v2099 = vsel %vm108, %v2088, 0
    %v2101 = vsel %vm108, %v2096, 0
    %2103 = vmatprep.subr.mxu0 0.0
    %2104 = vmatpush1.msra.mxu0 %v1896
    %2105 = vmatprep.subr.mxu0 0.0
    %2106 = vmatpush1.msra.mxu0 %v1897
    %2107 = vmatprep.subr.mxu0 0.0
    %2108 = vmatpush1.msra.mxu0 %v1898
    %2109 = vmatprep.subr.mxu0 0.0
    %2110 = vmatpush1.msra.mxu0 %v1899
    %2111 = vmatprep.subr.mxu0 0.0
    %2112 = vmatpush1.msra.mxu0 0.0
    %2113 = vmatprep.subr.mxu0 0.0
    %2114 = vmatpush1.msra.mxu0 0.0
    %2115 = vmatprep.subr.mxu0 0.0
    %2116 = vmatpush1.msra.mxu0 0.0
    %2117 = vmatprep.subr.mxu0 0.0
    %2118 = vmatpush1.msra.mxu0 0.0
    %2119 = vmatprep.subr.mxu0 0.0
    %2120 = vmatpush1.msra.mxu0 0.0
    %2121 = vmatprep.subr.mxu0 0.0
    %2122 = vmatpush1.msra.mxu0 0.0
    %2123 = vmatprep.subr.mxu0 0.0
    %2124 = vmatpush1.msra.mxu0 0.0
    %2125 = vmatprep.subr.mxu0 0.0
    %2126 = vmatpush1.msra.mxu0 0.0
    %2127 = vmatprep.subr.mxu0 0.0
    %2128 = vmatpush1.msra.mxu0 0.0
    %2129 = vmatprep.subr.mxu0 0.0
    %2130 = vmatpush1.msra.mxu0 0.0
    %2131 = vmatprep.subr.mxu0 0.0
    %2132 = vmatpush1.msra.mxu0 0.0
    %2133 = vmatprep.subr.mxu0 0.0
    %2134 = vmatpush1.msra.mxu0 0.0
    %2135 = vmatprep.subr.mxu0 0.0
    %2136 = vmatpush1.msra.mxu0 0.0
    %2137 = vmatprep.subr.mxu0 0.0
    %2138 = vmatpush1.msra.mxu0 0.0
    %2139 = vmatprep.subr.mxu0 0.0
    %2140 = vmatpush1.msra.mxu0 0.0
    %2141 = vmatprep.subr.mxu0 0.0
    %2142 = vmatpush1.msra.mxu0 0.0
    %2143 = vmatprep.subr.mxu0 0.0
    %2144 = vmatpush1.msra.mxu0 0.0
    %2145 = vmatprep.subr.mxu0 0.0
    %2146 = vmatpush1.msra.mxu0 0.0
    %2147 = vmatprep.subr.mxu0 0.0
    %2148 = vmatpush1.msra.mxu0 0.0
    %2149 = vmatprep.subr.mxu0 0.0
    %2150 = vmatpush1.msra.mxu0 0.0
    %2151 = vmatprep.subr.mxu0 0.0
    %2152 = vmatpush1.msra.mxu0 0.0
    %2153 = vmatprep.subr.mxu0 0.0
    %2154 = vmatpush1.msra.mxu0 0.0
    %2155 = vmatprep.subr.mxu0 0.0
    %2156 = vmatpush1.msra.mxu0 0.0
    %2157 = vmatprep.subr.mxu0 0.0
    %2158 = vmatpush1.msra.mxu0 0.0
    %2159 = vmatprep.subr.mxu0 0.0
    %2160 = vmatpush1.msra.mxu0 0.0
    %2161 = vmatprep.subr.mxu0 0.0
    %2162 = vmatpush1.msra.mxu0 0.0
    %2163 = vmatprep.subr.mxu0 0.0
    %2164 = vmatpush1.msra.mxu0 0.0
    %2165 = vmatprep.subr.mxu0 0.0
    %2166 = vmatpush1.msra.mxu0 0.0
    %2167 = vmatprep.mubr.f32.mxu0 0.0
    %2168 = vmatmul.mubr.f32.gmra.mrb[0].mxu0 %v2097
    %v2169 = vpop.f32.mrb[0].mxu0
    %v2170 = vadd.f32 %v2054, %v2169
    %v2171 = vpop.f32.mrb[0].mxu0
    %2172 = vmatprep.mubr.f32.mxu0 0.0
    %2173 = vmatmul.mubr.f32.gmra.mrb[0].mxu0 %v2099
    %v2174 = vpop.f32.mrb[0].mxu0
    %v2175 = vadd.f32 %v2054, %v2174
    %v2176 = vpop.f32.mrb[0].mxu0
    %2177 = vmatprep.mubr.f32.mxu0 0.0
    %2178 = vmatmul.mubr.f32.gmra.mrb[0].mxu0 %v2101
    %v2179 = vpop.f32.mrb[0].mxu0
    %v2180 = vadd.f32 %v2054, %v2179
    %v2181 = vpop.f32.mrb[0].mxu0
    %2182 = vdwg.mxu0
    %v2183 = vld [vmem:[#allocation10 + $0xc] sm:$0x1]
    %v2184 = vlaneseq
    %v2185 = vshrl.u32 %v2184, 7
    %v2186 = vsub.s32 0, %v2185
    %v2187 = vrot.slane %v2183, %v2186
    %2188 = vmatprep.subr.mxu0 0.0
    %2189 = vmatpush1.msra.mxu0 %v1901
    %2190 = vmatprep.subr.mxu0 0.0
    %2191 = vmatpush1.msra.mxu0 %v1902
    %2192 = vmatprep.subr.mxu0 0.0
    %2193 = vmatpush1.msra.mxu0 %v1903
    %2194 = vmatprep.subr.mxu0 0.0
    %2195 = vmatpush1.msra.mxu0 %v1904
    %2196 = vmatprep.subr.mxu0 0.0
    %2197 = vmatpush1.msra.mxu0 0.0
    %2198 = vmatprep.subr.mxu0 0.0
    %2199 = vmatpush1.msra.mxu0 0.0
    %2200 = vmatprep.subr.mxu0 0.0
    %2201 = vmatpush1.msra.mxu0 0.0
    %2202 = vmatprep.subr.mxu0 0.0
    %2203 = vmatpush1.msra.mxu0 0.0
    %2204 = vmatprep.subr.mxu0 0.0
    %2205 = vmatpush1.msra.mxu0 0.0
    %2206 = vmatprep.subr.mxu0 0.0
    %2207 = vmatpush1.msra.mxu0 0.0
    %2208 = vmatprep.subr.mxu0 0.0
    %2209 = vmatpush1.msra.mxu0 0.0
    %2210 = vmatprep.subr.mxu0 0.0
    %2211 = vmatpush1.msra.mxu0 0.0
    %2212 = vmatprep.subr.mxu0 0.0
    %2213 = vmatpush1.msra.mxu0 0.0
    %2214 = vmatprep.subr.mxu0 0.0
    %2215 = vmatpush1.msra.mxu0 0.0
    %2216 = vmatprep.subr.mxu0 0.0
    %2217 = vmatpush1.msra.mxu0 0.0
    %2218 = vmatprep.subr.mxu0 0.0
    %2219 = vmatpush1.msra.mxu0 0.0
    %2220 = vmatprep.subr.mxu0 0.0
    %2221 = vmatpush1.msra.mxu0 0.0
    %2222 = vmatprep.subr.mxu0 0.0
    %2223 = vmatpush1.msra.mxu0 0.0
    %2224 = vmatprep.subr.mxu0 0.0
    %2225 = vmatpush1.msra.mxu0 0.0
    %2226 = vmatprep.subr.mxu0 0.0
    %2227 = vmatpush1.msra.mxu0 0.0
    %2228 = vmatprep.subr.mxu0 0.0
    %2229 = vmatpush1.msra.mxu0 0.0
    %2230 = vmatprep.subr.mxu0 0.0
    %2231 = vmatpush1.msra.mxu0 0.0
    %2232 = vmatprep.subr.mxu0 0.0
    %2233 = vmatpush1.msra.mxu0 0.0
    %2234 = vmatprep.subr.mxu0 0.0
    %2235 = vmatpush1.msra.mxu0 0.0
    %2236 = vmatprep.subr.mxu0 0.0
    %2237 = vmatpush1.msra.mxu0 0.0
    %2238 = vmatprep.subr.mxu0 0.0
    %2239 = vmatpush1.msra.mxu0 0.0
    %2240 = vmatprep.subr.mxu0 0.0
    %2241 = vmatpush1.msra.mxu0 0.0
    %2242 = vmatprep.subr.mxu0 0.0
    %2243 = vmatpush1.msra.mxu0 0.0
    %2244 = vmatprep.subr.mxu0 0.0
    %2245 = vmatpush1.msra.mxu0 0.0
    %2246 = vmatprep.subr.mxu0 0.0
    %2247 = vmatpush1.msra.mxu0 0.0
    %2248 = vmatprep.subr.mxu0 0.0
    %2249 = vmatpush1.msra.mxu0 0.0
    %2250 = vmatprep.subr.mxu0 0.0
    %2251 = vmatpush1.msra.mxu0 0.0
    %2252 = vmatprep.mubr.f32.mxu0 0.0
    %2253 = vmatmul.mubr.f32.gmra.mrb[0].mxu0 %v2097
    %v2254 = vpop.f32.mrb[0].mxu0
    %v2255 = vadd.f32 %v2187, %v2254
    %v2256 = vpop.f32.mrb[0].mxu0
    %2257 = vmatprep.mubr.f32.mxu0 0.0
    %2258 = vmatmul.mubr.f32.gmra.mrb[0].mxu0 %v2099
    %v2259 = vpop.f32.mrb[0].mxu0
    %v2260 = vadd.f32 %v2187, %v2259
    %v2261 = vpop.f32.mrb[0].mxu0
    %2262 = vmatprep.mubr.f32.mxu0 0.0
    %2263 = vmatmul.mubr.f32.gmra.mrb[0].mxu0 %v2101
    %v2264 = vpop.f32.mrb[0].mxu0
    %v2265 = vadd.f32 %v2187, %v2264
    %v2266 = vpop.f32.mrb[0].mxu0
    %2267 = vdwg.mxu0
    %v2271 = vcombine.high %v2170, %v2170
    %v2273 = vunpack.c.l.s4 1983009808
    %v2274 = vunpack.c.0.s8 %v2273
    %v2275 = vlaneseq
    %v2276 = vshrl.u32 %v2275, 7
    %v2277 = vsub.s32 %v2274, %v2276
    %v2278 = vrot.slane %v2170, %v2277
    %v2280 = vunpack.c.l.s4 1983009808
    %v2281 = vunpack.c.0.s8 %v2280
    %v2282 = vlaneseq
    %v2283 = vshrl.u32 %v2282, 7
    %v2284 = vsub.s32 %v2281, %v2283
    %v2285 = vrot.slane %v2271, %v2284
    %v2286 = vcombine.high %v2278, %v2278
    %v2287 = vcombine.high %v2285, %v2285
    %v2288 = vcombine.high %v2175, %v2175
    %v2290 = vunpack.c.l.s4 1983009808
    %v2291 = vunpack.c.0.s8 %v2290
    %v2292 = vlaneseq
    %v2293 = vshrl.u32 %v2292, 7
    %v2294 = vsub.s32 %v2291, %v2293
    %v2295 = vrot.slane %v2175, %v2294
    %v2297 = vunpack.c.l.s4 1983009808
    %v2298 = vunpack.c.0.s8 %v2297
    %v2299 = vlaneseq
    %v2300 = vshrl.u32 %v2299, 7
    %v2301 = vsub.s32 %v2298, %v2300
    %v2302 = vrot.slane %v2288, %v2301
    %v2303 = vcombine.high %v2295, %v2295
    %v2304 = vcombine.high %v2302, %v2302
    %v2306 = vunpack.c.l.s4 1983009808
    %v2307 = vunpack.c.0.s8 %v2306
    %v2308 = vlaneseq
    %v2309 = vshrl.u32 %v2308, 7
    %v2310 = vsub.s32 %v2307, %v2309
    %v2311 = vrot.slane %v2180, %v2310
    %v2312 = vcombine.high %v2311, %v2311
    %v2316 = vcombine.high %v2255, %v2255
    %v2318 = vunpack.c.l.s4 1983009808
    %v2319 = vunpack.c.0.s8 %v2318
    %v2320 = vlaneseq
    %v2321 = vshrl.u32 %v2320, 7
    %v2322 = vsub.s32 %v2319, %v2321
    %v2323 = vrot.slane %v2255, %v2322
    %v2325 = vunpack.c.l.s4 1983009808
    %v2326 = vunpack.c.0.s8 %v2325
    %v2327 = vlaneseq
    %v2328 = vshrl.u32 %v2327, 7
    %v2329 = vsub.s32 %v2326, %v2328
    %v2330 = vrot.slane %v2316, %v2329
    %v2331 = vcombine.high %v2323, %v2323
    %v2332 = vcombine.high %v2330, %v2330
    %v2333 = vcombine.high %v2260, %v2260
    %v2335 = vunpack.c.l.s4 1983009808
    %v2336 = vunpack.c.0.s8 %v2335
    %v2337 = vlaneseq
    %v2338 = vshrl.u32 %v2337, 7
    %v2339 = vsub.s32 %v2336, %v2338
    %v2340 = vrot.slane %v2260, %v2339
    %v2342 = vunpack.c.l.s4 1983009808
    %v2343 = vunpack.c.0.s8 %v2342
    %v2344 = vlaneseq
    %v2345 = vshrl.u32 %v2344, 7
    %v2346 = vsub.s32 %v2343, %v2345
    %v2347 = vrot.slane %v2333, %v2346
    %v2348 = vcombine.high %v2340, %v2340
    %v2349 = vcombine.high %v2347, %v2347
    %v2351 = vunpack.c.l.s4 1983009808
    %v2352 = vunpack.c.0.s8 %v2351
    %v2353 = vlaneseq
    %v2354 = vshrl.u32 %v2353, 7
    %v2355 = vsub.s32 %v2352, %v2354
    %v2356 = vrot.slane %v2265, %v2355
    %v2357 = vcombine.high %v2356, %v2356
    %v2358 = vcombine.low %v2278, %v2286
    %v2359 = vcombine.low %v2285, %v2287
    %v2361 = vunpack.c.l.s4 1983009808
    %v2362 = vunpack.c.0.s8 %v2361
    %v2363 = vlaneseq
    %v2364 = vshrl.u32 %v2363, 7
    %v2365 = vsub.s32 %v2362, %v2364
    %v2366 = vrot.slane %v2358, %v2365
    %v2368 = vunpack.c.l.s4 1983009808
    %v2369 = vunpack.c.0.s8 %v2368
    %v2370 = vlaneseq
    %v2371 = vshrl.u32 %v2370, 7
    %v2372 = vsub.s32 %v2369, %v2371
    %v2373 = vrot.slane %v2359, %v2372
    %v2374 = vcombine.low %v2366, %v2373
    %v2376 = vunpack.c.l.s4 1983009808
    %v2377 = vunpack.c.0.s8 %v2376
    %v2378 = vlaneseq
    %v2379 = vshrl.u32 %v2378, 7
    %v2380 = vsub.s32 %v2377, %v2379
    %v2381 = vrot.slane %v2295, %v2380
    %v2383 = vsel %vm417, %v2048, 0
    %v2385 = vsel %vm417, %v2374, 0
    %v2387 = vsel %vm417, %v2381, 0
    %2389 = vmatprep.subr.mxu0 0.0
    %2390 = vmatpush1.xpose.msra.mxu0 %v2385
    %2391 = vmatprep.subr.mxu0 0.0
    %2392 = vmatpush1.xpose.msra.mxu0 %v2387
    %2393 = vmatprep.subr.mxu0 0.0
    %2394 = vmatpush1.xpose.msra.mxu0 0.0
    %2395 = vmatprep.subr.mxu0 0.0
    %2396 = vmatpush1.xpose.msra.mxu0 0.0
    %2397 = vmatprep.subr.mxu0 0.0
    %2398 = vmatpush1.xpose.msra.mxu0 0.0
    %2399 = vmatprep.subr.mxu0 0.0
    %2400 = vmatpush1.xpose.msra.mxu0 0.0
    %2401 = vmatprep.subr.mxu0 0.0
    %2402 = vmatpush1.xpose.msra.mxu0 0.0
    %2403 = vmatprep.subr.mxu0 0.0
    %2404 = vmatpush1.xpose.msra.mxu0 0.0
    %2405 = vmatprep.subr.mxu0 0.0
    %2406 = vmatpush1.xpose.msra.mxu0 0.0
    %2407 = vmatprep.subr.mxu0 0.0
    %2408 = vmatpush1.xpose.msra.mxu0 0.0
    %2409 = vmatprep.subr.mxu0 0.0
    %2410 = vmatpush1.xpose.msra.mxu0 0.0
    %2411 = vmatprep.subr.mxu0 0.0
    %2412 = vmatpush1.xpose.msra.mxu0 0.0
    %2413 = vmatprep.subr.mxu0 0.0
    %2414 = vmatpush1.xpose.msra.mxu0 0.0
    %2415 = vmatprep.subr.mxu0 0.0
    %2416 = vmatpush1.xpose.msra.mxu0 0.0
    %2417 = vmatprep.subr.mxu0 0.0
    %2418 = vmatpush1.xpose.msra.mxu0 0.0
    %2419 = vmatprep.subr.mxu0 0.0
    %2420 = vmatpush1.xpose.msra.mxu0 0.0
    %2421 = vmatprep.subr.mxu0 0.0
    %2422 = vmatpush1.xpose.msra.mxu0 0.0
    %2423 = vmatprep.subr.mxu0 0.0
    %2424 = vmatpush1.xpose.msra.mxu0 0.0
    %2425 = vmatprep.subr.mxu0 0.0
    %2426 = vmatpush1.xpose.msra.mxu0 0.0
    %2427 = vmatprep.subr.mxu0 0.0
    %2428 = vmatpush1.xpose.msra.mxu0 0.0
    %2429 = vmatprep.subr.mxu0 0.0
    %2430 = vmatpush1.xpose.msra.mxu0 0.0
    %2431 = vmatprep.subr.mxu0 0.0
    %2432 = vmatpush1.xpose.msra.mxu0 0.0
    %2433 = vmatprep.subr.mxu0 0.0
    %2434 = vmatpush1.xpose.msra.mxu0 0.0
    %2435 = vmatprep.subr.mxu0 0.0
    %2436 = vmatpush1.xpose.msra.mxu0 0.0
    %2437 = vmatprep.subr.mxu0 0.0
    %2438 = vmatpush1.xpose.msra.mxu0 0.0
    %2439 = vmatprep.subr.mxu0 0.0
    %2440 = vmatpush1.xpose.msra.mxu0 0.0
    %2441 = vmatprep.subr.mxu0 0.0
    %2442 = vmatpush1.xpose.msra.mxu0 0.0
    %2443 = vmatprep.subr.mxu0 0.0
    %2444 = vmatpush1.xpose.msra.mxu0 0.0
    %2445 = vmatprep.subr.mxu0 0.0
    %2446 = vmatpush1.xpose.msra.mxu0 0.0
    %2447 = vmatprep.subr.mxu0 0.0
    %2448 = vmatpush1.xpose.msra.mxu0 0.0
    %2449 = vmatprep.subr.mxu0 0.0
    %2450 = vmatpush1.xpose.msra.mxu0 0.0
    %2451 = vmatprep.subr.mxu0 0.0
    %2452 = vmatpush1.xpose.msra.mxu0 0.0
    %2453 = vmatprep.mubr.f32.mxu0 0.0
    %2454 = vmatmul.mubr.f32.gmra.mrb[0].mxu0 %v2383
    %v2455 = vpop.f32.mrb[0].mxu0
    %v2456 = vadd.f32 %v106, %v2455
    %v2457 = vpop.f32.mrb[0].mxu0
    %2458 = vdwg.mxu0
    %v2459 = vcombine.low %v2303, %v2302
    %v2460 = vcombine.low %v2304, %v2311
    %v2462 = vunpack.c.l.s4 1983009808
    %v2463 = vunpack.c.0.s8 %v2462
    %v2464 = vlaneseq
    %v2465 = vshrl.u32 %v2464, 7
    %v2466 = vsub.s32 %v2463, %v2465
    %v2467 = vrot.slane %v2459, %v2466
    %v2469 = vunpack.c.l.s4 1983009808
    %v2470 = vunpack.c.0.s8 %v2469
    %v2471 = vlaneseq
    %v2472 = vshrl.u32 %v2471, 7
    %v2473 = vsub.s32 %v2470, %v2472
    %v2474 = vrot.slane %v2460, %v2473
    %v2475 = vcombine.low %v2467, %v2474
    %v2477 = vunpack.c.l.s4 1983009808
    %v2478 = vunpack.c.0.s8 %v2477
    %v2479 = vlaneseq
    %v2480 = vshrl.u32 %v2479, 7
    %v2481 = vsub.s32 %v2478, %v2480
    %v2482 = vrot.slane %v2312, %v2481
    %v2484 = vsel %vm417, %v2049, 0
    %v2486 = vsel %vm417, %v2475, 0
    %v2488 = vsel %vm417, %v2482, 0
    %2490 = vmatprep.subr.mxu0 0.0
    %2491 = vmatpush1.xpose.msra.mxu0 %v2486
    %2492 = vmatprep.subr.mxu0 0.0
    %2493 = vmatpush1.xpose.msra.mxu0 %v2488
    %2494 = vmatprep.subr.mxu0 0.0
    %2495 = vmatpush1.xpose.msra.mxu0 0.0
    %2496 = vmatprep.subr.mxu0 0.0
    %2497 = vmatpush1.xpose.msra.mxu0 0.0
    %2498 = vmatprep.subr.mxu0 0.0
    %2499 = vmatpush1.xpose.msra.mxu0 0.0
    %2500 = vmatprep.subr.mxu0 0.0
    %2501 = vmatpush1.xpose.msra.mxu0 0.0
    %2502 = vmatprep.subr.mxu0 0.0
    %2503 = vmatpush1.xpose.msra.mxu0 0.0
    %2504 = vmatprep.subr.mxu0 0.0
    %2505 = vmatpush1.xpose.msra.mxu0 0.0
    %2506 = vmatprep.subr.mxu0 0.0
    %2507 = vmatpush1.xpose.msra.mxu0 0.0
    %2508 = vmatprep.subr.mxu0 0.0
    %2509 = vmatpush1.xpose.msra.mxu0 0.0
    %2510 = vmatprep.subr.mxu0 0.0
    %2511 = vmatpush1.xpose.msra.mxu0 0.0
    %2512 = vmatprep.subr.mxu0 0.0
    %2513 = vmatpush1.xpose.msra.mxu0 0.0
    %2514 = vmatprep.subr.mxu0 0.0
    %2515 = vmatpush1.xpose.msra.mxu0 0.0
    %2516 = vmatprep.subr.mxu0 0.0
    %2517 = vmatpush1.xpose.msra.mxu0 0.0
    %2518 = vmatprep.subr.mxu0 0.0
    %2519 = vmatpush1.xpose.msra.mxu0 0.0
    %2520 = vmatprep.subr.mxu0 0.0
    %2521 = vmatpush1.xpose.msra.mxu0 0.0
    %2522 = vmatprep.subr.mxu0 0.0
    %2523 = vmatpush1.xpose.msra.mxu0 0.0
    %2524 = vmatprep.subr.mxu0 0.0
    %2525 = vmatpush1.xpose.msra.mxu0 0.0
    %2526 = vmatprep.subr.mxu0 0.0
    %2527 = vmatpush1.xpose.msra.mxu0 0.0
    %2528 = vmatprep.subr.mxu0 0.0
    %2529 = vmatpush1.xpose.msra.mxu0 0.0
    %2530 = vmatprep.subr.mxu0 0.0
    %2531 = vmatpush1.xpose.msra.mxu0 0.0
    %2532 = vmatprep.subr.mxu0 0.0
    %2533 = vmatpush1.xpose.msra.mxu0 0.0
    %2534 = vmatprep.subr.mxu0 0.0
    %2535 = vmatpush1.xpose.msra.mxu0 0.0
    %2536 = vmatprep.subr.mxu0 0.0
    %2537 = vmatpush1.xpose.msra.mxu0 0.0
    %2538 = vmatprep.subr.mxu0 0.0
    %2539 = vmatpush1.xpose.msra.mxu0 0.0
    %2540 = vmatprep.subr.mxu0 0.0
    %2541 = vmatpush1.xpose.msra.mxu0 0.0
    %2542 = vmatprep.subr.mxu0 0.0
    %2543 = vmatpush1.xpose.msra.mxu0 0.0
    %2544 = vmatprep.subr.mxu0 0.0
    %2545 = vmatpush1.xpose.msra.mxu0 0.0
    %2546 = vmatprep.subr.mxu0 0.0
    %2547 = vmatpush1.xpose.msra.mxu0 0.0
    %2548 = vmatprep.subr.mxu0 0.0
    %2549 = vmatpush1.xpose.msra.mxu0 0.0
    %2550 = vmatprep.subr.mxu0 0.0
    %2551 = vmatpush1.xpose.msra.mxu0 0.0
    %2552 = vmatprep.subr.mxu0 0.0
    %2553 = vmatpush1.xpose.msra.mxu0 0.0
    %2554 = vmatprep.mubr.f32.mxu0 0.0
    %2555 = vmatmul.mubr.f32.gmra.mrb[0].mxu0 %v2484
    %v2556 = vpop.f32.mrb[0].mxu0
    %v2557 = vadd.f32 %v107, %v2556
    %v2558 = vpop.f32.mrb[0].mxu0
    %2559 = vdwg.mxu0
    %vm2560 = vcmask 80896
    %v2561 = vsel %vm2560, %v2456, -inf
    %2562 = vmax.xlane.f32.xlu0 %v2561
    %v2563 = vpop.xlane.xlu0 %2562
    %v2564 = vsel %vm2560, %v2557, -inf
    %2565 = vmax.xlane.f32.xlu0 %v2564
    %v2566 = vpop.xlane.xlu0 %2565
    %v2567 = vsub.f32 %v2456, %v2563
    %v2568 = vsub.f32 %v2557, %v2566
    %v2569 = vmul.f32 %v2567, 1.442695
    %v2570 = vpow.pop %v2569
    %v2571 = vmul.f32 %v2568, 1.442695
    %v2572 = vpow.pop %v2571
    %v2573 = vsel %vm2560, %v2570, 0.0
    %2574 = vadd.xlane.f32.xlu0 %v2573
    %v2575 = vpop.xlane.xlu0 %2574
    %v2576 = vsel %vm2560, %v2572, 0.0
    %2577 = vadd.xlane.f32.xlu0 %v2576
    %v2578 = vpop.xlane.xlu0 %2577
    %v2579 = vrcp.pop %v2575
    %v2580 = vrcp.pop %v2578
    %v2581 = vmul.f32 %v2570, %v2579
    %v2582 = vmul.f32 %v2572, %v2580
    %v2583 = vcombine.low %v2323, %v2331
    %v2584 = vcombine.low %v2330, %v2332
    %v2586 = vunpack.c.l.s4 1983009808
    %v2587 = vunpack.c.0.s8 %v2586
    %v2588 = vlaneseq
    %v2589 = vshrl.u32 %v2588, 7
    %v2590 = vsub.s32 %v2587, %v2589
    %v2591 = vrot.slane %v2583, %v2590
    %v2593 = vunpack.c.l.s4 1983009808
    %v2594 = vunpack.c.0.s8 %v2593
    %v2595 = vlaneseq
    %v2596 = vshrl.u32 %v2595, 7
    %v2597 = vsub.s32 %v2594, %v2596
    %v2598 = vrot.slane %v2584, %v2597
    %v2599 = vcombine.low %v2591, %v2598
    %v2601 = vunpack.c.l.s4 1983009808
    %v2602 = vunpack.c.0.s8 %v2601
    %v2603 = vlaneseq
    %v2604 = vshrl.u32 %v2603, 7
    %v2605 = vsub.s32 %v2602, %v2604
    %v2606 = vrot.slane %v2340, %v2605
    %v2609 = vsel %vm2560, %v2581, 0
    %vm2611 = vcmask 1041408
    %v2612 = vsel %vm2611, %v2606, 0
    %2614 = vmatprep.subr.mxu0 0.0
    %2615 = vmatpush1.msra.mxu0 %v2599
    %2616 = vmatprep.subr.mxu0 0.0
    %2617 = vmatpush1.msra.mxu0 %v2612
    %2618 = vmatprep.subr.mxu0 0.0
    %2619 = vmatpush1.msra.mxu0 0.0
    %2620 = vmatprep.subr.mxu0 0.0
    %2621 = vmatpush1.msra.mxu0 0.0
    %2622 = vmatprep.subr.mxu0 0.0
    %2623 = vmatpush1.msra.mxu0 0.0
    %2624 = vmatprep.subr.mxu0 0.0
    %2625 = vmatpush1.msra.mxu0 0.0
    %2626 = vmatprep.subr.mxu0 0.0
    %2627 = vmatpush1.msra.mxu0 0.0
    %2628 = vmatprep.subr.mxu0 0.0
    %2629 = vmatpush1.msra.mxu0 0.0
    %2630 = vmatprep.subr.mxu0 0.0
    %2631 = vmatpush1.msra.mxu0 0.0
    %2632 = vmatprep.subr.mxu0 0.0
    %2633 = vmatpush1.msra.mxu0 0.0
    %2634 = vmatprep.subr.mxu0 0.0
    %2635 = vmatpush1.msra.mxu0 0.0
    %2636 = vmatprep.subr.mxu0 0.0
    %2637 = vmatpush1.msra.mxu0 0.0
    %2638 = vmatprep.subr.mxu0 0.0
    %2639 = vmatpush1.msra.mxu0 0.0
    %2640 = vmatprep.subr.mxu0 0.0
    %2641 = vmatpush1.msra.mxu0 0.0
    %2642 = vmatprep.subr.mxu0 0.0
    %2643 = vmatpush1.msra.mxu0 0.0
    %2644 = vmatprep.subr.mxu0 0.0
    %2645 = vmatpush1.msra.mxu0 0.0
    %2646 = vmatprep.subr.mxu0 0.0
    %2647 = vmatpush1.msra.mxu0 0.0
    %2648 = vmatprep.subr.mxu0 0.0
    %2649 = vmatpush1.msra.mxu0 0.0
    %2650 = vmatprep.subr.mxu0 0.0
    %2651 = vmatpush1.msra.mxu0 0.0
    %2652 = vmatprep.subr.mxu0 0.0
    %2653 = vmatpush1.msra.mxu0 0.0
    %2654 = vmatprep.subr.mxu0 0.0
    %2655 = vmatpush1.msra.mxu0 0.0
    %2656 = vmatprep.subr.mxu0 0.0
    %2657 = vmatpush1.msra.mxu0 0.0
    %2658 = vmatprep.subr.mxu0 0.0
    %2659 = vmatpush1.msra.mxu0 0.0
    %2660 = vmatprep.subr.mxu0 0.0
    %2661 = vmatpush1.msra.mxu0 0.0
    %2662 = vmatprep.subr.mxu0 0.0
    %2663 = vmatpush1.msra.mxu0 0.0
    %2664 = vmatprep.subr.mxu0 0.0
    %2665 = vmatpush1.msra.mxu0 0.0
    %2666 = vmatprep.subr.mxu0 0.0
    %2667 = vmatpush1.msra.mxu0 0.0
    %2668 = vmatprep.subr.mxu0 0.0
    %2669 = vmatpush1.msra.mxu0 0.0
    %2670 = vmatprep.subr.mxu0 0.0
    %2671 = vmatpush1.msra.mxu0 0.0
    %2672 = vmatprep.subr.mxu0 0.0
    %2673 = vmatpush1.msra.mxu0 0.0
    %2674 = vmatprep.subr.mxu0 0.0
    %2675 = vmatpush1.msra.mxu0 0.0
    %2676 = vmatprep.subr.mxu0 0.0
    %2677 = vmatpush1.msra.mxu0 0.0
    %2678 = vmatprep.mubr.f32.mxu0 0.0
    %2679 = vmatmul.mubr.f32.gmra.mrb[0].mxu0 %v2609
    %v2680 = vpop.f32.mrb[0].mxu0
    %v2681 = vadd.f32 0.0, %v2680
    %v2682 = vpop.f32.mrb[0].mxu0
    %2683 = vdwg.mxu0
    %v2684 = vcombine.low %v2348, %v2347
    %v2685 = vcombine.low %v2349, %v2356
    %v2687 = vunpack.c.l.s4 1983009808
    %v2688 = vunpack.c.0.s8 %v2687
    %v2689 = vlaneseq
    %v2690 = vshrl.u32 %v2689, 7
    %v2691 = vsub.s32 %v2688, %v2690
    %v2692 = vrot.slane %v2684, %v2691
    %v2694 = vunpack.c.l.s4 1983009808
    %v2695 = vunpack.c.0.s8 %v2694
    %v2696 = vlaneseq
    %v2697 = vshrl.u32 %v2696, 7
    %v2698 = vsub.s32 %v2695, %v2697
    %v2699 = vrot.slane %v2685, %v2698
    %v2700 = vcombine.low %v2692, %v2699
    %v2702 = vunpack.c.l.s4 1983009808
    %v2703 = vunpack.c.0.s8 %v2702
    %v2704 = vlaneseq
    %v2705 = vshrl.u32 %v2704, 7
    %v2706 = vsub.s32 %v2703, %v2705
    %v2707 = vrot.slane %v2357, %v2706
    %v2710 = vsel %vm2560, %v2582, 0
    %v2712 = vsel %vm2611, %v2707, 0
    %2714 = vmatprep.subr.mxu0 0.0
    %2715 = vmatpush1.msra.mxu0 %v2700
    %2716 = vmatprep.subr.mxu0 0.0
    %2717 = vmatpush1.msra.mxu0 %v2712
    %2718 = vmatprep.subr.mxu0 0.0
    %2719 = vmatpush1.msra.mxu0 0.0
    %2720 = vmatprep.subr.mxu0 0.0
    %2721 = vmatpush1.msra.mxu0 0.0
    %2722 = vmatprep.subr.mxu0 0.0
    %2723 = vmatpush1.msra.mxu0 0.0
    %2724 = vmatprep.subr.mxu0 0.0
    %2725 = vmatpush1.msra.mxu0 0.0
    %2726 = vmatprep.subr.mxu0 0.0
    %2727 = vmatpush1.msra.mxu0 0.0
    %2728 = vmatprep.subr.mxu0 0.0
    %2729 = vmatpush1.msra.mxu0 0.0
    %2730 = vmatprep.subr.mxu0 0.0
    %2731 = vmatpush1.msra.mxu0 0.0
    %2732 = vmatprep.subr.mxu0 0.0
    %2733 = vmatpush1.msra.mxu0 0.0
    %2734 = vmatprep.subr.mxu0 0.0
    %2735 = vmatpush1.msra.mxu0 0.0
    %2736 = vmatprep.subr.mxu0 0.0
    %2737 = vmatpush1.msra.mxu0 0.0
    %2738 = vmatprep.subr.mxu0 0.0
    %2739 = vmatpush1.msra.mxu0 0.0
    %2740 = vmatprep.subr.mxu0 0.0
    %2741 = vmatpush1.msra.mxu0 0.0
    %2742 = vmatprep.subr.mxu0 0.0
    %2743 = vmatpush1.msra.mxu0 0.0
    %2744 = vmatprep.subr.mxu0 0.0
    %2745 = vmatpush1.msra.mxu0 0.0
    %2746 = vmatprep.subr.mxu0 0.0
    %2747 = vmatpush1.msra.mxu0 0.0
    %2748 = vmatprep.subr.mxu0 0.0
    %2749 = vmatpush1.msra.mxu0 0.0
    %2750 = vmatprep.subr.mxu0 0.0
    %2751 = vmatpush1.msra.mxu0 0.0
    %2752 = vmatprep.subr.mxu0 0.0
    %2753 = vmatpush1.msra.mxu0 0.0
    %2754 = vmatprep.subr.mxu0 0.0
    %2755 = vmatpush1.msra.mxu0 0.0
    %2756 = vmatprep.subr.mxu0 0.0
    %2757 = vmatpush1.msra.mxu0 0.0
    %2758 = vmatprep.subr.mxu0 0.0
    %2759 = vmatpush1.msra.mxu0 0.0
    %2760 = vmatprep.subr.mxu0 0.0
    %2761 = vmatpush1.msra.mxu0 0.0
    %2762 = vmatprep.subr.mxu0 0.0
    %2763 = vmatpush1.msra.mxu0 0.0
    %2764 = vmatprep.subr.mxu0 0.0
    %2765 = vmatpush1.msra.mxu0 0.0
    %2766 = vmatprep.subr.mxu0 0.0
    %2767 = vmatpush1.msra.mxu0 0.0
    %2768 = vmatprep.subr.mxu0 0.0
    %2769 = vmatpush1.msra.mxu0 0.0
    %2770 = vmatprep.subr.mxu0 0.0
    %2771 = vmatpush1.msra.mxu0 0.0
    %2772 = vmatprep.subr.mxu0 0.0
    %2773 = vmatpush1.msra.mxu0 0.0
    %2774 = vmatprep.subr.mxu0 0.0
    %2775 = vmatpush1.msra.mxu0 0.0
    %2776 = vmatprep.subr.mxu0 0.0
    %2777 = vmatpush1.msra.mxu0 0.0
    %2778 = vmatprep.mubr.f32.mxu0 0.0
    %2779 = vmatmul.mubr.f32.gmra.mrb[0].mxu0 %v2710
    %v2780 = vpop.f32.mrb[0].mxu0
    %v2781 = vadd.f32 0.0, %v2780
    %v2782 = vpop.f32.mrb[0].mxu0
    %2783 = vdwg.mxu0
    %2784 = vrot.lane.b32.xlu0 %v2048, 120
    %v2785 = vpop.permute.xlu0 %2784
    %2786 = vrot.lane.b32.xlu0 %v2374, 120
    %v2787 = vpop.permute.xlu0 %2786
    %2788 = vrot.lane.b32.xlu0 %v2381, 120
    %v2789 = vpop.permute.xlu0 %2788
    %v2790 = vsel %vm417, %v2785, 0
    %v2792 = vsel %vm417, %v2787, 0
    %v2794 = vsel %vm417, %v2789, 0
    %2796 = vmatprep.subr.mxu0 0.0
    %2797 = vmatpush1.xpose.msra.mxu0 %v2792
    %2798 = vmatprep.subr.mxu0 0.0
    %2799 = vmatpush1.xpose.msra.mxu0 %v2794
    %2800 = vmatprep.subr.mxu0 0.0
    %2801 = vmatpush1.xpose.msra.mxu0 0.0
    %2802 = vmatprep.subr.mxu0 0.0
    %2803 = vmatpush1.xpose.msra.mxu0 0.0
    %2804 = vmatprep.subr.mxu0 0.0
    %2805 = vmatpush1.xpose.msra.mxu0 0.0
    %2806 = vmatprep.subr.mxu0 0.0
    %2807 = vmatpush1.xpose.msra.mxu0 0.0
    %2808 = vmatprep.subr.mxu0 0.0
    %2809 = vmatpush1.xpose.msra.mxu0 0.0
    %2810 = vmatprep.subr.mxu0 0.0
    %2811 = vmatpush1.xpose.msra.mxu0 0.0
    %2812 = vmatprep.subr.mxu0 0.0
    %2813 = vmatpush1.xpose.msra.mxu0 0.0
    %2814 = vmatprep.subr.mxu0 0.0
    %2815 = vmatpush1.xpose.msra.mxu0 0.0
    %2816 = vmatprep.subr.mxu0 0.0
    %2817 = vmatpush1.xpose.msra.mxu0 0.0
    %2818 = vmatprep.subr.mxu0 0.0
    %2819 = vmatpush1.xpose.msra.mxu0 0.0
    %2820 = vmatprep.subr.mxu0 0.0
    %2821 = vmatpush1.xpose.msra.mxu0 0.0
    %2822 = vmatprep.subr.mxu0 0.0
    %2823 = vmatpush1.xpose.msra.mxu0 0.0
    %2824 = vmatprep.subr.mxu0 0.0
    %2825 = vmatpush1.xpose.msra.mxu0 0.0
    %2826 = vmatprep.subr.mxu0 0.0
    %2827 = vmatpush1.xpose.msra.mxu0 0.0
    %2828 = vmatprep.subr.mxu0 0.0
    %2829 = vmatpush1.xpose.msra.mxu0 0.0
    %2830 = vmatprep.subr.mxu0 0.0
    %2831 = vmatpush1.xpose.msra.mxu0 0.0
    %2832 = vmatprep.subr.mxu0 0.0
    %2833 = vmatpush1.xpose.msra.mxu0 0.0
    %2834 = vmatprep.subr.mxu0 0.0
    %2835 = vmatpush1.xpose.msra.mxu0 0.0
    %2836 = vmatprep.subr.mxu0 0.0
    %2837 = vmatpush1.xpose.msra.mxu0 0.0
    %2838 = vmatprep.subr.mxu0 0.0
    %2839 = vmatpush1.xpose.msra.mxu0 0.0
    %2840 = vmatprep.subr.mxu0 0.0
    %2841 = vmatpush1.xpose.msra.mxu0 0.0
    %2842 = vmatprep.subr.mxu0 0.0
    %2843 = vmatpush1.xpose.msra.mxu0 0.0
    %2844 = vmatprep.subr.mxu0 0.0
    %2845 = vmatpush1.xpose.msra.mxu0 0.0
    %2846 = vmatprep.subr.mxu0 0.0
    %2847 = vmatpush1.xpose.msra.mxu0 0.0
    %2848 = vmatprep.subr.mxu0 0.0
    %2849 = vmatpush1.xpose.msra.mxu0 0.0
    %2850 = vmatprep.subr.mxu0 0.0
    %2851 = vmatpush1.xpose.msra.mxu0 0.0
    %2852 = vmatprep.subr.mxu0 0.0
    %2853 = vmatpush1.xpose.msra.mxu0 0.0
    %2854 = vmatprep.subr.mxu0 0.0
    %2855 = vmatpush1.xpose.msra.mxu0 0.0
    %2856 = vmatprep.subr.mxu0 0.0
    %2857 = vmatpush1.xpose.msra.mxu0 0.0
    %2858 = vmatprep.subr.mxu0 0.0
    %2859 = vmatpush1.xpose.msra.mxu0 0.0
    %2860 = vmatprep.mubr.f32.mxu0 0.0
    %2861 = vmatmul.mubr.f32.gmra.mrb[0].mxu0 %v2790
    %v2862 = vpop.f32.mrb[0].mxu0
    %v2863 = vadd.f32 %v106, %v2862
    %v2864 = vpop.f32.mrb[0].mxu0
    %2865 = vdwg.mxu0
    %2866 = vrot.lane.b32.xlu0 %v2049, 120
    %v2867 = vpop.permute.xlu0 %2866
    %2868 = vrot.lane.b32.xlu0 %v2475, 120
    %v2869 = vpop.permute.xlu0 %2868
    %2870 = vrot.lane.b32.xlu0 %v2482, 120
    %v2871 = vpop.permute.xlu0 %2870
    %v2872 = vsel %vm417, %v2867, 0
    %v2874 = vsel %vm417, %v2869, 0
    %v2876 = vsel %vm417, %v2871, 0
    %2878 = vmatprep.subr.mxu0 0.0
    %2879 = vmatpush1.xpose.msra.mxu0 %v2874
    %2880 = vmatprep.subr.mxu0 0.0
    %2881 = vmatpush1.xpose.msra.mxu0 %v2876
    %2882 = vmatprep.subr.mxu0 0.0
    %2883 = vmatpush1.xpose.msra.mxu0 0.0
    %2884 = vmatprep.subr.mxu0 0.0
    %2885 = vmatpush1.xpose.msra.mxu0 0.0
    %2886 = vmatprep.subr.mxu0 0.0
    %2887 = vmatpush1.xpose.msra.mxu0 0.0
    %2888 = vmatprep.subr.mxu0 0.0
    %2889 = vmatpush1.xpose.msra.mxu0 0.0
    %2890 = vmatprep.subr.mxu0 0.0
    %2891 = vmatpush1.xpose.msra.mxu0 0.0
    %2892 = vmatprep.subr.mxu0 0.0
    %2893 = vmatpush1.xpose.msra.mxu0 0.0
    %2894 = vmatprep.subr.mxu0 0.0
    %2895 = vmatpush1.xpose.msra.mxu0 0.0
    %2896 = vmatprep.subr.mxu0 0.0
    %2897 = vmatpush1.xpose.msra.mxu0 0.0
    %2898 = vmatprep.subr.mxu0 0.0
    %2899 = vmatpush1.xpose.msra.mxu0 0.0
    %2900 = vmatprep.subr.mxu0 0.0
    %2901 = vmatpush1.xpose.msra.mxu0 0.0
    %2902 = vmatprep.subr.mxu0 0.0
    %2903 = vmatpush1.xpose.msra.mxu0 0.0
    %2904 = vmatprep.subr.mxu0 0.0
    %2905 = vmatpush1.xpose.msra.mxu0 0.0
    %2906 = vmatprep.subr.mxu0 0.0
    %2907 = vmatpush1.xpose.msra.mxu0 0.0
    %2908 = vmatprep.subr.mxu0 0.0
    %2909 = vmatpush1.xpose.msra.mxu0 0.0
    %2910 = vmatprep.subr.mxu0 0.0
    %2911 = vmatpush1.xpose.msra.mxu0 0.0
    %2912 = vmatprep.subr.mxu0 0.0
    %2913 = vmatpush1.xpose.msra.mxu0 0.0
    %2914 = vmatprep.subr.mxu0 0.0
    %2915 = vmatpush1.xpose.msra.mxu0 0.0
    %2916 = vmatprep.subr.mxu0 0.0
    %2917 = vmatpush1.xpose.msra.mxu0 0.0
    %2918 = vmatprep.subr.mxu0 0.0
    %2919 = vmatpush1.xpose.msra.mxu0 0.0
    %2920 = vmatprep.subr.mxu0 0.0
    %2921 = vmatpush1.xpose.msra.mxu0 0.0
    %2922 = vmatprep.subr.mxu0 0.0
    %2923 = vmatpush1.xpose.msra.mxu0 0.0
    %2924 = vmatprep.subr.mxu0 0.0
    %2925 = vmatpush1.xpose.msra.mxu0 0.0
    %2926 = vmatprep.subr.mxu0 0.0
    %2927 = vmatpush1.xpose.msra.mxu0 0.0
    %2928 = vmatprep.subr.mxu0 0.0
    %2929 = vmatpush1.xpose.msra.mxu0 0.0
    %2930 = vmatprep.subr.mxu0 0.0
    %2931 = vmatpush1.xpose.msra.mxu0 0.0
    %2932 = vmatprep.subr.mxu0 0.0
    %2933 = vmatpush1.xpose.msra.mxu0 0.0
    %2934 = vmatprep.subr.mxu0 0.0
    %2935 = vmatpush1.xpose.msra.mxu0 0.0
    %2936 = vmatprep.subr.mxu0 0.0
    %2937 = vmatpush1.xpose.msra.mxu0 0.0
    %2938 = vmatprep.subr.mxu0 0.0
    %2939 = vmatpush1.xpose.msra.mxu0 0.0
    %2940 = vmatprep.subr.mxu0 0.0
    %2941 = vmatpush1.xpose.msra.mxu0 0.0
    %2942 = vmatprep.mubr.f32.mxu0 0.0
    %2943 = vmatmul.mubr.f32.gmra.mrb[0].mxu0 %v2872
    %v2944 = vpop.f32.mrb[0].mxu0
    %v2945 = vadd.f32 %v107, %v2944
    %v2946 = vpop.f32.mrb[0].mxu0
    %2947 = vdwg.mxu0
    %v2948 = vsel %vm2560, %v2863, -inf
    %2949 = vmax.xlane.f32.xlu0 %v2948
    %v2950 = vpop.xlane.xlu0 %2949
    %v2951 = vsel %vm2560, %v2945, -inf
    %2952 = vmax.xlane.f32.xlu0 %v2951
    %v2953 = vpop.xlane.xlu0 %2952
    %v2954 = vsub.f32 %v2863, %v2950
    %v2955 = vsub.f32 %v2945, %v2953
    %v2956 = vmul.f32 %v2954, 1.442695
    %v2957 = vpow.pop %v2956
    %v2958 = vmul.f32 %v2955, 1.442695
    %v2959 = vpow.pop %v2958
    %v2960 = vsel %vm2560, %v2957, 0.0
    %2961 = vadd.xlane.f32.xlu0 %v2960
    %v2962 = vpop.xlane.xlu0 %2961
    %v2963 = vsel %vm2560, %v2959, 0.0
    %2964 = vadd.xlane.f32.xlu0 %v2963
    %v2965 = vpop.xlane.xlu0 %2964
    %v2966 = vrcp.pop %v2962
    %v2967 = vrcp.pop %v2965
    %v2968 = vmul.f32 %v2957, %v2966
    %v2969 = vmul.f32 %v2959, %v2967
    %2970 = vrot.lane.b32.xlu0 %v2599, 120
    %v2971 = vpop.permute.xlu0 %2970
    %2972 = vrot.lane.b32.xlu0 %v2606, 120
    %v2973 = vpop.permute.xlu0 %2972
    %v2976 = vsel %vm2560, %v2968, 0
    %v2978 = vsel %vm2611, %v2973, 0
    %2980 = vmatprep.subr.mxu0 0.0
    %2981 = vmatpush1.msra.mxu0 %v2971
    %2982 = vmatprep.subr.mxu0 0.0
    %2983 = vmatpush1.msra.mxu0 %v2978
    %2984 = vmatprep.subr.mxu0 0.0
    %2985 = vmatpush1.msra.mxu0 0.0
    %2986 = vmatprep.subr.mxu0 0.0
    %2987 = vmatpush1.msra.mxu0 0.0
    %2988 = vmatprep.subr.mxu0 0.0
    %2989 = vmatpush1.msra.mxu0 0.0
    %2990 = vmatprep.subr.mxu0 0.0
    %2991 = vmatpush1.msra.mxu0 0.0
    %2992 = vmatprep.subr.mxu0 0.0
    %2993 = vmatpush1.msra.mxu0 0.0
    %2994 = vmatprep.subr.mxu0 0.0
    %2995 = vmatpush1.msra.mxu0 0.0
    %2996 = vmatprep.subr.mxu0 0.0
    %2997 = vmatpush1.msra.mxu0 0.0
    %2998 = vmatprep.subr.mxu0 0.0
    %2999 = vmatpush1.msra.mxu0 0.0
    %3000 = vmatprep.subr.mxu0 0.0
    %3001 = vmatpush1.msra.mxu0 0.0
    %3002 = vmatprep.subr.mxu0 0.0
    %3003 = vmatpush1.msra.mxu0 0.0
    %3004 = vmatprep.subr.mxu0 0.0
    %3005 = vmatpush1.msra.mxu0 0.0
    %3006 = vmatprep.subr.mxu0 0.0
    %3007 = vmatpush1.msra.mxu0 0.0
    %3008 = vmatprep.subr.mxu0 0.0
    %3009 = vmatpush1.msra.mxu0 0.0
    %3010 = vmatprep.subr.mxu0 0.0
    %3011 = vmatpush1.msra.mxu0 0.0
    %3012 = vmatprep.subr.mxu0 0.0
    %3013 = vmatpush1.msra.mxu0 0.0
    %3014 = vmatprep.subr.mxu0 0.0
    %3015 = vmatpush1.msra.mxu0 0.0
    %3016 = vmatprep.subr.mxu0 0.0
    %3017 = vmatpush1.msra.mxu0 0.0
    %3018 = vmatprep.subr.mxu0 0.0
    %3019 = vmatpush1.msra.mxu0 0.0
    %3020 = vmatprep.subr.mxu0 0.0
    %3021 = vmatpush1.msra.mxu0 0.0
    %3022 = vmatprep.subr.mxu0 0.0
    %3023 = vmatpush1.msra.mxu0 0.0
    %3024 = vmatprep.subr.mxu0 0.0
    %3025 = vmatpush1.msra.mxu0 0.0
    %3026 = vmatprep.subr.mxu0 0.0
    %3027 = vmatpush1.msra.mxu0 0.0
    %3028 = vmatprep.subr.mxu0 0.0
    %3029 = vmatpush1.msra.mxu0 0.0
    %3030 = vmatprep.subr.mxu0 0.0
    %3031 = vmatpush1.msra.mxu0 0.0
    %3032 = vmatprep.subr.mxu0 0.0
    %3033 = vmatpush1.msra.mxu0 0.0
    %3034 = vmatprep.subr.mxu0 0.0
    %3035 = vmatpush1.msra.mxu0 0.0
    %3036 = vmatprep.subr.mxu0 0.0
    %3037 = vmatpush1.msra.mxu0 0.0
    %3038 = vmatprep.subr.mxu0 0.0
    %3039 = vmatpush1.msra.mxu0 0.0
    %3040 = vmatprep.subr.mxu0 0.0
    %3041 = vmatpush1.msra.mxu0 0.0
    %3042 = vmatprep.subr.mxu0 0.0
    %3043 = vmatpush1.msra.mxu0 0.0
    %3044 = vmatprep.mubr.f32.mxu0 0.0
    %3045 = vmatmul.mubr.f32.gmra.mrb[0].mxu0 %v2976
    %v3046 = vpop.f32.mrb[0].mxu0
    %v3047 = vadd.f32 0.0, %v3046
    %v3048 = vpop.f32.mrb[0].mxu0
    %3049 = vdwg.mxu0
    %3050 = vrot.lane.b32.xlu0 %v2700, 120
    %v3051 = vpop.permute.xlu0 %3050
    %3052 = vrot.lane.b32.xlu0 %v2707, 120
    %v3053 = vpop.permute.xlu0 %3052
    %v3056 = vsel %vm2560, %v2969, 0
    %v3058 = vsel %vm2611, %v3053, 0
    %3060 = vmatprep.subr.mxu0 0.0
    %3061 = vmatpush1.msra.mxu0 %v3051
    %3062 = vmatprep.subr.mxu0 0.0
    %3063 = vmatpush1.msra.mxu0 %v3058
    %3064 = vmatprep.subr.mxu0 0.0
    %3065 = vmatpush1.msra.mxu0 0.0
    %3066 = vmatprep.subr.mxu0 0.0
    %3067 = vmatpush1.msra.mxu0 0.0
    %3068 = vmatprep.subr.mxu0 0.0
    %3069 = vmatpush1.msra.mxu0 0.0
    %3070 = vmatprep.subr.mxu0 0.0
    %3071 = vmatpush1.msra.mxu0 0.0
    %3072 = vmatprep.subr.mxu0 0.0
    %3073 = vmatpush1.msra.mxu0 0.0
    %3074 = vmatprep.subr.mxu0 0.0
    %3075 = vmatpush1.msra.mxu0 0.0
    %3076 = vmatprep.subr.mxu0 0.0
    %3077 = vmatpush1.msra.mxu0 0.0
    %3078 = vmatprep.subr.mxu0 0.0
    %3079 = vmatpush1.msra.mxu0 0.0
    %3080 = vmatprep.subr.mxu0 0.0
    %3081 = vmatpush1.msra.mxu0 0.0
    %3082 = vmatprep.subr.mxu0 0.0
    %3083 = vmatpush1.msra.mxu0 0.0
    %3084 = vmatprep.subr.mxu0 0.0
    %3085 = vmatpush1.msra.mxu0 0.0
    %3086 = vmatprep.subr.mxu0 0.0
    %3087 = vmatpush1.msra.mxu0 0.0
    %3088 = vmatprep.subr.mxu0 0.0
    %3089 = vmatpush1.msra.mxu0 0.0
    %3090 = vmatprep.subr.mxu0 0.0
    %3091 = vmatpush1.msra.mxu0 0.0
    %3092 = vmatprep.subr.mxu0 0.0
    %3093 = vmatpush1.msra.mxu0 0.0
    %3094 = vmatprep.subr.mxu0 0.0
    %3095 = vmatpush1.msra.mxu0 0.0
    %3096 = vmatprep.subr.mxu0 0.0
    %3097 = vmatpush1.msra.mxu0 0.0
    %3098 = vmatprep.subr.mxu0 0.0
    %3099 = vmatpush1.msra.mxu0 0.0
    %3100 = vmatprep.subr.mxu0 0.0
    %3101 = vmatpush1.msra.mxu0 0.0
    %3102 = vmatprep.subr.mxu0 0.0
    %3103 = vmatpush1.msra.mxu0 0.0
    %3104 = vmatprep.subr.mxu0 0.0
    %3105 = vmatpush1.msra.mxu0 0.0
    %3106 = vmatprep.subr.mxu0 0.0
    %3107 = vmatpush1.msra.mxu0 0.0
    %3108 = vmatprep.subr.mxu0 0.0
    %3109 = vmatpush1.msra.mxu0 0.0
    %3110 = vmatprep.subr.mxu0 0.0
    %3111 = vmatpush1.msra.mxu0 0.0
    %3112 = vmatprep.subr.mxu0 0.0
    %3113 = vmatpush1.msra.mxu0 0.0
    %3114 = vmatprep.subr.mxu0 0.0
    %3115 = vmatpush1.msra.mxu0 0.0
    %3116 = vmatprep.subr.mxu0 0.0
    %3117 = vmatpush1.msra.mxu0 0.0
    %3118 = vmatprep.subr.mxu0 0.0
    %3119 = vmatpush1.msra.mxu0 0.0
    %3120 = vmatprep.subr.mxu0 0.0
    %3121 = vmatpush1.msra.mxu0 0.0
    %3122 = vmatprep.subr.mxu0 0.0
    %3123 = vmatpush1.msra.mxu0 0.0
    %3124 = vmatprep.mubr.f32.mxu0 0.0
    %3125 = vmatmul.mubr.f32.gmra.mrb[0].mxu0 %v3056
    %v3126 = vpop.f32.mrb[0].mxu0
    %v3127 = vadd.f32 0.0, %v3126
    %v3128 = vpop.f32.mrb[0].mxu0
    %3129 = vdwg.mxu0
    %3130 = vrot.lane.b32.xlu0 %v2048, 112
    %v3131 = vpop.permute.xlu0 %3130
    %3132 = vrot.lane.b32.xlu0 %v2374, 112
    %v3133 = vpop.permute.xlu0 %3132
    %3134 = vrot.lane.b32.xlu0 %v2381, 112
    %v3135 = vpop.permute.xlu0 %3134
    %v3136 = vsel %vm417, %v3131, 0
    %v3138 = vsel %vm417, %v3133, 0
    %v3140 = vsel %vm417, %v3135, 0
    %3142 = vmatprep.subr.mxu0 0.0
    %3143 = vmatpush1.xpose.msra.mxu0 %v3138
    %3144 = vmatprep.subr.mxu0 0.0
    %3145 = vmatpush1.xpose.msra.mxu0 %v3140
    %3146 = vmatprep.subr.mxu0 0.0
    %3147 = vmatpush1.xpose.msra.mxu0 0.0
    %3148 = vmatprep.subr.mxu0 0.0
    %3149 = vmatpush1.xpose.msra.mxu0 0.0
    %3150 = vmatprep.subr.mxu0 0.0
    %3151 = vmatpush1.xpose.msra.mxu0 0.0
    %3152 = vmatprep.subr.mxu0 0.0
    %3153 = vmatpush1.xpose.msra.mxu0 0.0
    %3154 = vmatprep.subr.mxu0 0.0
    %3155 = vmatpush1.xpose.msra.mxu0 0.0
    %3156 = vmatprep.subr.mxu0 0.0
    %3157 = vmatpush1.xpose.msra.mxu0 0.0
    %3158 = vmatprep.subr.mxu0 0.0
    %3159 = vmatpush1.xpose.msra.mxu0 0.0
    %3160 = vmatprep.subr.mxu0 0.0
    %3161 = vmatpush1.xpose.msra.mxu0 0.0
    %3162 = vmatprep.subr.mxu0 0.0
    %3163 = vmatpush1.xpose.msra.mxu0 0.0
    %3164 = vmatprep.subr.mxu0 0.0
    %3165 = vmatpush1.xpose.msra.mxu0 0.0
    %3166 = vmatprep.subr.mxu0 0.0
    %3167 = vmatpush1.xpose.msra.mxu0 0.0
    %3168 = vmatprep.subr.mxu0 0.0
    %3169 = vmatpush1.xpose.msra.mxu0 0.0
    %3170 = vmatprep.subr.mxu0 0.0
    %3171 = vmatpush1.xpose.msra.mxu0 0.0
    %3172 = vmatprep.subr.mxu0 0.0
    %3173 = vmatpush1.xpose.msra.mxu0 0.0
    %3174 = vmatprep.subr.mxu0 0.0
    %3175 = vmatpush1.xpose.msra.mxu0 0.0
    %3176 = vmatprep.subr.mxu0 0.0
    %3177 = vmatpush1.xpose.msra.mxu0 0.0
    %3178 = vmatprep.subr.mxu0 0.0
    %3179 = vmatpush1.xpose.msra.mxu0 0.0
    %3180 = vmatprep.subr.mxu0 0.0
    %3181 = vmatpush1.xpose.msra.mxu0 0.0
    %3182 = vmatprep.subr.mxu0 0.0
    %3183 = vmatpush1.xpose.msra.mxu0 0.0
    %3184 = vmatprep.subr.mxu0 0.0
    %3185 = vmatpush1.xpose.msra.mxu0 0.0
    %3186 = vmatprep.subr.mxu0 0.0
    %3187 = vmatpush1.xpose.msra.mxu0 0.0
    %3188 = vmatprep.subr.mxu0 0.0
    %3189 = vmatpush1.xpose.msra.mxu0 0.0
    %3190 = vmatprep.subr.mxu0 0.0
    %3191 = vmatpush1.xpose.msra.mxu0 0.0
    %3192 = vmatprep.subr.mxu0 0.0
    %3193 = vmatpush1.xpose.msra.mxu0 0.0
    %3194 = vmatprep.subr.mxu0 0.0
    %3195 = vmatpush1.xpose.msra.mxu0 0.0
    %3196 = vmatprep.subr.mxu0 0.0
    %3197 = vmatpush1.xpose.msra.mxu0 0.0
    %3198 = vmatprep.subr.mxu0 0.0
    %3199 = vmatpush1.xpose.msra.mxu0 0.0
    %3200 = vmatprep.subr.mxu0 0.0
    %3201 = vmatpush1.xpose.msra.mxu0 0.0
    %3202 = vmatprep.subr.mxu0 0.0
    %3203 = vmatpush1.xpose.msra.mxu0 0.0
    %3204 = vmatprep.subr.mxu0 0.0
    %3205 = vmatpush1.xpose.msra.mxu0 0.0
    %3206 = vmatprep.mubr.f32.mxu0 0.0
    %3207 = vmatmul.mubr.f32.gmra.mrb[0].mxu0 %v3136
    %v3208 = vpop.f32.mrb[0].mxu0
    %v3209 = vadd.f32 %v106, %v3208
    %v3210 = vpop.f32.mrb[0].mxu0
    %3211 = vdwg.mxu0
    %3212 = vrot.lane.b32.xlu0 %v2049, 112
    %v3213 = vpop.permute.xlu0 %3212
    %3214 = vrot.lane.b32.xlu0 %v2475, 112
    %v3215 = vpop.permute.xlu0 %3214
    %3216 = vrot.lane.b32.xlu0 %v2482, 112
    %v3217 = vpop.permute.xlu0 %3216
    %v3218 = vsel %vm417, %v3213, 0
    %v3220 = vsel %vm417, %v3215, 0
    %v3222 = vsel %vm417, %v3217, 0
    %3224 = vmatprep.subr.mxu0 0.0
    %3225 = vmatpush1.xpose.msra.mxu0 %v3220
    %3226 = vmatprep.subr.mxu0 0.0
    %3227 = vmatpush1.xpose.msra.mxu0 %v3222
    %3228 = vmatprep.subr.mxu0 0.0
    %3229 = vmatpush1.xpose.msra.mxu0 0.0
    %3230 = vmatprep.subr.mxu0 0.0
    %3231 = vmatpush1.xpose.msra.mxu0 0.0
    %3232 = vmatprep.subr.mxu0 0.0
    %3233 = vmatpush1.xpose.msra.mxu0 0.0
    %3234 = vmatprep.subr.mxu0 0.0
    %3235 = vmatpush1.xpose.msra.mxu0 0.0
    %3236 = vmatprep.subr.mxu0 0.0
    %3237 = vmatpush1.xpose.msra.mxu0 0.0
    %3238 = vmatprep.subr.mxu0 0.0
    %3239 = vmatpush1.xpose.msra.mxu0 0.0
    %3240 = vmatprep.subr.mxu0 0.0
    %3241 = vmatpush1.xpose.msra.mxu0 0.0
    %3242 = vmatprep.subr.mxu0 0.0
    %3243 = vmatpush1.xpose.msra.mxu0 0.0
    %3244 = vmatprep.subr.mxu0 0.0
    %3245 = vmatpush1.xpose.msra.mxu0 0.0
    %3246 = vmatprep.subr.mxu0 0.0
    %3247 = vmatpush1.xpose.msra.mxu0 0.0
    %3248 = vmatprep.subr.mxu0 0.0
    %3249 = vmatpush1.xpose.msra.mxu0 0.0
    %3250 = vmatprep.subr.mxu0 0.0
    %3251 = vmatpush1.xpose.msra.mxu0 0.0
    %3252 = vmatprep.subr.mxu0 0.0
    %3253 = vmatpush1.xpose.msra.mxu0 0.0
    %3254 = vmatprep.subr.mxu0 0.0
    %3255 = vmatpush1.xpose.msra.mxu0 0.0
    %3256 = vmatprep.subr.mxu0 0.0
    %3257 = vmatpush1.xpose.msra.mxu0 0.0
    %3258 = vmatprep.subr.mxu0 0.0
    %3259 = vmatpush1.xpose.msra.mxu0 0.0
    %3260 = vmatprep.subr.mxu0 0.0
    %3261 = vmatpush1.xpose.msra.mxu0 0.0
    %3262 = vmatprep.subr.mxu0 0.0
    %3263 = vmatpush1.xpose.msra.mxu0 0.0
    %3264 = vmatprep.subr.mxu0 0.0
    %3265 = vmatpush1.xpose.msra.mxu0 0.0
    %3266 = vmatprep.subr.mxu0 0.0
    %3267 = vmatpush1.xpose.msra.mxu0 0.0
    %3268 = vmatprep.subr.mxu0 0.0
    %3269 = vmatpush1.xpose.msra.mxu0 0.0
    %3270 = vmatprep.subr.mxu0 0.0
    %3271 = vmatpush1.xpose.msra.mxu0 0.0
    %3272 = vmatprep.subr.mxu0 0.0
    %3273 = vmatpush1.xpose.msra.mxu0 0.0
    %3274 = vmatprep.subr.mxu0 0.0
    %3275 = vmatpush1.xpose.msra.mxu0 0.0
    %3276 = vmatprep.subr.mxu0 0.0
    %3277 = vmatpush1.xpose.msra.mxu0 0.0
    %3278 = vmatprep.subr.mxu0 0.0
    %3279 = vmatpush1.xpose.msra.mxu0 0.0
    %3280 = vmatprep.subr.mxu0 0.0
    %3281 = vmatpush1.xpose.msra.mxu0 0.0
    %3282 = vmatprep.subr.mxu0 0.0
    %3283 = vmatpush1.xpose.msra.mxu0 0.0
    %3284 = vmatprep.subr.mxu0 0.0
    %3285 = vmatpush1.xpose.msra.mxu0 0.0
    %3286 = vmatprep.subr.mxu0 0.0
    %3287 = vmatpush1.xpose.msra.mxu0 0.0
    %3288 = vmatprep.mubr.f32.mxu0 0.0
    %3289 = vmatmul.mubr.f32.gmra.mrb[0].mxu0 %v3218
    %v3290 = vpop.f32.mrb[0].mxu0
    %v3291 = vadd.f32 %v107, %v3290
    %v3292 = vpop.f32.mrb[0].mxu0
    %3293 = vdwg.mxu0
    %v3294 = vsel %vm2560, %v3209, -inf
    %3295 = vmax.xlane.f32.xlu0 %v3294
    %v3296 = vpop.xlane.xlu0 %3295
    %v3297 = vsel %vm2560, %v3291, -inf
    %3298 = vmax.xlane.f32.xlu0 %v3297
    %v3299 = vpop.xlane.xlu0 %3298
    %v3300 = vsub.f32 %v3209, %v3296
    %v3301 = vsub.f32 %v3291, %v3299
    %v3302 = vmul.f32 %v3300, 1.442695
    %v3303 = vpow.pop %v3302
    %v3304 = vmul.f32 %v3301, 1.442695
    %v3305 = vpow.pop %v3304
    %v3306 = vsel %vm2560, %v3303, 0.0
    %3307 = vadd.xlane.f32.xlu0 %v3306
    %v3308 = vpop.xlane.xlu0 %3307
    %v3309 = vsel %vm2560, %v3305, 0.0
    %3310 = vadd.xlane.f32.xlu0 %v3309
    %v3311 = vpop.xlane.xlu0 %3310
    %v3312 = vrcp.pop %v3308
    %v3313 = vrcp.pop %v3311
    %v3314 = vmul.f32 %v3303, %v3312
    %v3315 = vmul.f32 %v3305, %v3313
    %3316 = vrot.lane.b32.xlu0 %v2599, 112
    %v3317 = vpop.permute.xlu0 %3316
    %3318 = vrot.lane.b32.xlu0 %v2606, 112
    %v3319 = vpop.permute.xlu0 %3318
    %v3322 = vsel %vm2560, %v3314, 0
    %v3324 = vsel %vm2611, %v3319, 0
    %3326 = vmatprep.subr.mxu0 0.0
    %3327 = vmatpush1.msra.mxu0 %v3317
    %3328 = vmatprep.subr.mxu0 0.0
    %3329 = vmatpush1.msra.mxu0 %v3324
    %3330 = vmatprep.subr.mxu0 0.0
    %3331 = vmatpush1.msra.mxu0 0.0
    %3332 = vmatprep.subr.mxu0 0.0
    %3333 = vmatpush1.msra.mxu0 0.0
    %3334 = vmatprep.subr.mxu0 0.0
    %3335 = vmatpush1.msra.mxu0 0.0
    %3336 = vmatprep.subr.mxu0 0.0
    %3337 = vmatpush1.msra.mxu0 0.0
    %3338 = vmatprep.subr.mxu0 0.0
    %3339 = vmatpush1.msra.mxu0 0.0
    %3340 = vmatprep.subr.mxu0 0.0
    %3341 = vmatpush1.msra.mxu0 0.0
    %3342 = vmatprep.subr.mxu0 0.0
    %3343 = vmatpush1.msra.mxu0 0.0
    %3344 = vmatprep.subr.mxu0 0.0
    %3345 = vmatpush1.msra.mxu0 0.0
    %3346 = vmatprep.subr.mxu0 0.0
    %3347 = vmatpush1.msra.mxu0 0.0
    %3348 = vmatprep.subr.mxu0 0.0
    %3349 = vmatpush1.msra.mxu0 0.0
    %3350 = vmatprep.subr.mxu0 0.0
    %3351 = vmatpush1.msra.mxu0 0.0
    %3352 = vmatprep.subr.mxu0 0.0
    %3353 = vmatpush1.msra.mxu0 0.0
    %3354 = vmatprep.subr.mxu0 0.0
    %3355 = vmatpush1.msra.mxu0 0.0
    %3356 = vmatprep.subr.mxu0 0.0
    %3357 = vmatpush1.msra.mxu0 0.0
    %3358 = vmatprep.subr.mxu0 0.0
    %3359 = vmatpush1.msra.mxu0 0.0
    %3360 = vmatprep.subr.mxu0 0.0
    %3361 = vmatpush1.msra.mxu0 0.0
    %3362 = vmatprep.subr.mxu0 0.0
    %3363 = vmatpush1.msra.mxu0 0.0
    %3364 = vmatprep.subr.mxu0 0.0
    %3365 = vmatpush1.msra.mxu0 0.0
    %3366 = vmatprep.subr.mxu0 0.0
    %3367 = vmatpush1.msra.mxu0 0.0
    %3368 = vmatprep.subr.mxu0 0.0
    %3369 = vmatpush1.msra.mxu0 0.0
    %3370 = vmatprep.subr.mxu0 0.0
    %3371 = vmatpush1.msra.mxu0 0.0
    %3372 = vmatprep.subr.mxu0 0.0
    %3373 = vmatpush1.msra.mxu0 0.0
    %3374 = vmatprep.subr.mxu0 0.0
    %3375 = vmatpush1.msra.mxu0 0.0
    %3376 = vmatprep.subr.mxu0 0.0
    %3377 = vmatpush1.msra.mxu0 0.0
    %3378 = vmatprep.subr.mxu0 0.0
    %3379 = vmatpush1.msra.mxu0 0.0
    %3380 = vmatprep.subr.mxu0 0.0
    %3381 = vmatpush1.msra.mxu0 0.0
    %3382 = vmatprep.subr.mxu0 0.0
    %3383 = vmatpush1.msra.mxu0 0.0
    %3384 = vmatprep.subr.mxu0 0.0
    %3385 = vmatpush1.msra.mxu0 0.0
    %3386 = vmatprep.subr.mxu0 0.0
    %3387 = vmatpush1.msra.mxu0 0.0
    %3388 = vmatprep.subr.mxu0 0.0
    %3389 = vmatpush1.msra.mxu0 0.0
    %3390 = vmatprep.mubr.f32.mxu0 0.0
    %3391 = vmatmul.mubr.f32.gmra.mrb[0].mxu0 %v3322
    %v3392 = vpop.f32.mrb[0].mxu0
    %v3393 = vadd.f32 0.0, %v3392
    %v3394 = vpop.f32.mrb[0].mxu0
    %3395 = vdwg.mxu0
    %3396 = vrot.lane.b32.xlu0 %v2700, 112
    %v3397 = vpop.permute.xlu0 %3396
    %3398 = vrot.lane.b32.xlu0 %v2707, 112
    %v3399 = vpop.permute.xlu0 %3398
    %v3402 = vsel %vm2560, %v3315, 0
    %v3404 = vsel %vm2611, %v3399, 0
    %3406 = vmatprep.subr.mxu0 0.0
    %3407 = vmatpush1.msra.mxu0 %v3397
    %3408 = vmatprep.subr.mxu0 0.0
    %3409 = vmatpush1.msra.mxu0 %v3404
    %3410 = vmatprep.subr.mxu0 0.0
    %3411 = vmatpush1.msra.mxu0 0.0
    %3412 = vmatprep.subr.mxu0 0.0
    %3413 = vmatpush1.msra.mxu0 0.0
    %3414 = vmatprep.subr.mxu0 0.0
    %3415 = vmatpush1.msra.mxu0 0.0
    %3416 = vmatprep.subr.mxu0 0.0
    %3417 = vmatpush1.msra.mxu0 0.0
    %3418 = vmatprep.subr.mxu0 0.0
    %3419 = vmatpush1.msra.mxu0 0.0
    %3420 = vmatprep.subr.mxu0 0.0
    %3421 = vmatpush1.msra.mxu0 0.0
    %3422 = vmatprep.subr.mxu0 0.0
    %3423 = vmatpush1.msra.mxu0 0.0
    %3424 = vmatprep.subr.mxu0 0.0
    %3425 = vmatpush1.msra.mxu0 0.0
    %3426 = vmatprep.subr.mxu0 0.0
    %3427 = vmatpush1.msra.mxu0 0.0
    %3428 = vmatprep.subr.mxu0 0.0
    %3429 = vmatpush1.msra.mxu0 0.0
    %3430 = vmatprep.subr.mxu0 0.0
    %3431 = vmatpush1.msra.mxu0 0.0
    %3432 = vmatprep.subr.mxu0 0.0
    %3433 = vmatpush1.msra.mxu0 0.0
    %3434 = vmatprep.subr.mxu0 0.0
    %3435 = vmatpush1.msra.mxu0 0.0
    %3436 = vmatprep.subr.mxu0 0.0
    %3437 = vmatpush1.msra.mxu0 0.0
    %3438 = vmatprep.subr.mxu0 0.0
    %3439 = vmatpush1.msra.mxu0 0.0
    %3440 = vmatprep.subr.mxu0 0.0
    %3441 = vmatpush1.msra.mxu0 0.0
    %3442 = vmatprep.subr.mxu0 0.0
    %3443 = vmatpush1.msra.mxu0 0.0
    %3444 = vmatprep.subr.mxu0 0.0
    %3445 = vmatpush1.msra.mxu0 0.0
    %3446 = vmatprep.subr.mxu0 0.0
    %3447 = vmatpush1.msra.mxu0 0.0
    %3448 = vmatprep.subr.mxu0 0.0
    %3449 = vmatpush1.msra.mxu0 0.0
    %3450 = vmatprep.subr.mxu0 0.0
    %3451 = vmatpush1.msra.mxu0 0.0
    %3452 = vmatprep.subr.mxu0 0.0
    %3453 = vmatpush1.msra.mxu0 0.0
    %3454 = vmatprep.subr.mxu0 0.0
    %3455 = vmatpush1.msra.mxu0 0.0
    %3456 = vmatprep.subr.mxu0 0.0
    %3457 = vmatpush1.msra.mxu0 0.0
    %3458 = vmatprep.subr.mxu0 0.0
    %3459 = vmatpush1.msra.mxu0 0.0
    %3460 = vmatprep.subr.mxu0 0.0
    %3461 = vmatpush1.msra.mxu0 0.0
    %3462 = vmatprep.subr.mxu0 0.0
    %3463 = vmatpush1.msra.mxu0 0.0
    %3464 = vmatprep.subr.mxu0 0.0
    %3465 = vmatpush1.msra.mxu0 0.0
    %3466 = vmatprep.subr.mxu0 0.0
    %3467 = vmatpush1.msra.mxu0 0.0
    %3468 = vmatprep.subr.mxu0 0.0
    %3469 = vmatpush1.msra.mxu0 0.0
    %3470 = vmatprep.mubr.f32.mxu0 0.0
    %3471 = vmatmul.mubr.f32.gmra.mrb[0].mxu0 %v3402
    %v3472 = vpop.f32.mrb[0].mxu0
    %v3473 = vadd.f32 0.0, %v3472
    %v3474 = vpop.f32.mrb[0].mxu0
    %3475 = vdwg.mxu0
    %3476 = vrot.lane.b32.xlu0 %v2048, 104
    %v3477 = vpop.permute.xlu0 %3476
    %3478 = vrot.lane.b32.xlu0 %v2374, 104
    %v3479 = vpop.permute.xlu0 %3478
    %3480 = vrot.lane.b32.xlu0 %v2381, 104
    %v3481 = vpop.permute.xlu0 %3480
    %v3482 = vsel %vm417, %v3477, 0
    %v3484 = vsel %vm417, %v3479, 0
    %v3486 = vsel %vm417, %v3481, 0
    %3488 = vmatprep.subr.mxu0 0.0
    %3489 = vmatpush1.xpose.msra.mxu0 %v3484
    %3490 = vmatprep.subr.mxu0 0.0
    %3491 = vmatpush1.xpose.msra.mxu0 %v3486
    %3492 = vmatprep.subr.mxu0 0.0
    %3493 = vmatpush1.xpose.msra.mxu0 0.0
    %3494 = vmatprep.subr.mxu0 0.0
    %3495 = vmatpush1.xpose.msra.mxu0 0.0
    %3496 = vmatprep.subr.mxu0 0.0
    %3497 = vmatpush1.xpose.msra.mxu0 0.0
    %3498 = vmatprep.subr.mxu0 0.0
    %3499 = vmatpush1.xpose.msra.mxu0 0.0
    %3500 = vmatprep.subr.mxu0 0.0
    %3501 = vmatpush1.xpose.msra.mxu0 0.0
    %3502 = vmatprep.subr.mxu0 0.0
    %3503 = vmatpush1.xpose.msra.mxu0 0.0
    %3504 = vmatprep.subr.mxu0 0.0
    %3505 = vmatpush1.xpose.msra.mxu0 0.0
    %3506 = vmatprep.subr.mxu0 0.0
    %3507 = vmatpush1.xpose.msra.mxu0 0.0
    %3508 = vmatprep.subr.mxu0 0.0
    %3509 = vmatpush1.xpose.msra.mxu0 0.0
    %3510 = vmatprep.subr.mxu0 0.0
    %3511 = vmatpush1.xpose.msra.mxu0 0.0
    %3512 = vmatprep.subr.mxu0 0.0
    %3513 = vmatpush1.xpose.msra.mxu0 0.0
    %3514 = vmatprep.subr.mxu0 0.0
    %3515 = vmatpush1.xpose.msra.mxu0 0.0
    %3516 = vmatprep.subr.mxu0 0.0
    %3517 = vmatpush1.xpose.msra.mxu0 0.0
    %3518 = vmatprep.subr.mxu0 0.0
    %3519 = vmatpush1.xpose.msra.mxu0 0.0
    %3520 = vmatprep.subr.mxu0 0.0
    %3521 = vmatpush1.xpose.msra.mxu0 0.0
    %3522 = vmatprep.subr.mxu0 0.0
    %3523 = vmatpush1.xpose.msra.mxu0 0.0
    %3524 = vmatprep.subr.mxu0 0.0
    %3525 = vmatpush1.xpose.msra.mxu0 0.0
    %3526 = vmatprep.subr.mxu0 0.0
    %3527 = vmatpush1.xpose.msra.mxu0 0.0
    %3528 = vmatprep.subr.mxu0 0.0
    %3529 = vmatpush1.xpose.msra.mxu0 0.0
    %3530 = vmatprep.subr.mxu0 0.0
    %3531 = vmatpush1.xpose.msra.mxu0 0.0
    %3532 = vmatprep.subr.mxu0 0.0
    %3533 = vmatpush1.xpose.msra.mxu0 0.0
    %3534 = vmatprep.subr.mxu0 0.0
    %3535 = vmatpush1.xpose.msra.mxu0 0.0
    %3536 = vmatprep.subr.mxu0 0.0
    %3537 = vmatpush1.xpose.msra.mxu0 0.0
    %3538 = vmatprep.subr.mxu0 0.0
    %3539 = vmatpush1.xpose.msra.mxu0 0.0
    %3540 = vmatprep.subr.mxu0 0.0
    %3541 = vmatpush1.xpose.msra.mxu0 0.0
    %3542 = vmatprep.subr.mxu0 0.0
    %3543 = vmatpush1.xpose.msra.mxu0 0.0
    %3544 = vmatprep.subr.mxu0 0.0
    %3545 = vmatpush1.xpose.msra.mxu0 0.0
    %3546 = vmatprep.subr.mxu0 0.0
    %3547 = vmatpush1.xpose.msra.mxu0 0.0
    %3548 = vmatprep.subr.mxu0 0.0
    %3549 = vmatpush1.xpose.msra.mxu0 0.0
    %3550 = vmatprep.subr.mxu0 0.0
    %3551 = vmatpush1.xpose.msra.mxu0 0.0
    %3552 = vmatprep.mubr.f32.mxu0 0.0
    %3553 = vmatmul.mubr.f32.gmra.mrb[0].mxu0 %v3482
    %v3554 = vpop.f32.mrb[0].mxu0
    %v3555 = vadd.f32 %v106, %v3554
    %v3556 = vpop.f32.mrb[0].mxu0
    %3557 = vdwg.mxu0
    %3558 = vrot.lane.b32.xlu0 %v2049, 104
    %v3559 = vpop.permute.xlu0 %3558
    %3560 = vrot.lane.b32.xlu0 %v2475, 104
    %v3561 = vpop.permute.xlu0 %3560
    %3562 = vrot.lane.b32.xlu0 %v2482, 104
    %v3563 = vpop.permute.xlu0 %3562
    %v3564 = vsel %vm417, %v3559, 0
    %v3566 = vsel %vm417, %v3561, 0
    %v3568 = vsel %vm417, %v3563, 0
    %3570 = vmatprep.subr.mxu0 0.0
    %3571 = vmatpush1.xpose.msra.mxu0 %v3566
    %3572 = vmatprep.subr.mxu0 0.0
    %3573 = vmatpush1.xpose.msra.mxu0 %v3568
    %3574 = vmatprep.subr.mxu0 0.0
    %3575 = vmatpush1.xpose.msra.mxu0 0.0
    %3576 = vmatprep.subr.mxu0 0.0
    %3577 = vmatpush1.xpose.msra.mxu0 0.0
    %3578 = vmatprep.subr.mxu0 0.0
    %3579 = vmatpush1.xpose.msra.mxu0 0.0
    %3580 = vmatprep.subr.mxu0 0.0
    %3581 = vmatpush1.xpose.msra.mxu0 0.0
    %3582 = vmatprep.subr.mxu0 0.0
    %3583 = vmatpush1.xpose.msra.mxu0 0.0
    %3584 = vmatprep.subr.mxu0 0.0
    %3585 = vmatpush1.xpose.msra.mxu0 0.0
    %3586 = vmatprep.subr.mxu0 0.0
    %3587 = vmatpush1.xpose.msra.mxu0 0.0
    %3588 = vmatprep.subr.mxu0 0.0
    %3589 = vmatpush1.xpose.msra.mxu0 0.0
    %3590 = vmatprep.subr.mxu0 0.0
    %3591 = vmatpush1.xpose.msra.mxu0 0.0
    %3592 = vmatprep.subr.mxu0 0.0
    %3593 = vmatpush1.xpose.msra.mxu0 0.0
    %3594 = vmatprep.subr.mxu0 0.0
    %3595 = vmatpush1.xpose.msra.mxu0 0.0
    %3596 = vmatprep.subr.mxu0 0.0
    %3597 = vmatpush1.xpose.msra.mxu0 0.0
    %3598 = vmatprep.subr.mxu0 0.0
    %3599 = vmatpush1.xpose.msra.mxu0 0.0
    %3600 = vmatprep.subr.mxu0 0.0
    %3601 = vmatpush1.xpose.msra.mxu0 0.0
    %3602 = vmatprep.subr.mxu0 0.0
    %3603 = vmatpush1.xpose.msra.mxu0 0.0
    %3604 = vmatprep.subr.mxu0 0.0
    %3605 = vmatpush1.xpose.msra.mxu0 0.0
    %3606 = vmatprep.subr.mxu0 0.0
    %3607 = vmatpush1.xpose.msra.mxu0 0.0
    %3608 = vmatprep.subr.mxu0 0.0
    %3609 = vmatpush1.xpose.msra.mxu0 0.0
    %3610 = vmatprep.subr.mxu0 0.0
    %3611 = vmatpush1.xpose.msra.mxu0 0.0
    %3612 = vmatprep.subr.mxu0 0.0
    %3613 = vmatpush1.xpose.msra.mxu0 0.0
    %3614 = vmatprep.subr.mxu0 0.0
    %3615 = vmatpush1.xpose.msra.mxu0 0.0
    %3616 = vmatprep.subr.mxu0 0.0
    %3617 = vmatpush1.xpose.msra.mxu0 0.0
    %3618 = vmatprep.subr.mxu0 0.0
    %3619 = vmatpush1.xpose.msra.mxu0 0.0
    %3620 = vmatprep.subr.mxu0 0.0
    %3621 = vmatpush1.xpose.msra.mxu0 0.0
    %3622 = vmatprep.subr.mxu0 0.0
    %3623 = vmatpush1.xpose.msra.mxu0 0.0
    %3624 = vmatprep.subr.mxu0 0.0
    %3625 = vmatpush1.xpose.msra.mxu0 0.0
    %3626 = vmatprep.subr.mxu0 0.0
    %3627 = vmatpush1.xpose.msra.mxu0 0.0
    %3628 = vmatprep.subr.mxu0 0.0
    %3629 = vmatpush1.xpose.msra.mxu0 0.0
    %3630 = vmatprep.subr.mxu0 0.0
    %3631 = vmatpush1.xpose.msra.mxu0 0.0
    %3632 = vmatprep.subr.mxu0 0.0
    %3633 = vmatpush1.xpose.msra.mxu0 0.0
    %3634 = vmatprep.mubr.f32.mxu0 0.0
    %3635 = vmatmul.mubr.f32.gmra.mrb[0].mxu0 %v3564
    %v3636 = vpop.f32.mrb[0].mxu0
    %v3637 = vadd.f32 %v107, %v3636
    %v3638 = vpop.f32.mrb[0].mxu0
    %3639 = vdwg.mxu0
    %v3640 = vsel %vm2560, %v3555, -inf
    %3641 = vmax.xlane.f32.xlu0 %v3640
    %v3642 = vpop.xlane.xlu0 %3641
    %v3643 = vsel %vm2560, %v3637, -inf
    %3644 = vmax.xlane.f32.xlu0 %v3643
    %v3645 = vpop.xlane.xlu0 %3644
    %v3646 = vsub.f32 %v3555, %v3642
    %v3647 = vsub.f32 %v3637, %v3645
    %v3648 = vmul.f32 %v3646, 1.442695
    %v3649 = vpow.pop %v3648
    %v3650 = vmul.f32 %v3647, 1.442695
    %v3651 = vpow.pop %v3650
    %v3652 = vsel %vm2560, %v3649, 0.0
    %3653 = vadd.xlane.f32.xlu0 %v3652
    %v3654 = vpop.xlane.xlu0 %3653
    %v3655 = vsel %vm2560, %v3651, 0.0
    %3656 = vadd.xlane.f32.xlu0 %v3655
    %v3657 = vpop.xlane.xlu0 %3656
    %v3658 = vrcp.pop %v3654
    %v3659 = vrcp.pop %v3657
    %v3660 = vmul.f32 %v3649, %v3658
    %v3661 = vmul.f32 %v3651, %v3659
    %3662 = vrot.lane.b32.xlu0 %v2599, 104
    %v3663 = vpop.permute.xlu0 %3662
    %3664 = vrot.lane.b32.xlu0 %v2606, 104
    %v3665 = vpop.permute.xlu0 %3664
    %v3668 = vsel %vm2560, %v3660, 0
    %v3670 = vsel %vm2611, %v3665, 0
    %3672 = vmatprep.subr.mxu0 0.0
    %3673 = vmatpush1.msra.mxu0 %v3663
    %3674 = vmatprep.subr.mxu0 0.0
    %3675 = vmatpush1.msra.mxu0 %v3670
    %3676 = vmatprep.subr.mxu0 0.0
    %3677 = vmatpush1.msra.mxu0 0.0
    %3678 = vmatprep.subr.mxu0 0.0
    %3679 = vmatpush1.msra.mxu0 0.0
    %3680 = vmatprep.subr.mxu0 0.0
    %3681 = vmatpush1.msra.mxu0 0.0
    %3682 = vmatprep.subr.mxu0 0.0
    %3683 = vmatpush1.msra.mxu0 0.0
    %3684 = vmatprep.subr.mxu0 0.0
    %3685 = vmatpush1.msra.mxu0 0.0
    %3686 = vmatprep.subr.mxu0 0.0
    %3687 = vmatpush1.msra.mxu0 0.0
    %3688 = vmatprep.subr.mxu0 0.0
    %3689 = vmatpush1.msra.mxu0 0.0
    %3690 = vmatprep.subr.mxu0 0.0
    %3691 = vmatpush1.msra.mxu0 0.0
    %3692 = vmatprep.subr.mxu0 0.0
    %3693 = vmatpush1.msra.mxu0 0.0
    %3694 = vmatprep.subr.mxu0 0.0
    %3695 = vmatpush1.msra.mxu0 0.0
    %3696 = vmatprep.subr.mxu0 0.0
    %3697 = vmatpush1.msra.mxu0 0.0
    %3698 = vmatprep.subr.mxu0 0.0
    %3699 = vmatpush1.msra.mxu0 0.0
    %3700 = vmatprep.subr.mxu0 0.0
    %3701 = vmatpush1.msra.mxu0 0.0
    %3702 = vmatprep.subr.mxu0 0.0
    %3703 = vmatpush1.msra.mxu0 0.0
    %3704 = vmatprep.subr.mxu0 0.0
    %3705 = vmatpush1.msra.mxu0 0.0
    %3706 = vmatprep.subr.mxu0 0.0
    %3707 = vmatpush1.msra.mxu0 0.0
    %3708 = vmatprep.subr.mxu0 0.0
    %3709 = vmatpush1.msra.mxu0 0.0
    %3710 = vmatprep.subr.mxu0 0.0
    %3711 = vmatpush1.msra.mxu0 0.0
    %3712 = vmatprep.subr.mxu0 0.0
    %3713 = vmatpush1.msra.mxu0 0.0
    %3714 = vmatprep.subr.mxu0 0.0
    %3715 = vmatpush1.msra.mxu0 0.0
    %3716 = vmatprep.subr.mxu0 0.0
    %3717 = vmatpush1.msra.mxu0 0.0
    %3718 = vmatprep.subr.mxu0 0.0
    %3719 = vmatpush1.msra.mxu0 0.0
    %3720 = vmatprep.subr.mxu0 0.0
    %3721 = vmatpush1.msra.mxu0 0.0
    %3722 = vmatprep.subr.mxu0 0.0
    %3723 = vmatpush1.msra.mxu0 0.0
    %3724 = vmatprep.subr.mxu0 0.0
    %3725 = vmatpush1.msra.mxu0 0.0
    %3726 = vmatprep.subr.mxu0 0.0
    %3727 = vmatpush1.msra.mxu0 0.0
    %3728 = vmatprep.subr.mxu0 0.0
    %3729 = vmatpush1.msra.mxu0 0.0
    %3730 = vmatprep.subr.mxu0 0.0
    %3731 = vmatpush1.msra.mxu0 0.0
    %3732 = vmatprep.subr.mxu0 0.0
    %3733 = vmatpush1.msra.mxu0 0.0
    %3734 = vmatprep.subr.mxu0 0.0
    %3735 = vmatpush1.msra.mxu0 0.0
    %3736 = vmatprep.mubr.f32.mxu0 0.0
    %3737 = vmatmul.mubr.f32.gmra.mrb[0].mxu0 %v3668
    %v3738 = vpop.f32.mrb[0].mxu0
    %v3739 = vadd.f32 0.0, %v3738
    %v3740 = vpop.f32.mrb[0].mxu0
    %3741 = vdwg.mxu0
    %3742 = vrot.lane.b32.xlu0 %v2700, 104
    %v3743 = vpop.permute.xlu0 %3742
    %3744 = vrot.lane.b32.xlu0 %v2707, 104
    %v3745 = vpop.permute.xlu0 %3744
    %v3748 = vsel %vm2560, %v3661, 0
    %v3750 = vsel %vm2611, %v3745, 0
    %3752 = vmatprep.subr.mxu0 0.0
    %3753 = vmatpush1.msra.mxu0 %v3743
    %3754 = vmatprep.subr.mxu0 0.0
    %3755 = vmatpush1.msra.mxu0 %v3750
    %3756 = vmatprep.subr.mxu0 0.0
    %3757 = vmatpush1.msra.mxu0 0.0
    %3758 = vmatprep.subr.mxu0 0.0
    %3759 = vmatpush1.msra.mxu0 0.0
    %3760 = vmatprep.subr.mxu0 0.0
    %3761 = vmatpush1.msra.mxu0 0.0
    %3762 = vmatprep.subr.mxu0 0.0
    %3763 = vmatpush1.msra.mxu0 0.0
    %3764 = vmatprep.subr.mxu0 0.0
    %3765 = vmatpush1.msra.mxu0 0.0
    %3766 = vmatprep.subr.mxu0 0.0
    %3767 = vmatpush1.msra.mxu0 0.0
    %3768 = vmatprep.subr.mxu0 0.0
    %3769 = vmatpush1.msra.mxu0 0.0
    %3770 = vmatprep.subr.mxu0 0.0
    %3771 = vmatpush1.msra.mxu0 0.0
    %3772 = vmatprep.subr.mxu0 0.0
    %3773 = vmatpush1.msra.mxu0 0.0
    %3774 = vmatprep.subr.mxu0 0.0
    %3775 = vmatpush1.msra.mxu0 0.0
    %3776 = vmatprep.subr.mxu0 0.0
    %3777 = vmatpush1.msra.mxu0 0.0
    %3778 = vmatprep.subr.mxu0 0.0
    %3779 = vmatpush1.msra.mxu0 0.0
    %3780 = vmatprep.subr.mxu0 0.0
    %3781 = vmatpush1.msra.mxu0 0.0
    %3782 = vmatprep.subr.mxu0 0.0
    %3783 = vmatpush1.msra.mxu0 0.0
    %3784 = vmatprep.subr.mxu0 0.0
    %3785 = vmatpush1.msra.mxu0 0.0
    %3786 = vmatprep.subr.mxu0 0.0
    %3787 = vmatpush1.msra.mxu0 0.0
    %3788 = vmatprep.subr.mxu0 0.0
    %3789 = vmatpush1.msra.mxu0 0.0
    %3790 = vmatprep.subr.mxu0 0.0
    %3791 = vmatpush1.msra.mxu0 0.0
    %3792 = vmatprep.subr.mxu0 0.0
    %3793 = vmatpush1.msra.mxu0 0.0
    %3794 = vmatprep.subr.mxu0 0.0
    %3795 = vmatpush1.msra.mxu0 0.0
    %3796 = vmatprep.subr.mxu0 0.0
    %3797 = vmatpush1.msra.mxu0 0.0
    %3798 = vmatprep.subr.mxu0 0.0
    %3799 = vmatpush1.msra.mxu0 0.0
    %3800 = vmatprep.subr.mxu0 0.0
    %3801 = vmatpush1.msra.mxu0 0.0
    %3802 = vmatprep.subr.mxu0 0.0
    %3803 = vmatpush1.msra.mxu0 0.0
    %3804 = vmatprep.subr.mxu0 0.0
    %3805 = vmatpush1.msra.mxu0 0.0
    %3806 = vmatprep.subr.mxu0 0.0
    %3807 = vmatpush1.msra.mxu0 0.0
    %3808 = vmatprep.subr.mxu0 0.0
    %3809 = vmatpush1.msra.mxu0 0.0
    %3810 = vmatprep.subr.mxu0 0.0
    %3811 = vmatpush1.msra.mxu0 0.0
    %3812 = vmatprep.subr.mxu0 0.0
    %3813 = vmatpush1.msra.mxu0 0.0
    %3814 = vmatprep.subr.mxu0 0.0
    %3815 = vmatpush1.msra.mxu0 0.0
    %3816 = vmatprep.mubr.f32.mxu0 0.0
    %3817 = vmatmul.mubr.f32.gmra.mrb[0].mxu0 %v3748
    %v3818 = vpop.f32.mrb[0].mxu0
    %v3819 = vadd.f32 0.0, %v3818
    %v3820 = vpop.f32.mrb[0].mxu0
    %3821 = vdwg.mxu0
    %3824 = vrot.lane.b32.xlu0 %v3047, 8
    %v3825 = vpop.permute.xlu0 %3824
    %3826 = vrot.lane.b32.xlu0 %v3127, 8
    %v3827 = vpop.permute.xlu0 %3826
    %3832 = vrot.lane.b32.xlu0 %v3393, 16
    %v3833 = vpop.permute.xlu0 %3832
    %3834 = vrot.lane.b32.xlu0 %v3473, 16
    %v3835 = vpop.permute.xlu0 %3834
    %3840 = vrot.lane.b32.xlu0 %v3739, 24
    %v3841 = vpop.permute.xlu0 %3840
    %3842 = vrot.lane.b32.xlu0 %v3819, 24
    %v3843 = vpop.permute.xlu0 %3842
    %v3846 = vsel %vm417, %v2681, %v3825
    %v3847 = vsel %vm417, %v2781, %v3827
    %v3848 = vsel %vm1756, %v3846, %v3833
    %v3849 = vsel %vm1756, %v3847, %v3835
    %v3850 = vsel %vm1759, %v3848, %v3841
    %v3851 = vsel %vm1759, %v3849, %v3843
    %v3852 = vld [vmem:[#allocation10 + $0xd] sm:$0x1]
    %v3853 = vlaneseq
    %v3854 = vshrl.u32 %v3853, 7
    %v3855 = vsub.s32 0, %v3854
    %v3856 = vrot.slane %v3852, %v3855
    %v3858 = vsel %vm108, %v3850, 0
    %v3861 = vsel %vm108, %v3851, 0
    %3863 = vmatprep.subr.mxu0 0.0
    %3864 = vmatpush1.msra.mxu0 %v1906
    %3865 = vmatprep.subr.mxu0 0.0
    %3866 = vmatpush1.msra.mxu0 %v1907
    %3867 = vmatprep.subr.mxu0 0.0
    %3868 = vmatpush1.msra.mxu0 %v1908
    %3869 = vmatprep.subr.mxu0 0.0
    %3870 = vmatpush1.msra.mxu0 %v1909
    %3871 = vmatprep.subr.mxu0 0.0
    %3872 = vmatpush1.msra.mxu0 0.0
    %3873 = vmatprep.subr.mxu0 0.0
    %3874 = vmatpush1.msra.mxu0 0.0
    %3875 = vmatprep.subr.mxu0 0.0
    %3876 = vmatpush1.msra.mxu0 0.0
    %3877 = vmatprep.subr.mxu0 0.0
    %3878 = vmatpush1.msra.mxu0 0.0
    %3879 = vmatprep.subr.mxu0 0.0
    %3880 = vmatpush1.msra.mxu0 0.0
    %3881 = vmatprep.subr.mxu0 0.0
    %3882 = vmatpush1.msra.mxu0 0.0
    %3883 = vmatprep.subr.mxu0 0.0
    %3884 = vmatpush1.msra.mxu0 0.0
    %3885 = vmatprep.subr.mxu0 0.0
    %3886 = vmatpush1.msra.mxu0 0.0
    %3887 = vmatprep.subr.mxu0 0.0
    %3888 = vmatpush1.msra.mxu0 0.0
    %3889 = vmatprep.subr.mxu0 0.0
    %3890 = vmatpush1.msra.mxu0 0.0
    %3891 = vmatprep.subr.mxu0 0.0
    %3892 = vmatpush1.msra.mxu0 0.0
    %3893 = vmatprep.subr.mxu0 0.0
    %3894 = vmatpush1.msra.mxu0 0.0
    %3895 = vmatprep.subr.mxu0 0.0
    %3896 = vmatpush1.msra.mxu0 0.0
    %3897 = vmatprep.subr.mxu0 0.0
    %3898 = vmatpush1.msra.mxu0 0.0
    %3899 = vmatprep.subr.mxu0 0.0
    %3900 = vmatpush1.msra.mxu0 0.0
    %3901 = vmatprep.subr.mxu0 0.0
    %3902 = vmatpush1.msra.mxu0 0.0
    %3903 = vmatprep.subr.mxu0 0.0
    %3904 = vmatpush1.msra.mxu0 0.0
    %3905 = vmatprep.subr.mxu0 0.0
    %3906 = vmatpush1.msra.mxu0 0.0
    %3907 = vmatprep.subr.mxu0 0.0
    %3908 = vmatpush1.msra.mxu0 0.0
    %3909 = vmatprep.subr.mxu0 0.0
    %3910 = vmatpush1.msra.mxu0 0.0
    %3911 = vmatprep.subr.mxu0 0.0
    %3912 = vmatpush1.msra.mxu0 0.0
    %3913 = vmatprep.subr.mxu0 0.0
    %3914 = vmatpush1.msra.mxu0 0.0
    %3915 = vmatprep.subr.mxu0 0.0
    %3916 = vmatpush1.msra.mxu0 0.0
    %3917 = vmatprep.subr.mxu0 0.0
    %3918 = vmatpush1.msra.mxu0 0.0
    %3919 = vmatprep.subr.mxu0 0.0
    %3920 = vmatpush1.msra.mxu0 0.0
    %3921 = vmatprep.subr.mxu0 0.0
    %3922 = vmatpush1.msra.mxu0 0.0
    %3923 = vmatprep.subr.mxu0 0.0
    %3924 = vmatpush1.msra.mxu0 0.0
    %3925 = vmatprep.subr.mxu0 0.0
    %3926 = vmatpush1.msra.mxu0 0.0
    %3927 = vmatprep.mubr.f32.mxu0 0.0
    %3928 = vmatmul.mubr.f32.gmra.mrb[0].mxu0 %v3858
    %v3929 = vpop.f32.mrb[0].mxu0
    %v3930 = vadd.f32 %v3856, %v3929
    %v3931 = vpop.f32.mrb[0].mxu0
    %3932 = vmatprep.mubr.f32.mxu0 0.0
    %3933 = vmatmul.mubr.f32.gmra.mrb[0].mxu0 %v3861
    %v3934 = vpop.f32.mrb[0].mxu0
    %v3935 = vadd.f32 %v3856, %v3934
    %v3936 = vpop.f32.mrb[0].mxu0
    %3937 = vdwg.mxu0
    %v3938 = vadd.f32 %v1848, %v3930
    %v3939 = vadd.f32 %v1849, %v3935
    %v3940 = vsel %vm108, %v3938, 0.0
    %3941 = vadd.xlane.f32.xlu0 %v3940
    %v3942 = vpop.xlane.xlu0 %3941
    %v3943 = vsel %vm108, %v3939, 0.0
    %3944 = vadd.xlane.f32.xlu0 %v3943
    %v3945 = vpop.xlane.xlu0 %3944
    %v3946 = vmul.f32 %v3942, %v115
    %v3947 = vmul.f32 %v3945, %v115
    %v3948 = vsub.f32 %v3938, %v3946
    %v3949 = vsub.f32 %v3939, %v3947
    %v3950 = vmul.f32 %v3948, %v3948
    %v3951 = vmul.f32 %v3949, %v3949
    %v3952 = vsel %vm108, %v3950, 0.0
    %3953 = vadd.xlane.f32.xlu0 %v3952
    %v3954 = vpop.xlane.xlu0 %3953
    %v3955 = vsel %vm108, %v3951, 0.0
    %3956 = vadd.xlane.f32.xlu0 %v3955
    %v3957 = vpop.xlane.xlu0 %3956
    %v3958 = vmul.f32 %v3954, %v115
    %v3959 = vmul.f32 %v3957, %v115
    %v3960 = vadd.f32 %v3958, 1e-06
    %v3961 = vadd.f32 %v3959, 1e-06
    %v3962 = vrsqrt.pop %v3960
    %v3963 = vrsqrt.pop %v3961
    %v3964 = vmul.f32 %v3948, %v3962
    %v3965 = vmul.f32 %v3949, %v3963
    %v3966 = vld [vmem:[#allocation10 + $0x4] sm:$0x1]
    %v3967 = vlaneseq
    %v3968 = vshrl.u32 %v3967, 7
    %v3969 = vsub.s32 0, %v3968
    %v3970 = vrot.slane %v3966, %v3969
    %v3971 = vmul.f32 %v3964, %v3970
    %v3972 = vmul.f32 %v3965, %v3970
    %v3973 = vld [vmem:[#allocation10 + $0x5] sm:$0x1]
    %v3974 = vlaneseq
    %v3975 = vshrl.u32 %v3974, 7
    %v3976 = vsub.s32 0, %v3975
    %v3977 = vrot.slane %v3973, %v3976
    %v3978 = vadd.f32 %v3971, %v3977
    %v3979 = vadd.f32 %v3972, %v3977
    %v3980 = vld [vmem:[%s5] sm:$0xff]
    %v3981 = vld [vmem:[%s5 + $0x8] sm:$0xff]
    %v3982 = vld [vmem:[%s5 + $0x10] sm:$0xff]
    %v3983 = vld [vmem:[%s5 + $0x18] sm:$0xff]
    %v3984 = vld [vmem:[%s7] sm:$0x1]
    %v3986 = vlaneseq
    %v3987 = vshrl.u32 %v3986, 7
    %v3988 = vsub.s32 0, %v3987
    %v3989 = vrot.slane %v3984, %v3988
    %v3992 = vsel %vm108, %v3978, 0
    %v3995 = vsel %vm108, %v3979, 0
    %3997 = vmatprep.subr.mxu0 0.0
    %3998 = vmatpush1.msra.mxu0 %v3980
    %3999 = vmatprep.subr.mxu0 0.0
    %4000 = vmatpush1.msra.mxu0 %v3981
    %4001 = vmatprep.subr.mxu0 0.0
    %4002 = vmatpush1.msra.mxu0 %v3982
    %4003 = vmatprep.subr.mxu0 0.0
    %4004 = vmatpush1.msra.mxu0 %v3983
    %4005 = vmatprep.subr.mxu0 0.0
    %4006 = vmatpush1.msra.mxu0 0.0
    %4007 = vmatprep.subr.mxu0 0.0
    %4008 = vmatpush1.msra.mxu0 0.0
    %4009 = vmatprep.subr.mxu0 0.0
    %4010 = vmatpush1.msra.mxu0 0.0
    %4011 = vmatprep.subr.mxu0 0.0
    %4012 = vmatpush1.msra.mxu0 0.0
    %4013 = vmatprep.subr.mxu0 0.0
    %4014 = vmatpush1.msra.mxu0 0.0
    %4015 = vmatprep.subr.mxu0 0.0
    %4016 = vmatpush1.msra.mxu0 0.0
    %4017 = vmatprep.subr.mxu0 0.0
    %4018 = vmatpush1.msra.mxu0 0.0
    %4019 = vmatprep.subr.mxu0 0.0
    %4020 = vmatpush1.msra.mxu0 0.0
    %4021 = vmatprep.subr.mxu0 0.0
    %4022 = vmatpush1.msra.mxu0 0.0
    %4023 = vmatprep.subr.mxu0 0.0
    %4024 = vmatpush1.msra.mxu0 0.0
    %4025 = vmatprep.subr.mxu0 0.0
    %4026 = vmatpush1.msra.mxu0 0.0
    %4027 = vmatprep.subr.mxu0 0.0
    %4028 = vmatpush1.msra.mxu0 0.0
    %4029 = vmatprep.subr.mxu0 0.0
    %4030 = vmatpush1.msra.mxu0 0.0
    %4031 = vmatprep.subr.mxu0 0.0
    %4032 = vmatpush1.msra.mxu0 0.0
    %4033 = vmatprep.subr.mxu0 0.0
    %4034 = vmatpush1.msra.mxu0 0.0
    %4035 = vmatprep.subr.mxu0 0.0
    %4036 = vmatpush1.msra.mxu0 0.0
    %4037 = vmatprep.subr.mxu0 0.0
    %4038 = vmatpush1.msra.mxu0 0.0
    %4039 = vmatprep.subr.mxu0 0.0
    %4040 = vmatpush1.msra.mxu0 0.0
    %4041 = vmatprep.subr.mxu0 0.0
    %4042 = vmatpush1.msra.mxu0 0.0
    %4043 = vmatprep.subr.mxu0 0.0
    %4044 = vmatpush1.msra.mxu0 0.0
    %4045 = vmatprep.subr.mxu0 0.0
    %4046 = vmatpush1.msra.mxu0 0.0
    %4047 = vmatprep.subr.mxu0 0.0
    %4048 = vmatpush1.msra.mxu0 0.0
    %4049 = vmatprep.subr.mxu0 0.0
    %4050 = vmatpush1.msra.mxu0 0.0
    %4051 = vmatprep.subr.mxu0 0.0
    %4052 = vmatpush1.msra.mxu0 0.0
    %4053 = vmatprep.subr.mxu0 0.0
    %4054 = vmatpush1.msra.mxu0 0.0
    %4055 = vmatprep.subr.mxu0 0.0
    %4056 = vmatpush1.msra.mxu0 0.0
    %4057 = vmatprep.subr.mxu0 0.0
    %4058 = vmatpush1.msra.mxu0 0.0
    %4059 = vmatprep.subr.mxu0 0.0
    %4060 = vmatpush1.msra.mxu0 0.0
    %4061 = vmatprep.mubr.f32.mxu0 0.0
    %4062 = vmatmul.mubr.f32.gmra.mrb[0].mxu0 %v3992
    %v4063 = vpop.f32.mrb[0].mxu0
    %v4064 = vadd.f32 %v3989, %v4063
    %v4065 = vpop.f32.mrb[0].mxu0
    %4066 = vmatprep.mubr.f32.mxu0 0.0
    %4067 = vmatmul.mubr.f32.gmra.mrb[0].mxu0 %v3995
    %v4068 = vpop.f32.mrb[0].mxu0
    %v4069 = vadd.f32 %v3989, %v4068
    %v4070 = vpop.f32.mrb[0].mxu0
    %4071 = vdwg.mxu0
    %v4072 = vmax.f32 %v4064, 0.0
    %v4073 = vmax.f32 %v4069, 0.0
    %s4074 = scalar_lea.vmem %s5, 32
    %v4075 = vld [vmem:[%s4074] sm:$0xff]
    %v4076 = vld [vmem:[%s4074 + $0x8] sm:$0xff]
    %v4077 = vld [vmem:[%s4074 + $0x10] sm:$0xff]
    %v4078 = vld [vmem:[%s4074 + $0x18] sm:$0xff]
    %v4079 = vld [vmem:[#allocation10 + $0xe] sm:$0x1]
    %v4080 = vlaneseq
    %v4081 = vshrl.u32 %v4080, 7
    %v4082 = vsub.s32 0, %v4081
    %v4083 = vrot.slane %v4079, %v4082
    %vm4084 = vcmask 523264
    %v4086 = vsel %vm4084, %v4072, 0
    %v4089 = vsel %vm4084, %v4073, 0
    %v4092 = vsel %vm4084, %v4075, 0
    %v4095 = vsel %vm4084, %v4076, 0
    %v4098 = vsel %vm4084, %v4077, 0
    %v4101 = vsel %vm4084, %v4078, 0
    %4103 = vmatprep.subr.mxu0 0.0
    %4104 = vmatpush1.xpose.msra.mxu0 %v4092
    %4105 = vmatprep.subr.mxu0 0.0
    %4106 = vmatpush1.xpose.msra.mxu0 %v4095
    %4107 = vmatprep.subr.mxu0 0.0
    %4108 = vmatpush1.xpose.msra.mxu0 %v4098
    %4109 = vmatprep.subr.mxu0 0.0
    %4110 = vmatpush1.xpose.msra.mxu0 %v4101
    %4111 = vmatprep.subr.mxu0 0.0
    %4112 = vmatpush1.xpose.msra.mxu0 0.0
    %4113 = vmatprep.subr.mxu0 0.0
    %4114 = vmatpush1.xpose.msra.mxu0 0.0
    %4115 = vmatprep.subr.mxu0 0.0
    %4116 = vmatpush1.xpose.msra.mxu0 0.0
    %4117 = vmatprep.subr.mxu0 0.0
    %4118 = vmatpush1.xpose.msra.mxu0 0.0
    %4119 = vmatprep.subr.mxu0 0.0
    %4120 = vmatpush1.xpose.msra.mxu0 0.0
    %4121 = vmatprep.subr.mxu0 0.0
    %4122 = vmatpush1.xpose.msra.mxu0 0.0
    %4123 = vmatprep.subr.mxu0 0.0
    %4124 = vmatpush1.xpose.msra.mxu0 0.0
    %4125 = vmatprep.subr.mxu0 0.0
    %4126 = vmatpush1.xpose.msra.mxu0 0.0
    %4127 = vmatprep.subr.mxu0 0.0
    %4128 = vmatpush1.xpose.msra.mxu0 0.0
    %4129 = vmatprep.subr.mxu0 0.0
    %4130 = vmatpush1.xpose.msra.mxu0 0.0
    %4131 = vmatprep.subr.mxu0 0.0
    %4132 = vmatpush1.xpose.msra.mxu0 0.0
    %4133 = vmatprep.subr.mxu0 0.0
    %4134 = vmatpush1.xpose.msra.mxu0 0.0
    %4135 = vmatprep.subr.mxu0 0.0
    %4136 = vmatpush1.xpose.msra.mxu0 0.0
    %4137 = vmatprep.subr.mxu0 0.0
    %4138 = vmatpush1.xpose.msra.mxu0 0.0
    %4139 = vmatprep.subr.mxu0 0.0
    %4140 = vmatpush1.xpose.msra.mxu0 0.0
    %4141 = vmatprep.subr.mxu0 0.0
    %4142 = vmatpush1.xpose.msra.mxu0 0.0
    %4143 = vmatprep.subr.mxu0 0.0
    %4144 = vmatpush1.xpose.msra.mxu0 0.0
    %4145 = vmatprep.subr.mxu0 0.0
    %4146 = vmatpush1.xpose.msra.mxu0 0.0
    %4147 = vmatprep.subr.mxu0 0.0
    %4148 = vmatpush1.xpose.msra.mxu0 0.0
    %4149 = vmatprep.subr.mxu0 0.0
    %4150 = vmatpush1.xpose.msra.mxu0 0.0
    %4151 = vmatprep.subr.mxu0 0.0
    %4152 = vmatpush1.xpose.msra.mxu0 0.0
    %4153 = vmatprep.subr.mxu0 0.0
    %4154 = vmatpush1.xpose.msra.mxu0 0.0
    %4155 = vmatprep.subr.mxu0 0.0
    %4156 = vmatpush1.xpose.msra.mxu0 0.0
    %4157 = vmatprep.subr.mxu0 0.0
    %4158 = vmatpush1.xpose.msra.mxu0 0.0
    %4159 = vmatprep.subr.mxu0 0.0
    %4160 = vmatpush1.xpose.msra.mxu0 0.0
    %4161 = vmatprep.subr.mxu0 0.0
    %4162 = vmatpush1.xpose.msra.mxu0 0.0
    %4163 = vmatprep.subr.mxu0 0.0
    %4164 = vmatpush1.xpose.msra.mxu0 0.0
    %4165 = vmatprep.subr.mxu0 0.0
    %4166 = vmatpush1.xpose.msra.mxu0 0.0
    %4167 = vmatprep.mubr.f32.mxu0 0.0
    %4168 = vmatmul.mubr.f32.gmra.mrb[0].mxu0 %v4086
    %v4169 = vpop.f32.mrb[0].mxu0
    %v4170 = vadd.f32 %v4083, %v4169
    %v4171 = vpop.f32.mrb[0].mxu0
    %4172 = vmatprep.mubr.f32.mxu0 0.0
    %4173 = vmatmul.mubr.f32.gmra.mrb[0].mxu0 %v4089
    %v4174 = vpop.f32.mrb[0].mxu0
    %v4175 = vadd.f32 %v4083, %v4174
    %v4176 = vpop.f32.mrb[0].mxu0
    %4177 = vdwg.mxu0
    %v4178 = vadd.f32 %v3938, %v4170
    %v4179 = vadd.f32 %v3939, %v4175
    %4180 = vst.msk [vmem:[#allocation11] sm:$0xff] %vm108, %v4178
    %4181 = vst.msk [vmem:[#allocation11 + $0x8] sm:$0xff] %vm108, %v4179
    // Predicated region
    $region54: #{tpu_custom_call.1} parent=1 // pred_check
      _
    $region55: #{tpu_custom_call.1} parent=1 // pred_check_branch
      %4183 = sbr.rel (0) target = $region57
    $region56: #{tpu_custom_call.1} parent=1 // pred_region
      %s4185 = ssub.s32 256, 256
      %4186 = vsyncadd [#allocation4], %s4185
      %s4187 = sshll.u32 [#allocation11], 4
      %s4188 = int_to_ptr.vmem [resolvable:$true] %s4187
      %4193 = dma.vmem_to_hbm [thread:$0]  %s4188, 256, %s8, [#allocation4], 128, 128, 8
    $region57: #{tpu_custom_call.1} parent=1 // pred_fallthru
      _
    // Predicated region
    $region58: #{tpu_custom_call.1} parent=1 // pred_check
      _
    $region59: #{tpu_custom_call.1} parent=1 // pred_check_branch
      %4195 = sbr.rel (0) target = $region61
    $region60: #{tpu_custom_call.1} parent=1 // pred_region
      %4196 = dma.done [#allocation4], 256
    $region61: #{tpu_custom_call.1} parent=1 // pred_fallthru
      _
    %4197 = vsyncpa [#allocation3], 1
    %4198 = vsyncpa [#allocation6], 1
    %4199 = vsyncpa [#allocation9], 1
    %4200 = vsyncpa [#allocation4], 1

</llo_original>
